<compile_context>
chip_gen: v6e
topology: v6e:2x2x1
jax: 0.10.0
libtpu: 0.0.40
codegen_flags: <defaults>
</compile_context>

<pallas_src>
import jax
import jax.numpy as jnp
from jax.experimental import pallas as pl
from jax.experimental.pallas import tpu as pltpu

# ---------------- model hyper-parameters (small, consistent with the module) --
IN_FEATS = 16
HIDDEN_FEATS = (32, 32)          # module default [64, 64]; kept small (equal sizes)
MAX_DEGREE = 6                   # module default 10; kept small
PRED_HIDDEN = 64                 # module default 128; kept small (2P = 128 lanes)
N_TASKS = 3
TASK_PAD = 128                   # lane-dense padded output width
NODES_PER_GRAPH = 16
NUM_GRAPHS = 16                  # batched up per perf review (was 2)
GRAPHS_PER_BLOCK = 8             # -> 128 nodes per grid step, grid=(2,)
N_NODES = NODES_PER_GRAPH * NUM_GRAPHS
BN_EPS = 1e-5


# ------------------------------- Pallas kernel --------------------------------
def nf_predictor_kernel(adj_ref, feats_ref, mask_ref,
                        w1_ref, nb1_ref, w2_ref, nb2_ref, s_ref,
                        wg_ref, bg_ref,
                        mem_ref, addmask_ref,
                        wos_ref, wom_ref, bo_ref,
                        out_ref):
    adjI = adj_ref[...]          # (GN, GN) block-diag adjacency + I (self loop)
    mask = mask_ref[...]         # (GN, D*H) degree-bucket output mask
    S = s_ref[...]               # (D*H, H)  block-sum matrix tile(eye(H),(D,1))

    def nf_layer(h, w_ref, nb_ref):
        # neighbor aggregation (self loop already folded into adjI)
        agg = jnp.dot(adjI, h, preferred_element_type=jnp.float32)          # (GN, Fin)
        # degree-bucketed Linear via output-side masking (lane-dense, tiny K)
        wide = jnp.dot(agg, w_ref[...], preferred_element_type=jnp.float32)  # (GN, D*H)
        lin = jnp.dot(wide * mask, S,
                      preferred_element_type=jnp.float32) + nb_ref[...]      # (GN, H)
        return jnp.maximum(lin, 0.0)                                         # ReLU

    r1 = nf_layer(feats_ref[...], w1_ref, nb1_ref)   # layer-1 BN folded into layer 2
    r2 = nf_layer(r1, w2_ref, nb2_ref)               # layer-2 BN folded into wg/bg

    # node_to_graph Linear (all BatchNorms pre-folded into wg_fold / bg_fold)
    h3 = jnp.dot(r2, wg_ref[...], preferred_element_type=jnp.float32) + bg_ref[...]

    # SumAndMax readout
    mem = mem_ref[...]                                                  # (Bb, GN)
    sum_pool = jnp.dot(mem, h3, preferred_element_type=jnp.float32)     # (Bb, P)
    masked = h3[None, :, :] + addmask_ref[...]                          # (Bb, GN, P)
    max_pool = jnp.max(masked, axis=1)                                  # (Bb, P)

    # tanh + final Linear, split over the sum/max halves (no concat, no scratch)
    out_ref[...] = (
        jnp.dot(jnp.tanh(sum_pool), wos_ref[...], preferred_element_type=jnp.float32)
        + jnp.dot(jnp.tanh(max_pool), wom_ref[...], preferred_element_type=jnp.float32)
        + bo_ref[...])


# --------------------------------- wrapper ------------------------------------
def nf_predictor(adj, member, feats, params):
    h1, h2 = HIDDEN_FEATS
    assert h1 == h2, "shared degree mask / block-sum matrix assumes equal hidden sizes"
    N = adj.shape[0]
    B = member.shape[0]

    # --- graph-dependent glue (wrapper side) ----------------------------------
    deg = jnp.sum(adj, axis=1)                                   # true degree (f32)
    d_idx = jnp.clip(deg.astype(jnp.int32), 1, MAX_DEGREE) - 1
    deg_oh = (d_idx[:, None] == jnp.arange(MAX_DEGREE)[None, :]).astype(jnp.float32)

    adjI = adj + jnp.eye(N, dtype=adj.dtype)                     # fold self-loop

    # output-side degree mask + block-sum matrix (shared by both layers, h1 == h2)
    mask_out = jnp.repeat(deg_oh, h1, axis=1)                    # (N, D*h1)
    S = jnp.tile(jnp.eye(h1, dtype=jnp.float32), (MAX_DEGREE, 1))  # (D*h1, h1)

    # --- parameter preprocessing: exact folds ---------------------------------
    # Layer 1: wide stacked weights (d-major along output lanes), per-node bias.
    w1_wide = params["w1"].transpose(1, 0, 2).reshape(IN_FEATS, MAX_DEGREE * h1)
    nb1 = deg_oh @ params["b1"]                                  # (N, h1)

    # Layer 2: fold layer-1 post-ReLU BN (s1, t1) forward.
    #   agg2 = adjI @ (r1*s1 + t1) = (adjI@r1)*s1 + (1+deg)[:,None]*t1
    s1, t1 = params["s1"], params["t1"]
    w2_scaled = params["w2"] * s1.reshape(1, h1, 1)              # diag(s1) @ W2_d
    w2_wide = w2_scaled.transpose(1, 0, 2).reshape(h1, MAX_DEGREE * h2)
    tw2 = jnp.einsum("h,dho->do", t1[0], params["w2"])           # t1 @ W2_d -> (D, h2)
    nb2 = deg_oh @ params["b2"] + (1.0 + deg)[:, None] * (deg_oh @ tw2)

    # node_to_graph Linear with layer-2 BN (s2,t2) and predictor BN (sp,tp) folded.
    s2, t2 = params["s2"], params["t2"]
    wgp = params["wg"] * params["sp"]                            # column scale (sp)
    wg_fold = s2.reshape(h2, 1) * wgp                            # row scale (s2)
    bg_fold = t2 @ wgp + params["bg"] * params["sp"] + params["tp"]   # (1, P)

    # Final Linear split over the sum/max halves; pad tasks to a lane-dense slab.
    pad = TASK_PAD - N_TASKS
    wo_s = jnp.pad(params["wo"][:PRED_HIDDEN], ((0, 0), (0, pad)))     # (P, TASK_PAD)
    wo_m = jnp.pad(params["wo"][PRED_HIDDEN:], ((0, 0), (0, pad)))
    bo = jnp.pad(params["bo"], ((0, 0), (0, pad)))                     # (1, TASK_PAD)

    # Additive max-pool mask, pre-shaped wrapper-side (no in-kernel relayout).
    addmask = jnp.where(member > 0.5, 0.0, -1e30)[:, :, None]          # (B, N, 1)

    # --- pallas_call: grid over consecutive graph groups ----------------------
    GN = GRAPHS_PER_BLOCK * NODES_PER_GRAPH     # 128 nodes per grid step
    G = NUM_GRAPHS // GRAPHS_PER_BLOCK          # grid size
    Bb = GRAPHS_PER_BLOCK
    DH = MAX_DEGREE * h1

    grid_spec = pltpu.PrefetchScalarGridSpec(
        num_scalar_prefetch=0,
        grid=(G,),
        in_specs=[
            pl.BlockSpec((GN, GN), lambda g: (g, g)),                 # adjI (block-diag)
            pl.BlockSpec((GN, IN_FEATS), lambda g: (g, 0)),           # feats
            pl.BlockSpec((GN, DH), lambda g: (g, 0)),                 # mask_out
            pl.BlockSpec((IN_FEATS, DH), lambda g: (0, 0)),           # w1_wide
            pl.BlockSpec((GN, h1), lambda g: (g, 0)),                 # nb1
            pl.BlockSpec((h1, DH), lambda g: (0, 0)),                 # w2_wide
            pl.BlockSpec((GN, h2), lambda g: (g, 0)),                 # nb2
            pl.BlockSpec((DH, h1), lambda g: (0, 0)),                 # S
            pl.BlockSpec((h2, PRED_HIDDEN), lambda g: (0, 0)),        # wg_fold
            pl.BlockSpec((1, PRED_HIDDEN), lambda g: (0, 0)),         # bg_fold
            pl.BlockSpec((Bb, GN), lambda g: (g, g)),                 # member (block-diag)
            pl.BlockSpec((Bb, GN, 1), lambda g: (g, g, 0)),           # addmask
            pl.BlockSpec((PRED_HIDDEN, TASK_PAD), lambda g: (0, 0)),  # wo_sum half
            pl.BlockSpec((PRED_HIDDEN, TASK_PAD), lambda g: (0, 0)),  # wo_max half
            pl.BlockSpec((1, TASK_PAD), lambda g: (0, 0)),            # bo
        ],
        out_specs=pl.BlockSpec((Bb, TASK_PAD), lambda g: (g, 0)),
    )

    out_padded = pl.pallas_call(
        nf_predictor_kernel,
        out_shape=jax.ShapeDtypeStruct((B, TASK_PAD), jnp.float32),
        grid_spec=grid_spec,
        compiler_params=pltpu.CompilerParams(dimension_semantics=("parallel",)),
    )(adjI, feats, mask_out, w1_wide, nb1, w2_wide, nb2, S,
      wg_fold, bg_fold, member, addmask, wo_s, wo_m, bo)

    return out_padded[:, :N_TASKS]


# ---------------------------- pure-JAX reference -------------------------------
# Deliberately written in the UNFUSED form (per-degree loop, separate BN affine,
# explicit concat readout) to cross-check every fold done for the kernel.
def nf_predictor_ref(adj, member, feats, params):
    deg = jnp.sum(adj, axis=1).astype(jnp.int32)
    d_idx = jnp.clip(deg, 1, MAX_DEGREE) - 1
    deg_oh = (d_idx[:, None] == jnp.arange(MAX_DEGREE)[None, :]).astype(jnp.float32)

    def layer(h, w, b, s, t):
        agg = h + adj @ h
        out = deg_oh @ b
        for d in range(MAX_DEGREE):
            out = out + deg_oh[:, d:d + 1] * (agg @ w[d])
        return jnp.maximum(out, 0.0) * s + t

    h = layer(feats, params["w1"], params["b1"], params["s1"], params["t1"])
    h = layer(h, params["w2"], params["b2"], params["s2"], params["t2"])
    h = (h @ params["wg"] + params["bg"]) * params["sp"] + params["tp"]
    sum_pool = member @ h
    masked = jnp.where(member[:, :, None] > 0.5, h[None, :, :], -1e30)
    max_pool = jnp.max(masked, axis=1)
    graph_feats = jnp.tanh(jnp.concatenate([sum_pool, max_pool], axis=1))
    return graph_feats @ params["wo"] + params["bo"]


# ---------------------------- deterministic setup ------------------------------
def fold_bn(key, feat_dim):
    k1, k2, k3, k4 = jax.random.split(key, 4)
    gamma = 1.0 + 0.05 * jax.random.normal(k1, (feat_dim,), jnp.float32)
    beta = 0.05 * jax.random.normal(k2, (feat_dim,), jnp.float32)
    mean = 0.05 * jax.random.normal(k3, (feat_dim,), jnp.float32)
    var = 1.0 + 0.1 * jnp.abs(jax.random.normal(k4, (feat_dim,), jnp.float32))
    scale = gamma / jnp.sqrt(var + BN_EPS)
    shift = beta - mean * scale
    return scale.reshape(1, feat_dim), shift.reshape(1, feat_dim)


def init_params(key):
    ks = jax.random.split(key, 16)
    h1, h2 = HIDDEN_FEATS
    p = {}
    p["w1"] = 0.1 * jax.random.normal(ks[0], (MAX_DEGREE, IN_FEATS, h1), jnp.float32)
    p["b1"] = 0.1 * jax.random.normal(ks[1], (MAX_DEGREE, h1), jnp.float32)
    p["s1"], p["t1"] = fold_bn(ks[2], h1)
    p["w2"] = 0.1 * jax.random.normal(ks[3], (MAX_DEGREE, h1, h2), jnp.float32)
    p["b2"] = 0.1 * jax.random.normal(ks[4], (MAX_DEGREE, h2), jnp.float32)
    p["s2"], p["t2"] = fold_bn(ks[5], h2)
    p["wg"] = 0.1 * jax.random.normal(ks[6], (h2, PRED_HIDDEN), jnp.float32)
    p["bg"] = 0.1 * jax.random.normal(ks[7], (1, PRED_HIDDEN), jnp.float32)
    p["sp"], p["tp"] = fold_bn(ks[8], PRED_HIDDEN)
    p["wo"] = 0.1 * jax.random.normal(ks[9], (2 * PRED_HIDDEN, N_TASKS), jnp.float32)
    p["bo"] = 0.1 * jax.random.normal(ks[10], (1, N_TASKS), jnp.float32)
    return p


def make_batched_graph(key):
    keys = jax.random.split(key, NUM_GRAPHS)
    blocks = []
    for b in range(NUM_GRAPHS):
        a = (jax.random.uniform(keys[b], (NODES_PER_GRAPH, NODES_PER_GRAPH))
             < 0.2).astype(jnp.float32)
        a = jnp.triu(a, k=1)
        blocks.append(a + a.T)                       # symmetric, no self loops
    adj = jax.scipy.linalg.block_diag(*blocks)
    member = jnp.zeros((NUM_GRAPHS, N_NODES), jnp.float32)
    for b in range(NUM_GRAPHS):
        member = member.at[b, b * NODES_PER_GRAPH:(b + 1) * NODES_PER_GRAPH].set(1.0)
    return adj, member


if __name__ == "__main__":
    key = jax.random.PRNGKey(0)
    k_graph, k_feat, k_param = jax.random.split(key, 3)

    adj, member = make_batched_graph(k_graph)
    feats = jax.random.normal(k_feat, (N_NODES, IN_FEATS), jnp.float32)
    params = init_params(k_param)

    out = jax.block_until_ready(nf_predictor(adj, member, feats, params))
    ref = jax.block_until_ready(nf_predictor_ref(adj, member, feats, params))

    assert out.shape == (NUM_GRAPHS, N_TASKS)
    assert jnp.allclose(out, ref, rtol=1e-4, atol=1e-4), (out, ref)
    # TODO(synk): BatchNorm is implemented in eval mode (running stats folded to
    # affine); training-mode batch statistics are out of scope for this kernel.
    print("KERNEL_OK")
</pallas_src>

<mosaic_0001>
module attributes {stable_mosaic.version = 11 : i64} {
  func.func @nf_predictor_kernel(%arg0: i32, %arg1: memref<128x128xf32, #tpu.memory_space<vmem>>, %arg2: memref<128x16xf32, #tpu.memory_space<vmem>>, %arg3: memref<128x192xf32, #tpu.memory_space<vmem>>, %arg4: memref<16x192xf32, #tpu.memory_space<vmem>>, %arg5: memref<128x32xf32, #tpu.memory_space<vmem>>, %arg6: memref<32x192xf32, #tpu.memory_space<vmem>>, %arg7: memref<128x32xf32, #tpu.memory_space<vmem>>, %arg8: memref<192x32xf32, #tpu.memory_space<vmem>>, %arg9: memref<32x64xf32, #tpu.memory_space<vmem>>, %arg10: memref<1x64xf32, #tpu.memory_space<vmem>>, %arg11: memref<8x128xf32, #tpu.memory_space<vmem>>, %arg12: memref<8x128x1xf32, #tpu.memory_space<vmem>>, %arg13: memref<64x128xf32, #tpu.memory_space<vmem>>, %arg14: memref<64x128xf32, #tpu.memory_space<vmem>>, %arg15: memref<1x128xf32, #tpu.memory_space<vmem>>, %arg16: memref<8x128xf32, #tpu.memory_space<vmem>>) attributes {dimension_semantics = [#tpu.dimension_semantics<parallel>], iteration_bounds = array<i64: 2>, scalar_prefetch = 0 : i64, scratch_operands = 0 : i64, tpu.core_type = #tpu.core_type<tc>, window_params = [{transform_indices = @transform_0, window_bounds = array<i64: 128, 128>}, {transform_indices = @transform_1, window_bounds = array<i64: 128, 16>}, {transform_indices = @transform_2, window_bounds = array<i64: 128, 192>}, {pipeline_mode = #tpu.pipeline_mode<synchronous>, transform_indices = @transform_3, window_bounds = array<i64: 16, 192>}, {transform_indices = @transform_4, window_bounds = array<i64: 128, 32>}, {pipeline_mode = #tpu.pipeline_mode<synchronous>, transform_indices = @transform_5, window_bounds = array<i64: 32, 192>}, {transform_indices = @transform_6, window_bounds = array<i64: 128, 32>}, {pipeline_mode = #tpu.pipeline_mode<synchronous>, transform_indices = @transform_7, window_bounds = array<i64: 192, 32>}, {pipeline_mode = #tpu.pipeline_mode<synchronous>, transform_indices = @transform_8, window_bounds = array<i64: 32, 64>}, {pipeline_mode = #tpu.pipeline_mode<synchronous>, transform_indices = @transform_9, window_bounds = array<i64: 1, 64>}, {transform_indices = @transform_10, window_bounds = array<i64: 8, 128>}, {transform_indices = @transform_11, window_bounds = array<i64: 8, 128, 1>}, {pipeline_mode = #tpu.pipeline_mode<synchronous>, transform_indices = @transform_12, window_bounds = array<i64: 64, 128>}, {pipeline_mode = #tpu.pipeline_mode<synchronous>, transform_indices = @transform_13, window_bounds = array<i64: 64, 128>}, {pipeline_mode = #tpu.pipeline_mode<synchronous>, transform_indices = @transform_14, window_bounds = array<i64: 1, 128>}, {transform_indices = @transform_15, window_bounds = array<i64: 8, 128>}]} {
    %c0 = arith.constant 0 : index
    %c0_0 = arith.constant 0 : index
    %0 = vector.load %arg1[%c0, %c0_0] : memref<128x128xf32, #tpu.memory_space<vmem>>, vector<128x128xf32>
    %c0_1 = arith.constant 0 : index
    %c0_2 = arith.constant 0 : index
    %1 = vector.load %arg3[%c0_1, %c0_2] : memref<128x192xf32, #tpu.memory_space<vmem>>, vector<128x192xf32>
    %c0_3 = arith.constant 0 : index
    %c0_4 = arith.constant 0 : index
    %2 = vector.load %arg8[%c0_3, %c0_4] : memref<192x32xf32, #tpu.memory_space<vmem>>, vector<192x32xf32>
    %c0_5 = arith.constant 0 : index
    %c0_6 = arith.constant 0 : index
    %3 = vector.load %arg2[%c0_5, %c0_6] : memref<128x16xf32, #tpu.memory_space<vmem>>, vector<128x16xf32>
    %cst = arith.constant dense<0.000000e+00> : vector<128x16xf32>
    %4 = tpu.matmul %0, %3, %cst {dimension_numbers = #tpu.dot_dimension_numbers<[1], [0], [0], [1], [0, 0, 1, 1], [], []>} : vector<128x128xf32>, vector<128x16xf32>, vector<128x16xf32> -> vector<128x16xf32>
    %c0_7 = arith.constant 0 : index
    %c0_8 = arith.constant 0 : index
    %5 = vector.load %arg4[%c0_7, %c0_8] : memref<16x192xf32, #tpu.memory_space<vmem>>, vector<16x192xf32>
    %cst_9 = arith.constant dense<0.000000e+00> : vector<128x192xf32>
    %6 = tpu.matmul %4, %5, %cst_9 {dimension_numbers = #tpu.dot_dimension_numbers<[1], [0], [0], [1], [0, 0, 1, 1], [], []>} : vector<128x16xf32>, vector<16x192xf32>, vector<128x192xf32> -> vector<128x192xf32>
    %7 = arith.mulf %6, %1 : vector<128x192xf32>
    %cst_10 = arith.constant dense<0.000000e+00> : vector<128x32xf32>
    %8 = tpu.matmul %7, %2, %cst_10 {dimension_numbers = #tpu.dot_dimension_numbers<[1], [0], [0], [1], [0, 0, 1, 1], [], []>} : vector<128x192xf32>, vector<192x32xf32>, vector<128x32xf32> -> vector<128x32xf32>
    %c0_11 = arith.constant 0 : index
    %c0_12 = arith.constant 0 : index
    %9 = vector.load %arg5[%c0_11, %c0_12] : memref<128x32xf32, #tpu.memory_space<vmem>>, vector<128x32xf32>
    %10 = arith.addf %8, %9 : vector<128x32xf32>
    %cst_13 = arith.constant 0.000000e+00 : f32
    %11 = vector.broadcast %cst_13 : f32 to vector<128x32xf32>
    %12 = arith.maximumf %10, %11 : vector<128x32xf32>
    %cst_14 = arith.constant dense<0.000000e+00> : vector<128x32xf32>
    %13 = tpu.matmul %0, %12, %cst_14 {dimension_numbers = #tpu.dot_dimension_numbers<[1], [0], [0], [1], [0, 0, 1, 1], [], []>} : vector<128x128xf32>, vector<128x32xf32>, vector<128x32xf32> -> vector<128x32xf32>
    %c0_15 = arith.constant 0 : index
    %c0_16 = arith.constant 0 : index
    %14 = vector.load %arg6[%c0_15, %c0_16] : memref<32x192xf32, #tpu.memory_space<vmem>>, vector<32x192xf32>
    %cst_17 = arith.constant dense<0.000000e+00> : vector<128x192xf32>
    %15 = tpu.matmul %13, %14, %cst_17 {dimension_numbers = #tpu.dot_dimension_numbers<[1], [0], [0], [1], [0, 0, 1, 1], [], []>} : vector<128x32xf32>, vector<32x192xf32>, vector<128x192xf32> -> vector<128x192xf32>
    %16 = arith.mulf %15, %1 : vector<128x192xf32>
    %cst_18 = arith.constant dense<0.000000e+00> : vector<128x32xf32>
    %17 = tpu.matmul %16, %2, %cst_18 {dimension_numbers = #tpu.dot_dimension_numbers<[1], [0], [0], [1], [0, 0, 1, 1], [], []>} : vector<128x192xf32>, vector<192x32xf32>, vector<128x32xf32> -> vector<128x32xf32>
    %c0_19 = arith.constant 0 : index
    %c0_20 = arith.constant 0 : index
    %18 = vector.load %arg7[%c0_19, %c0_20] : memref<128x32xf32, #tpu.memory_space<vmem>>, vector<128x32xf32>
    %19 = arith.addf %17, %18 : vector<128x32xf32>
    %cst_21 = arith.constant 0.000000e+00 : f32
    %20 = vector.broadcast %cst_21 : f32 to vector<128x32xf32>
    %21 = arith.maximumf %19, %20 : vector<128x32xf32>
    %c0_22 = arith.constant 0 : index
    %c0_23 = arith.constant 0 : index
    %22 = vector.load %arg9[%c0_22, %c0_23] : memref<32x64xf32, #tpu.memory_space<vmem>>, vector<32x64xf32>
    %cst_24 = arith.constant dense<0.000000e+00> : vector<128x64xf32>
    %23 = tpu.matmul %21, %22, %cst_24 {dimension_numbers = #tpu.dot_dimension_numbers<[1], [0], [0], [1], [0, 0, 1, 1], [], []>} : vector<128x32xf32>, vector<32x64xf32>, vector<128x64xf32> -> vector<128x64xf32>
    %c0_25 = arith.constant 0 : index
    %c0_26 = arith.constant 0 : index
    %24 = vector.load %arg10[%c0_25, %c0_26] : memref<1x64xf32, #tpu.memory_space<vmem>>, vector<1x64xf32>
    %25 = vector.broadcast %24 : vector<1x64xf32> to vector<128x64xf32>
    %26 = arith.addf %23, %25 : vector<128x64xf32>
    %c0_27 = arith.constant 0 : index
    %c0_28 = arith.constant 0 : index
    %27 = vector.load %arg11[%c0_27, %c0_28] : memref<8x128xf32, #tpu.memory_space<vmem>>, vector<8x128xf32>
    %cst_29 = arith.constant dense<0.000000e+00> : vector<8x64xf32>
    %28 = tpu.matmul %27, %26, %cst_29 {dimension_numbers = #tpu.dot_dimension_numbers<[1], [0], [0], [1], [0, 0, 1, 1], [], []>} : vector<8x128xf32>, vector<128x64xf32>, vector<8x64xf32> -> vector<8x64xf32>
    %29 = vector.shape_cast %26 : vector<128x64xf32> to vector<1x128x64xf32>
    %c0_30 = arith.constant 0 : index
    %c0_31 = arith.constant 0 : index
    %c0_32 = arith.constant 0 : index
    %30 = vector.load %arg12[%c0_30, %c0_31, %c0_32] : memref<8x128x1xf32, #tpu.memory_space<vmem>>, vector<8x128x1xf32>
    %31 = vector.broadcast %29 : vector<1x128x64xf32> to vector<8x128x64xf32>
    %32 = vector.broadcast %30 : vector<8x128x1xf32> to vector<8x128x64xf32>
    %33 = arith.addf %31, %32 : vector<8x128x64xf32>
    %cst_33 = arith.constant dense<0xFF800000> : vector<8x64xf32>
    %34 = vector.multi_reduction <maximumf>, %33, %cst_33 [1] : vector<8x128x64xf32> to vector<8x64xf32>
    %35 = math.tanh %28 : vector<8x64xf32>
    %c0_34 = arith.constant 0 : index
    %c0_35 = arith.constant 0 : index
    %36 = vector.load %arg13[%c0_34, %c0_35] : memref<64x128xf32, #tpu.memory_space<vmem>>, vector<64x128xf32>
    %cst_36 = arith.constant dense<0.000000e+00> : vector<8x128xf32>
    %37 = tpu.matmul %35, %36, %cst_36 {dimension_numbers = #tpu.dot_dimension_numbers<[1], [0], [0], [1], [0, 0, 1, 1], [], []>} : vector<8x64xf32>, vector<64x128xf32>, vector<8x128xf32> -> vector<8x128xf32>
    %38 = math.tanh %34 : vector<8x64xf32>
    %c0_37 = arith.constant 0 : index
    %c0_38 = arith.constant 0 : index
    %39 = vector.load %arg14[%c0_37, %c0_38] : memref<64x128xf32, #tpu.memory_space<vmem>>, vector<64x128xf32>
    %cst_39 = arith.constant dense<0.000000e+00> : vector<8x128xf32>
    %40 = tpu.matmul %38, %39, %cst_39 {dimension_numbers = #tpu.dot_dimension_numbers<[1], [0], [0], [1], [0, 0, 1, 1], [], []>} : vector<8x64xf32>, vector<64x128xf32>, vector<8x128xf32> -> vector<8x128xf32>
    %41 = arith.addf %37, %40 : vector<8x128xf32>
    %c0_40 = arith.constant 0 : index
    %c0_41 = arith.constant 0 : index
    %42 = vector.load %arg15[%c0_40, %c0_41] : memref<1x128xf32, #tpu.memory_space<vmem>>, vector<1x128xf32>
    %43 = vector.broadcast %42 : vector<1x128xf32> to vector<8x128xf32>
    %44 = arith.addf %41, %43 : vector<8x128xf32>
    %c0_42 = arith.constant 0 : index
    %c0_43 = arith.constant 0 : index
    %45 = vector.load %arg16[%c0_42, %c0_43] : memref<8x128xf32, #tpu.memory_space<vmem>>, vector<8x128xf32>
    tpu.vector_store %arg16[%c0_42, %c0_43], %44 {strides = array<i32>} : memref<8x128xf32, #tpu.memory_space<vmem>>, vector<8x128xf32>,
    return
  }
  func.func @transform_0(%arg0: i32) -> (i32, i32) {
    %c0_i32 = arith.constant 0 : i32
    return %arg0, %arg0 : i32, i32
  }
  func.func @transform_1(%arg0: i32) -> (i32, i32) {
    %c0_i32 = arith.constant 0 : i32
    %c0_i32_0 = arith.constant 0 : i32
    return %arg0, %c0_i32 : i32, i32
  }
  func.func @transform_2(%arg0: i32) -> (i32, i32) {
    %c0_i32 = arith.constant 0 : i32
    %c0_i32_0 = arith.constant 0 : i32
    return %arg0, %c0_i32 : i32, i32
  }
  func.func @transform_3(%arg0: i32) -> (i32, i32) {
    %c0_i32 = arith.constant 0 : i32
    %c0_i32_0 = arith.constant 0 : i32
    %c0_i32_1 = arith.constant 0 : i32
    return %c0_i32, %c0_i32_0 : i32, i32
  }
  func.func @transform_4(%arg0: i32) -> (i32, i32) {
    %c0_i32 = arith.constant 0 : i32
    %c0_i32_0 = arith.constant 0 : i32
    return %arg0, %c0_i32 : i32, i32
  }
  func.func @transform_5(%arg0: i32) -> (i32, i32) {
    %c0_i32 = arith.constant 0 : i32
    %c0_i32_0 = arith.constant 0 : i32
    %c0_i32_1 = arith.constant 0 : i32
    return %c0_i32, %c0_i32_0 : i32, i32
  }
  func.func @transform_6(%arg0: i32) -> (i32, i32) {
    %c0_i32 = arith.constant 0 : i32
    %c0_i32_0 = arith.constant 0 : i32
    return %arg0, %c0_i32 : i32, i32
  }
  func.func @transform_7(%arg0: i32) -> (i32, i32) {
    %c0_i32 = arith.constant 0 : i32
    %c0_i32_0 = arith.constant 0 : i32
    %c0_i32_1 = arith.constant 0 : i32
    return %c0_i32, %c0_i32_0 : i32, i32
  }
  func.func @transform_8(%arg0: i32) -> (i32, i32) {
    %c0_i32 = arith.constant 0 : i32
    %c0_i32_0 = arith.constant 0 : i32
    %c0_i32_1 = arith.constant 0 : i32
    return %c0_i32, %c0_i32_0 : i32, i32
  }
  func.func @transform_9(%arg0: i32) -> (i32, i32) {
    %c0_i32 = arith.constant 0 : i32
    %c0_i32_0 = arith.constant 0 : i32
    %c0_i32_1 = arith.constant 0 : i32
    return %c0_i32, %c0_i32_0 : i32, i32
  }
  func.func @transform_10(%arg0: i32) -> (i32, i32) {
    %c0_i32 = arith.constant 0 : i32
    return %arg0, %arg0 : i32, i32
  }
  func.func @transform_11(%arg0: i32) -> (i32, i32, i32) {
    %c0_i32 = arith.constant 0 : i32
    %c0_i32_0 = arith.constant 0 : i32
    return %arg0, %arg0, %c0_i32 : i32, i32, i32
  }
  func.func @transform_12(%arg0: i32) -> (i32, i32) {
    %c0_i32 = arith.constant 0 : i32
    %c0_i32_0 = arith.constant 0 : i32
    %c0_i32_1 = arith.constant 0 : i32
    return %c0_i32, %c0_i32_0 : i32, i32
  }
  func.func @transform_13(%arg0: i32) -> (i32, i32) {
    %c0_i32 = arith.constant 0 : i32
    %c0_i32_0 = arith.constant 0 : i32
    %c0_i32_1 = arith.constant 0 : i32
    return %c0_i32, %c0_i32_0 : i32, i32
  }
  func.func @transform_14(%arg0: i32) -> (i32, i32) {
    %c0_i32 = arith.constant 0 : i32
    %c0_i32_0 = arith.constant 0 : i32
    %c0_i32_1 = arith.constant 0 : i32
    return %c0_i32, %c0_i32_0 : i32, i32
  }
  func.func @transform_15(%arg0: i32) -> (i32, i32) {
    %c0_i32 = arith.constant 0 : i32
    %c0_i32_0 = arith.constant 0 : i32
    return %arg0, %c0_i32 : i32, i32
  }
}

</mosaic_0001>

<llo_original>
// kernel: tpu_custom_call.1
$region0: #{tpu_custom_call.1}
  #allocation0 [shape = 'u32[]', space=smem, size = 0x4, offset = 0x4, fixed_abs, tag = 'smem constant byte address 0x4 - core index']
  #allocation1 [shape = 'u32[144,128]{1,0:T(1,128)}', space=vmem, size = 0x12000, scoped, tag = 'internal scratch']
  %s0 = inlined_call_operand.vmem [shape: f32[256,256], index: 0, kind: input, shape index: {}]
  %s1 = inlined_call_operand.vmem [shape: f32[256,16], index: 1, kind: input, shape index: {}]
  %s2 = inlined_call_operand.vmem [shape: f32[256,192], index: 2, kind: input, shape index: {}]
  %s3 = inlined_call_operand.vmem [shape: f32[16,192], index: 3, kind: input, shape index: {}]
  %s4 = inlined_call_operand.vmem [shape: f32[256,32], index: 4, kind: input, shape index: {}]
  %s5 = inlined_call_operand.vmem [shape: f32[32,192], index: 5, kind: input, shape index: {}]
  %s6 = inlined_call_operand.vmem [shape: f32[256,32], index: 6, kind: input, shape index: {}]
  %s7 = inlined_call_operand.vmem [shape: f32[192,32], index: 7, kind: input, shape index: {}]
  %s8 = inlined_call_operand.vmem [shape: f32[32,64], index: 8, kind: input, shape index: {}]
  %s9 = inlined_call_operand.vmem [shape: f32[1,64], index: 9, kind: input, shape index: {}]
  %s10 = inlined_call_operand.vmem [shape: f32[16,256], index: 10, kind: input, shape index: {}]
  %s11 = inlined_call_operand.vmem [shape: f32[16,256,1], index: 11, kind: input, shape index: {}]
  %s12 = inlined_call_operand.vmem [shape: f32[64,128], index: 12, kind: input, shape index: {}]
  %s13 = inlined_call_operand.vmem [shape: f32[64,128], index: 13, kind: input, shape index: {}]
  %s14 = inlined_call_operand.vmem [shape: f32[1,128], index: 14, kind: input, shape index: {}]
  %s15 = inlined_call_operand.hbm [shape: f32[16,128], index: 15, kind: output, shape index: {}]
  %s16 = sld [smem:[#allocation0]]
  $region169: #{tpu_custom_call.1} parent=0
    _
  %s18 = ssub.s32 1, %s16
  %s19 = scalar_select 0, %s18, %s16
  $region1: #{tpu_custom_call.1} parent=0
    #allocation2 [shape = 'u8[131072]{0}', space=vmem, size = 0x20000, scoped, tag = 'input window, operand 0']
    #allocation3 [shape = 'u8[1048576]{0}', space=vmem, size = 0x100000, scoped, tag = 'input window, operand 11']
    #allocation4 [shape = 'u8[8192]{0}', space=vmem, size = 0x2000, scoped, tag = 'output window, operand 0']
    #allocation5 [shape = 's32[2]{0}', space=sflag, size = 0x8, scoped, tag = 'scoped memory for tpu_custom_call.1']
    %20 = vsyncpa [#allocation5], 0
    %s21 = scalar_lea.sflag [#allocation5], 1
    %22 = vsyncpa %s21, 0
    loop: start=0, step=1, limit=4
    $region2: #{tpu_custom_call.1} parent=1 // loop_pre_header
      _
    $region3: #{tpu_custom_call.1} parent=1 // loop_header
      %s24 = sphi 0, %s28
      %p25 = scmp.ge.s32.totalorder %s24, 4
      %s36 = sphi 0, %s38
      %s39 = sphi 0, %s36
      %s40 = sphi 0, %s39
      %s56 = sphi 0, %s40
      %s62 = sphi 0, %s64
      %s65 = sphi 0, %s62
      %s66 = sphi 0, %s65
      %s82 = sphi 0, %s66
      %s88 = sphi 0, %s90
      %s91 = sphi 0, %s88
      %s92 = sphi 0, %s91
      %s108 = sphi 0, %s92
      %s112 = sphi 0, %s112
      %s114 = sphi 0, %s112
      %s115 = sphi 0, %s114
      %s129 = sphi 0, %s115
      %s135 = sphi 0, %s137
      %s138 = sphi 0, %s135
      %s139 = sphi 0, %s138
      %s155 = sphi 0, %s139
      %s159 = sphi 0, %s159
      %s161 = sphi 0, %s159
      %s162 = sphi 0, %s161
      %s176 = sphi 0, %s162
      %s182 = sphi 0, %s184
      %s185 = sphi 0, %s182
      %s186 = sphi 0, %s185
      %s202 = sphi 0, %s186
      %s206 = sphi 0, %s206
      %s208 = sphi 0, %s206
      %s209 = sphi 0, %s208
      %s223 = sphi 0, %s209
      %s227 = sphi 0, %s227
      %s229 = sphi 0, %s227
      %s230 = sphi 0, %s229
      %s244 = sphi 0, %s230
      %s248 = sphi 0, %s248
      %s250 = sphi 0, %s248
      %s251 = sphi 0, %s250
      %s265 = sphi 0, %s251
      %s273 = sphi 0, %s275
      %s276 = sphi 0, %s273
      %s277 = sphi 0, %s276
      %s293 = sphi 0, %s277
      %s301 = sphi 0, %s303
      %s304 = sphi 0, %s301
      %s305 = sphi 0, %s304
      %s321 = sphi 0, %s305
      %s325 = sphi 0, %s325
      %s327 = sphi 0, %s325
      %s328 = sphi 0, %s327
      %s342 = sphi 0, %s328
      %s346 = sphi 0, %s346
      %s348 = sphi 0, %s346
      %s349 = sphi 0, %s348
      %s363 = sphi 0, %s349
      %s367 = sphi 0, %s367
      %s369 = sphi 0, %s367
      %s370 = sphi 0, %s369
      %s384 = sphi 0, %s370
      %s390 = sphi 0, %s392
      %s393 = sphi 0, %s390
      %s394 = sphi 0, %s393
      %s410 = sphi 0, %s394
    $region4: #{tpu_custom_call.1} parent=1 // loop_header_branch
      %27 = sbr.rel (%p25) target = $region8
    $region5: #{tpu_custom_call.1} parent=1 // loop_body
      %s29 = ssub.s32 %s24, 1
      %s30 = ssub.s32 %s24, 2
      %s31 = sadd.s32 %s24, 1
      %s32 = ssub.s32 %s24, %s31
      %s33 = ssub.s32 %s24, %s31
      %s34 = sor.u32 %s32, %s33
      %p35 = scmp.eq.s32.totalorder %s34, 0
      %s37 = sadd.s32 %s36, 1
      %s38 = scalar_select %p35, %s36, %s37
      %p41 = pneg %p35
      %p42 = scmp.eq.s32.totalorder %s24, 1
      %p43 = por %p41, %p42
      %p44 = scmp.ne.s32.totalorder %s36, %s39
      %p45 = scmp.eq.s32.totalorder %s24, 0
      %p46 = por %p44, %p45
      %p47 = scmp.ne.s32.totalorder %s36, %s39
      %p48 = scmp.eq.s32.totalorder %s29, 1
      %p49 = por %p47, %p48
      %p50 = scmp.ne.s32.totalorder %s39, %s40
      %p51 = scmp.eq.s32.totalorder %s29, 0
      %p52 = por %p50, %p51
      %p53 = scmp.ne.s32.totalorder %s39, %s40
      %p54 = scmp.eq.s32.totalorder %s30, 1
      %p55 = por %p53, %p54
      %p57 = scmp.ne.s32.totalorder %s40, %s56
      %p58 = scmp.eq.s32.totalorder %s30, 0
      %p59 = por %p57, %p58
      %s60 = ssub.s32 %s24, %s31
      %p61 = scmp.eq.s32.totalorder %s60, 0
      %s63 = sadd.s32 %s62, 1
      %s64 = scalar_select %p61, %s62, %s63
      %p67 = pneg %p61
      %p68 = scmp.eq.s32.totalorder %s24, 1
      %p69 = por %p67, %p68
      %p70 = scmp.ne.s32.totalorder %s62, %s65
      %p71 = scmp.eq.s32.totalorder %s24, 0
      %p72 = por %p70, %p71
      %p73 = scmp.ne.s32.totalorder %s62, %s65
      %p74 = scmp.eq.s32.totalorder %s29, 1
      %p75 = por %p73, %p74
      %p76 = scmp.ne.s32.totalorder %s65, %s66
      %p77 = scmp.eq.s32.totalorder %s29, 0
      %p78 = por %p76, %p77
      %p79 = scmp.ne.s32.totalorder %s65, %s66
      %p80 = scmp.eq.s32.totalorder %s30, 1
      %p81 = por %p79, %p80
      %p83 = scmp.ne.s32.totalorder %s66, %s82
      %p84 = scmp.eq.s32.totalorder %s30, 0
      %p85 = por %p83, %p84
      %s86 = ssub.s32 %s24, %s31
      %p87 = scmp.eq.s32.totalorder %s86, 0
      %s89 = sadd.s32 %s88, 1
      %s90 = scalar_select %p87, %s88, %s89
      %p93 = pneg %p87
      %p94 = scmp.eq.s32.totalorder %s24, 1
      %p95 = por %p93, %p94
      %p96 = scmp.ne.s32.totalorder %s88, %s91
      %p97 = scmp.eq.s32.totalorder %s24, 0
      %p98 = por %p96, %p97
      %p99 = scmp.ne.s32.totalorder %s88, %s91
      %p100 = scmp.eq.s32.totalorder %s29, 1
      %p101 = por %p99, %p100
      %p102 = scmp.ne.s32.totalorder %s91, %s92
      %p103 = scmp.eq.s32.totalorder %s29, 0
      %p104 = por %p102, %p103
      %p105 = scmp.ne.s32.totalorder %s91, %s92
      %p106 = scmp.eq.s32.totalorder %s30, 1
      %p107 = por %p105, %p106
      %p109 = scmp.ne.s32.totalorder %s92, %s108
      %p110 = scmp.eq.s32.totalorder %s30, 0
      %p111 = por %p109, %p110
      %s113 = sadd.s32 %s112, 1
      %p116 = scmp.eq.s32.totalorder %s24, 1
      %p117 = scmp.ne.s32.totalorder %s112, %s114
      %p118 = scmp.eq.s32.totalorder %s24, 0
      %p119 = por %p117, %p118
      %p120 = scmp.ne.s32.totalorder %s112, %s114
      %p121 = scmp.eq.s32.totalorder %s29, 1
      %p122 = por %p120, %p121
      %p123 = scmp.ne.s32.totalorder %s114, %s115
      %p124 = scmp.eq.s32.totalorder %s29, 0
      %p125 = por %p123, %p124
      %p126 = scmp.ne.s32.totalorder %s114, %s115
      %p127 = scmp.eq.s32.totalorder %s30, 1
      %p128 = por %p126, %p127
      %p130 = scmp.ne.s32.totalorder %s115, %s129
      %p131 = scmp.eq.s32.totalorder %s30, 0
      %p132 = por %p130, %p131
      %s133 = ssub.s32 %s24, %s31
      %p134 = scmp.eq.s32.totalorder %s133, 0
      %s136 = sadd.s32 %s135, 1
      %s137 = scalar_select %p134, %s135, %s136
      %p140 = pneg %p134
      %p141 = scmp.eq.s32.totalorder %s24, 1
      %p142 = por %p140, %p141
      %p143 = scmp.ne.s32.totalorder %s135, %s138
      %p144 = scmp.eq.s32.totalorder %s24, 0
      %p145 = por %p143, %p144
      %p146 = scmp.ne.s32.totalorder %s135, %s138
      %p147 = scmp.eq.s32.totalorder %s29, 1
      %p148 = por %p146, %p147
      %p149 = scmp.ne.s32.totalorder %s138, %s139
      %p150 = scmp.eq.s32.totalorder %s29, 0
      %p151 = por %p149, %p150
      %p152 = scmp.ne.s32.totalorder %s138, %s139
      %p153 = scmp.eq.s32.totalorder %s30, 1
      %p154 = por %p152, %p153
      %p156 = scmp.ne.s32.totalorder %s139, %s155
      %p157 = scmp.eq.s32.totalorder %s30, 0
      %p158 = por %p156, %p157
      %s160 = sadd.s32 %s159, 1
      %p163 = scmp.eq.s32.totalorder %s24, 1
      %p164 = scmp.ne.s32.totalorder %s159, %s161
      %p165 = scmp.eq.s32.totalorder %s24, 0
      %p166 = por %p164, %p165
      %p167 = scmp.ne.s32.totalorder %s159, %s161
      %p168 = scmp.eq.s32.totalorder %s29, 1
      %p169 = por %p167, %p168
      %p170 = scmp.ne.s32.totalorder %s161, %s162
      %p171 = scmp.eq.s32.totalorder %s29, 0
      %p172 = por %p170, %p171
      %p173 = scmp.ne.s32.totalorder %s161, %s162
      %p174 = scmp.eq.s32.totalorder %s30, 1
      %p175 = por %p173, %p174
      %p177 = scmp.ne.s32.totalorder %s162, %s176
      %p178 = scmp.eq.s32.totalorder %s30, 0
      %p179 = por %p177, %p178
      %s180 = ssub.s32 %s24, %s31
      %p181 = scmp.eq.s32.totalorder %s180, 0
      %s183 = sadd.s32 %s182, 1
      %s184 = scalar_select %p181, %s182, %s183
      %p187 = pneg %p181
      %p188 = scmp.eq.s32.totalorder %s24, 1
      %p189 = por %p187, %p188
      %p190 = scmp.ne.s32.totalorder %s182, %s185
      %p191 = scmp.eq.s32.totalorder %s24, 0
      %p192 = por %p190, %p191
      %p193 = scmp.ne.s32.totalorder %s182, %s185
      %p194 = scmp.eq.s32.totalorder %s29, 1
      %p195 = por %p193, %p194
      %p196 = scmp.ne.s32.totalorder %s185, %s186
      %p197 = scmp.eq.s32.totalorder %s29, 0
      %p198 = por %p196, %p197
      %p199 = scmp.ne.s32.totalorder %s185, %s186
      %p200 = scmp.eq.s32.totalorder %s30, 1
      %p201 = por %p199, %p200
      %p203 = scmp.ne.s32.totalorder %s186, %s202
      %p204 = scmp.eq.s32.totalorder %s30, 0
      %p205 = por %p203, %p204
      %s207 = sadd.s32 %s206, 1
      %p210 = scmp.eq.s32.totalorder %s24, 1
      %p211 = scmp.ne.s32.totalorder %s206, %s208
      %p212 = scmp.eq.s32.totalorder %s24, 0
      %p213 = por %p211, %p212
      %p214 = scmp.ne.s32.totalorder %s206, %s208
      %p215 = scmp.eq.s32.totalorder %s29, 1
      %p216 = por %p214, %p215
      %p217 = scmp.ne.s32.totalorder %s208, %s209
      %p218 = scmp.eq.s32.totalorder %s29, 0
      %p219 = por %p217, %p218
      %p220 = scmp.ne.s32.totalorder %s208, %s209
      %p221 = scmp.eq.s32.totalorder %s30, 1
      %p222 = por %p220, %p221
      %p224 = scmp.ne.s32.totalorder %s209, %s223
      %p225 = scmp.eq.s32.totalorder %s30, 0
      %p226 = por %p224, %p225
      %s228 = sadd.s32 %s227, 1
      %p231 = scmp.eq.s32.totalorder %s24, 1
      %p232 = scmp.ne.s32.totalorder %s227, %s229
      %p233 = scmp.eq.s32.totalorder %s24, 0
      %p234 = por %p232, %p233
      %p235 = scmp.ne.s32.totalorder %s227, %s229
      %p236 = scmp.eq.s32.totalorder %s29, 1
      %p237 = por %p235, %p236
      %p238 = scmp.ne.s32.totalorder %s229, %s230
      %p239 = scmp.eq.s32.totalorder %s29, 0
      %p240 = por %p238, %p239
      %p241 = scmp.ne.s32.totalorder %s229, %s230
      %p242 = scmp.eq.s32.totalorder %s30, 1
      %p243 = por %p241, %p242
      %p245 = scmp.ne.s32.totalorder %s230, %s244
      %p246 = scmp.eq.s32.totalorder %s30, 0
      %p247 = por %p245, %p246
      %s249 = sadd.s32 %s248, 1
      %p252 = scmp.eq.s32.totalorder %s24, 1
      %p253 = scmp.ne.s32.totalorder %s248, %s250
      %p254 = scmp.eq.s32.totalorder %s24, 0
      %p255 = por %p253, %p254
      %p256 = scmp.ne.s32.totalorder %s248, %s250
      %p257 = scmp.eq.s32.totalorder %s29, 1
      %p258 = por %p256, %p257
      %p259 = scmp.ne.s32.totalorder %s250, %s251
      %p260 = scmp.eq.s32.totalorder %s29, 0
      %p261 = por %p259, %p260
      %p262 = scmp.ne.s32.totalorder %s250, %s251
      %p263 = scmp.eq.s32.totalorder %s30, 1
      %p264 = por %p262, %p263
      %p266 = scmp.ne.s32.totalorder %s251, %s265
      %p267 = scmp.eq.s32.totalorder %s30, 0
      %p268 = por %p266, %p267
      %s269 = ssub.s32 %s24, %s31
      %s270 = ssub.s32 %s24, %s31
      %s271 = sor.u32 %s269, %s270
      %p272 = scmp.eq.s32.totalorder %s271, 0
      %s274 = sadd.s32 %s273, 1
      %s275 = scalar_select %p272, %s273, %s274
      %p278 = pneg %p272
      %p279 = scmp.eq.s32.totalorder %s24, 1
      %p280 = por %p278, %p279
      %p281 = scmp.ne.s32.totalorder %s273, %s276
      %p282 = scmp.eq.s32.totalorder %s24, 0
      %p283 = por %p281, %p282
      %p284 = scmp.ne.s32.totalorder %s273, %s276
      %p285 = scmp.eq.s32.totalorder %s29, 1
      %p286 = por %p284, %p285
      %p287 = scmp.ne.s32.totalorder %s276, %s277
      %p288 = scmp.eq.s32.totalorder %s29, 0
      %p289 = por %p287, %p288
      %p290 = scmp.ne.s32.totalorder %s276, %s277
      %p291 = scmp.eq.s32.totalorder %s30, 1
      %p292 = por %p290, %p291
      %p294 = scmp.ne.s32.totalorder %s277, %s293
      %p295 = scmp.eq.s32.totalorder %s30, 0
      %p296 = por %p294, %p295
      %s297 = ssub.s32 %s24, %s31
      %s298 = ssub.s32 %s24, %s31
      %s299 = sor.u32 %s297, %s298
      %p300 = scmp.eq.s32.totalorder %s299, 0
      %s302 = sadd.s32 %s301, 1
      %s303 = scalar_select %p300, %s301, %s302
      %p306 = pneg %p300
      %p307 = scmp.eq.s32.totalorder %s24, 1
      %p308 = por %p306, %p307
      %p309 = scmp.ne.s32.totalorder %s301, %s304
      %p310 = scmp.eq.s32.totalorder %s24, 0
      %p311 = por %p309, %p310
      %p312 = scmp.ne.s32.totalorder %s301, %s304
      %p313 = scmp.eq.s32.totalorder %s29, 1
      %p314 = por %p312, %p313
      %p315 = scmp.ne.s32.totalorder %s304, %s305
      %p316 = scmp.eq.s32.totalorder %s29, 0
      %p317 = por %p315, %p316
      %p318 = scmp.ne.s32.totalorder %s304, %s305
      %p319 = scmp.eq.s32.totalorder %s30, 1
      %p320 = por %p318, %p319
      %p322 = scmp.ne.s32.totalorder %s305, %s321
      %p323 = scmp.eq.s32.totalorder %s30, 0
      %p324 = por %p322, %p323
      %s326 = sadd.s32 %s325, 1
      %p329 = scmp.eq.s32.totalorder %s24, 1
      %p330 = scmp.ne.s32.totalorder %s325, %s327
      %p331 = scmp.eq.s32.totalorder %s24, 0
      %p332 = por %p330, %p331
      %p333 = scmp.ne.s32.totalorder %s325, %s327
      %p334 = scmp.eq.s32.totalorder %s29, 1
      %p335 = por %p333, %p334
      %p336 = scmp.ne.s32.totalorder %s327, %s328
      %p337 = scmp.eq.s32.totalorder %s29, 0
      %p338 = por %p336, %p337
      %p339 = scmp.ne.s32.totalorder %s327, %s328
      %p340 = scmp.eq.s32.totalorder %s30, 1
      %p341 = por %p339, %p340
      %p343 = scmp.ne.s32.totalorder %s328, %s342
      %p344 = scmp.eq.s32.totalorder %s30, 0
      %p345 = por %p343, %p344
      %s347 = sadd.s32 %s346, 1
      %p350 = scmp.eq.s32.totalorder %s24, 1
      %p351 = scmp.ne.s32.totalorder %s346, %s348
      %p352 = scmp.eq.s32.totalorder %s24, 0
      %p353 = por %p351, %p352
      %p354 = scmp.ne.s32.totalorder %s346, %s348
      %p355 = scmp.eq.s32.totalorder %s29, 1
      %p356 = por %p354, %p355
      %p357 = scmp.ne.s32.totalorder %s348, %s349
      %p358 = scmp.eq.s32.totalorder %s29, 0
      %p359 = por %p357, %p358
      %p360 = scmp.ne.s32.totalorder %s348, %s349
      %p361 = scmp.eq.s32.totalorder %s30, 1
      %p362 = por %p360, %p361
      %p364 = scmp.ne.s32.totalorder %s349, %s363
      %p365 = scmp.eq.s32.totalorder %s30, 0
      %p366 = por %p364, %p365
      %s368 = sadd.s32 %s367, 1
      %p371 = scmp.eq.s32.totalorder %s24, 1
      %p372 = scmp.ne.s32.totalorder %s367, %s369
      %p373 = scmp.eq.s32.totalorder %s24, 0
      %p374 = por %p372, %p373
      %p375 = scmp.ne.s32.totalorder %s367, %s369
      %p376 = scmp.eq.s32.totalorder %s29, 1
      %p377 = por %p375, %p376
      %p378 = scmp.ne.s32.totalorder %s369, %s370
      %p379 = scmp.eq.s32.totalorder %s29, 0
      %p380 = por %p378, %p379
      %p381 = scmp.ne.s32.totalorder %s369, %s370
      %p382 = scmp.eq.s32.totalorder %s30, 1
      %p383 = por %p381, %p382
      %p385 = scmp.ne.s32.totalorder %s370, %s384
      %p386 = scmp.eq.s32.totalorder %s30, 0
      %p387 = por %p385, %p386
      %s388 = ssub.s32 %s24, %s31
      %p389 = scmp.eq.s32.totalorder %s388, 0
      %s391 = sadd.s32 %s390, 1
      %s392 = scalar_select %p389, %s390, %s391
      %p395 = pneg %p389
      %p396 = scmp.eq.s32.totalorder %s24, 1
      %p397 = por %p395, %p396
      %p398 = scmp.ne.s32.totalorder %s390, %s393
      %p399 = scmp.eq.s32.totalorder %s24, 0
      %p400 = por %p398, %p399
      %p401 = scmp.ne.s32.totalorder %s390, %s393
      %p402 = scmp.eq.s32.totalorder %s29, 1
      %p403 = por %p401, %p402
      %p404 = scmp.ne.s32.totalorder %s393, %s394
      %p405 = scmp.eq.s32.totalorder %s29, 0
      %p406 = por %p404, %p405
      %p407 = scmp.ne.s32.totalorder %s393, %s394
      %p408 = scmp.eq.s32.totalorder %s30, 1
      %p409 = por %p407, %p408
      %p411 = scmp.ne.s32.totalorder %s394, %s410
      %p412 = scmp.eq.s32.totalorder %s30, 0
      %p413 = por %p411, %p412
      %p414 = scmp.le.s32.totalorder 1, %s24
      %p415 = scmp.lt.s32.totalorder %s24, 3
      %p416 = pnand %p414, %p415
      %p417 = pneg %p416
      // Predicated region
      $region9: #{tpu_custom_call.1} parent=5 // pred_check
        _
      $region10: #{tpu_custom_call.1} parent=5 // pred_check_branch
        %419 = sbr.rel (%p416) target = $region12
      $region11: #{tpu_custom_call.1} parent=5 // pred_region
        %s420 = ssub.s32 %s24, 1
        // Predicated region
        $region13: #{tpu_custom_call.1} parent=11 // pred_check
          %p421 = pneg %p125
        $region14: #{tpu_custom_call.1} parent=11 // pred_check_branch
          %423 = sbr.rel (%p421) target = $region16
        $region15: #{tpu_custom_call.1} parent=11 // pred_region
          _
        $region16: #{tpu_custom_call.1} parent=11 // pred_fallthru
          _
        // Predicated region
        $region17: #{tpu_custom_call.1} parent=11 // pred_check
          %p424 = pneg %p172
        $region18: #{tpu_custom_call.1} parent=11 // pred_check_branch
          %426 = sbr.rel (%p424) target = $region20
        $region19: #{tpu_custom_call.1} parent=11 // pred_region
          _
        $region20: #{tpu_custom_call.1} parent=11 // pred_fallthru
          _
        // Predicated region
        $region21: #{tpu_custom_call.1} parent=11 // pred_check
          %p427 = pneg %p219
        $region22: #{tpu_custom_call.1} parent=11 // pred_check_branch
          %429 = sbr.rel (%p427) target = $region24
        $region23: #{tpu_custom_call.1} parent=11 // pred_region
          _
        $region24: #{tpu_custom_call.1} parent=11 // pred_fallthru
          _
        // Predicated region
        $region25: #{tpu_custom_call.1} parent=11 // pred_check
          %p430 = pneg %p240
        $region26: #{tpu_custom_call.1} parent=11 // pred_check_branch
          %432 = sbr.rel (%p430) target = $region28
        $region27: #{tpu_custom_call.1} parent=11 // pred_region
          _
        $region28: #{tpu_custom_call.1} parent=11 // pred_fallthru
          _
        // Predicated region
        $region29: #{tpu_custom_call.1} parent=11 // pred_check
          %p433 = pneg %p261
        $region30: #{tpu_custom_call.1} parent=11 // pred_check_branch
          %435 = sbr.rel (%p433) target = $region32
        $region31: #{tpu_custom_call.1} parent=11 // pred_region
          _
        $region32: #{tpu_custom_call.1} parent=11 // pred_fallthru
          _
        // Predicated region
        $region33: #{tpu_custom_call.1} parent=11 // pred_check
          %p436 = pneg %p338
        $region34: #{tpu_custom_call.1} parent=11 // pred_check_branch
          %438 = sbr.rel (%p436) target = $region36
        $region35: #{tpu_custom_call.1} parent=11 // pred_region
          _
        $region36: #{tpu_custom_call.1} parent=11 // pred_fallthru
          _
        // Predicated region
        $region37: #{tpu_custom_call.1} parent=11 // pred_check
          %p439 = pneg %p359
        $region38: #{tpu_custom_call.1} parent=11 // pred_check_branch
          %441 = sbr.rel (%p439) target = $region40
        $region39: #{tpu_custom_call.1} parent=11 // pred_region
          _
        $region40: #{tpu_custom_call.1} parent=11 // pred_fallthru
          _
        // Predicated region
        $region41: #{tpu_custom_call.1} parent=11 // pred_check
          %p442 = pneg %p380
        $region42: #{tpu_custom_call.1} parent=11 // pred_check_branch
          %444 = sbr.rel (%p442) target = $region44
        $region43: #{tpu_custom_call.1} parent=11 // pred_region
          _
        $region44: #{tpu_custom_call.1} parent=11 // pred_fallthru
          _
      $region12: #{tpu_custom_call.1} parent=5 // pred_fallthru
        _
      %p445 = scmp.lt.s32.totalorder %s24, 2
      // Predicated region
      $region45: #{tpu_custom_call.1} parent=5 // pred_check
        %p446 = pneg %p445
      $region46: #{tpu_custom_call.1} parent=5 // pred_check_branch
        %448 = sbr.rel (%p446) target = $region48
      $region47: #{tpu_custom_call.1} parent=5 // pred_region
        // Predicated region
        $region49: #{tpu_custom_call.1} parent=47 // pred_check
          %p449 = pneg %p46
        $region50: #{tpu_custom_call.1} parent=47 // pred_check_branch
          %451 = sbr.rel (%p449) target = $region52
        $region51: #{tpu_custom_call.1} parent=47 // pred_region
          %s452 = sand.u32 %s36, 1
          %s453 = sand.u32 %s36, 1
          %s454 = smul.addr %s453, 128
          %s455 = scalar_lea.vmem [#allocation2], %s454
          %s456 = smul.u32 16, %s24
          %s457 = smul.addr %s456, 2
          %s458 = sadd.s32 %s24, %s457
          %s459 = smul.addr %s458, 8
          %s460 = scalar_lea.vmem %s0, %s459
          // Predicated region
          $region53: #{tpu_custom_call.1} parent=51 // pred_check
            _
          $region54: #{tpu_custom_call.1} parent=51 // pred_check_branch
            %462 = sbr.rel (0) target = $region56
          $region55: #{tpu_custom_call.1} parent=51 // pred_region
            // Predicated region
            $region57: #{tpu_custom_call.1} parent=55 // pred_check
              _
            $region58: #{tpu_custom_call.1} parent=55 // pred_check_branch
              %464 = sbr.rel (0) target = $region60
            $region59: #{tpu_custom_call.1} parent=55 // pred_region
              // Predicated region
              $region72: #{tpu_custom_call.1} parent=59 // pred_check
                _
              $region73: #{tpu_custom_call.1} parent=59 // pred_check_branch
                %510 = sbr.rel (0) target = $region75
              $region74: #{tpu_custom_call.1} parent=59 // pred_region
                loop: start=0, step=1, limit=1
                $region76: #{tpu_custom_call.1} parent=74 // loop_pre_header
                  _
                $region77: #{tpu_custom_call.1} parent=74 // loop_header
                  %s512 = sphi 0, %s516
                  %p513 = scmp.ge.s32.totalorder %s512, 1
                  %s517 = sphi %s460, %s460
                  %s518 = sphi %s455, %s455
                $region78: #{tpu_custom_call.1} parent=74 // loop_header_branch
                  %515 = sbr.rel (%p513) target = $region82
                $region79: #{tpu_custom_call.1} parent=74 // loop_body
                  %v519 = vld [vmem:[%s517] sm:$0xff]
                  %520 = vst [vmem:[%s518] sm:$0xff] %v519
                  %v521 = vld [vmem:[%s517 + $0x10] sm:$0xff]
                  %522 = vst [vmem:[%s518 + $0x8] sm:$0xff] %v521
                  %v523 = vld [vmem:[%s517 + $0x20] sm:$0xff]
                  %524 = vst [vmem:[%s518 + $0x10] sm:$0xff] %v523
                  %v525 = vld [vmem:[%s517 + $0x30] sm:$0xff]
                  %526 = vst [vmem:[%s518 + $0x18] sm:$0xff] %v525
                  %v527 = vld [vmem:[%s517 + $0x40] sm:$0xff]
                  %528 = vst [vmem:[%s518 + $0x20] sm:$0xff] %v527
                  %v529 = vld [vmem:[%s517 + $0x50] sm:$0xff]
                  %530 = vst [vmem:[%s518 + $0x28] sm:$0xff] %v529
                  %v531 = vld [vmem:[%s517 + $0x60] sm:$0xff]
                  %532 = vst [vmem:[%s518 + $0x30] sm:$0xff] %v531
                  %v533 = vld [vmem:[%s517 + $0x70] sm:$0xff]
                  %534 = vst [vmem:[%s518 + $0x38] sm:$0xff] %v533
                  %v535 = vld [vmem:[%s517 + $0x80] sm:$0xff]
                  %536 = vst [vmem:[%s518 + $0x40] sm:$0xff] %v535
                  %v537 = vld [vmem:[%s517 + $0x90] sm:$0xff]
                  %538 = vst [vmem:[%s518 + $0x48] sm:$0xff] %v537
                  %v539 = vld [vmem:[%s517 + $0xa0] sm:$0xff]
                  %540 = vst [vmem:[%s518 + $0x50] sm:$0xff] %v539
                  %v541 = vld [vmem:[%s517 + $0xb0] sm:$0xff]
                  %542 = vst [vmem:[%s518 + $0x58] sm:$0xff] %v541
                  %v543 = vld [vmem:[%s517 + $0xc0] sm:$0xff]
                  %544 = vst [vmem:[%s518 + $0x60] sm:$0xff] %v543
                  %v545 = vld [vmem:[%s517 + $0xd0] sm:$0xff]
                  %546 = vst [vmem:[%s518 + $0x68] sm:$0xff] %v545
                  %v547 = vld [vmem:[%s517 + $0xe0] sm:$0xff]
                  %548 = vst [vmem:[%s518 + $0x70] sm:$0xff] %v547
                  %v549 = vld [vmem:[%s517 + $0xf0] sm:$0xff]
                  %550 = vst [vmem:[%s518 + $0x78] sm:$0xff] %v549
                $region80: #{tpu_custom_call.1} parent=74 // loop_footer
                  %s516 = sadd.s32 1, %s512
                $region81: #{tpu_custom_call.1} parent=74 // loop_footer_branch
                  %511 = sbr.rel target = $region77
                $region82: #{tpu_custom_call.1} parent=74 // loop_exit
                  _
              $region75: #{tpu_custom_call.1} parent=59 // pred_fallthru
                _
              // Predicated region
              $region83: #{tpu_custom_call.1} parent=59 // pred_check
                _
              $region84: #{tpu_custom_call.1} parent=59 // pred_check_branch
                %552 = sbr.rel target = $region86
              $region85: #{tpu_custom_call.1} parent=59 // pred_region
                _
              $region86: #{tpu_custom_call.1} parent=59 // pred_fallthru
                _
            $region60: #{tpu_custom_call.1} parent=55 // pred_fallthru
              _
            // Predicated region
            $region61: #{tpu_custom_call.1} parent=55 // pred_check
              _
            $region62: #{tpu_custom_call.1} parent=55 // pred_check_branch
              %466 = sbr.rel target = $region64
            $region63: #{tpu_custom_call.1} parent=55 // pred_region
              %s468 = ssub.s32 256, 1
              loop: start=0, step=1, limit=1
              $region65: #{tpu_custom_call.1} parent=63 // loop_pre_header
                _
              $region66: #{tpu_custom_call.1} parent=63 // loop_header
                %s470 = sphi 0, %s474
                %p471 = scmp.ge.s32.totalorder %s470, 1
                %s475 = sphi %s460, %s460
                %s476 = sphi %s455, %s455
              $region67: #{tpu_custom_call.1} parent=63 // loop_header_branch
                %473 = sbr.rel (%p471) target = $region71
              $region68: #{tpu_custom_call.1} parent=63 // loop_body
                %v477 = vld [vmem:[%s475] sm:%s468]
                %478 = vst [vmem:[%s476] sm:%s468] %v477
                %v479 = vld [vmem:[%s475 + $0x10] sm:%s468]
                %480 = vst [vmem:[%s476 + $0x8] sm:%s468] %v479
                %v481 = vld [vmem:[%s475 + $0x20] sm:%s468]
                %482 = vst [vmem:[%s476 + $0x10] sm:%s468] %v481
                %v483 = vld [vmem:[%s475 + $0x30] sm:%s468]
                %484 = vst [vmem:[%s476 + $0x18] sm:%s468] %v483
                %v485 = vld [vmem:[%s475 + $0x40] sm:%s468]
                %486 = vst [vmem:[%s476 + $0x20] sm:%s468] %v485
                %v487 = vld [vmem:[%s475 + $0x50] sm:%s468]
                %488 = vst [vmem:[%s476 + $0x28] sm:%s468] %v487
                %v489 = vld [vmem:[%s475 + $0x60] sm:%s468]
                %490 = vst [vmem:[%s476 + $0x30] sm:%s468] %v489
                %v491 = vld [vmem:[%s475 + $0x70] sm:%s468]
                %492 = vst [vmem:[%s476 + $0x38] sm:%s468] %v491
                %v493 = vld [vmem:[%s475 + $0x80] sm:%s468]
                %494 = vst [vmem:[%s476 + $0x40] sm:%s468] %v493
                %v495 = vld [vmem:[%s475 + $0x90] sm:%s468]
                %496 = vst [vmem:[%s476 + $0x48] sm:%s468] %v495
                %v497 = vld [vmem:[%s475 + $0xa0] sm:%s468]
                %498 = vst [vmem:[%s476 + $0x50] sm:%s468] %v497
                %v499 = vld [vmem:[%s475 + $0xb0] sm:%s468]
                %500 = vst [vmem:[%s476 + $0x58] sm:%s468] %v499
                %v501 = vld [vmem:[%s475 + $0xc0] sm:%s468]
                %502 = vst [vmem:[%s476 + $0x60] sm:%s468] %v501
                %v503 = vld [vmem:[%s475 + $0xd0] sm:%s468]
                %504 = vst [vmem:[%s476 + $0x68] sm:%s468] %v503
                %v505 = vld [vmem:[%s475 + $0xe0] sm:%s468]
                %506 = vst [vmem:[%s476 + $0x70] sm:%s468] %v505
                %v507 = vld [vmem:[%s475 + $0xf0] sm:%s468]
                %508 = vst [vmem:[%s476 + $0x78] sm:%s468] %v507
              $region69: #{tpu_custom_call.1} parent=63 // loop_footer
                %s474 = sadd.s32 1, %s470
              $region70: #{tpu_custom_call.1} parent=63 // loop_footer_branch
                %469 = sbr.rel target = $region66
              $region71: #{tpu_custom_call.1} parent=63 // loop_exit
                _
            $region64: #{tpu_custom_call.1} parent=55 // pred_fallthru
              _
          $region56: #{tpu_custom_call.1} parent=51 // pred_fallthru
            _
          %553 = vnop
        $region52: #{tpu_custom_call.1} parent=47 // pred_fallthru
          _
        // Predicated region
        $region87: #{tpu_custom_call.1} parent=47 // pred_check
          %p554 = pneg %p72
        $region88: #{tpu_custom_call.1} parent=47 // pred_check_branch
          %556 = sbr.rel (%p554) target = $region90
        $region89: #{tpu_custom_call.1} parent=47 // pred_region
          %s557 = smul.u32 16, %s24
          %p558 = scmp.lt.s32.totalorder %s557, 31
          %s559 = scalar_select %p558, %s557, 31
          %s560 = smul.addr %s559, 8
          %s561 = scalar_lea.vmem %s1, %s560
          %s562 = smul.u32 16, %s24
        $region90: #{tpu_custom_call.1} parent=47 // pred_fallthru
          _
        // Predicated region
        $region91: #{tpu_custom_call.1} parent=47 // pred_check
          %p563 = pneg %p98
        $region92: #{tpu_custom_call.1} parent=47 // pred_check_branch
          %565 = sbr.rel (%p563) target = $region94
        $region93: #{tpu_custom_call.1} parent=47 // pred_region
          %s566 = smul.u32 16, %s24
          %p567 = scmp.lt.s32.totalorder %s566, 31
          %s568 = scalar_select %p567, %s566, 31
          %s569 = smul.addr %s568, 2
          %s570 = smul.addr %s569, 8
          %s571 = scalar_lea.vmem %s2, %s570
          %s572 = smul.u32 16, %s24
        $region94: #{tpu_custom_call.1} parent=47 // pred_fallthru
          _
        // Predicated region
        $region95: #{tpu_custom_call.1} parent=47 // pred_check
          %p573 = pneg %p145
        $region96: #{tpu_custom_call.1} parent=47 // pred_check_branch
          %575 = sbr.rel (%p573) target = $region98
        $region97: #{tpu_custom_call.1} parent=47 // pred_region
          %s576 = smul.u32 16, %s24
          %p577 = scmp.lt.s32.totalorder %s576, 31
          %s578 = scalar_select %p577, %s576, 31
          %s579 = smul.addr %s578, 8
          %s580 = scalar_lea.vmem %s4, %s579
          %s581 = smul.u32 16, %s24
        $region98: #{tpu_custom_call.1} parent=47 // pred_fallthru
          _
        // Predicated region
        $region99: #{tpu_custom_call.1} parent=47 // pred_check
          %p582 = pneg %p192
        $region100: #{tpu_custom_call.1} parent=47 // pred_check_branch
          %584 = sbr.rel (%p582) target = $region102
        $region101: #{tpu_custom_call.1} parent=47 // pred_region
          %s585 = smul.u32 16, %s24
          %p586 = scmp.lt.s32.totalorder %s585, 31
          %s587 = scalar_select %p586, %s585, 31
          %s588 = smul.addr %s587, 8
          %s589 = scalar_lea.vmem %s6, %s588
          %s590 = smul.u32 16, %s24
        $region102: #{tpu_custom_call.1} parent=47 // pred_fallthru
          _
        // Predicated region
        $region103: #{tpu_custom_call.1} parent=47 // pred_check
          %p591 = pneg %p283
        $region104: #{tpu_custom_call.1} parent=47 // pred_check_branch
          %593 = sbr.rel (%p591) target = $region106
        $region105: #{tpu_custom_call.1} parent=47 // pred_region
          %p594 = scmp.lt.s32.totalorder %s24, 1
          %s595 = scalar_select %p594, %s24, 1
          %p596 = scmp.lt.s32.totalorder %s24, 1
          %s597 = scalar_select %p596, %s24, 1
          %s598 = smul.addr %s595, 2
          %s599 = sadd.s32 %s597, %s598
          %s600 = smul.addr %s599, 8
          %s601 = scalar_lea.vmem %s10, %s600
        $region106: #{tpu_custom_call.1} parent=47 // pred_fallthru
          _
        // Predicated region
        $region107: #{tpu_custom_call.1} parent=47 // pred_check
          %p602 = pneg %p311
        $region108: #{tpu_custom_call.1} parent=47 // pred_check_branch
          %604 = sbr.rel (%p602) target = $region110
        $region109: #{tpu_custom_call.1} parent=47 // pred_region
          %s605 = sand.u32 %s301, 1
          %s606 = sand.u32 %s301, 1
          %s607 = smul.addr %s606, 1024
          %s608 = scalar_lea.vmem [#allocation3], %s607
          %s609 = smul.u32 8, %s24
          %s610 = smul.u32 16, %s24
          %s611 = smul.addr %s609, 32
          %s612 = sadd.s32 %s610, %s611
          %s613 = smul.addr %s612, 8
          %s614 = scalar_lea.vmem %s11, %s613
          // Predicated region
          $region111: #{tpu_custom_call.1} parent=109 // pred_check
            _
          $region112: #{tpu_custom_call.1} parent=109 // pred_check_branch
            %616 = sbr.rel (0) target = $region114
          $region113: #{tpu_custom_call.1} parent=109 // pred_region
            // Predicated region
            $region115: #{tpu_custom_call.1} parent=113 // pred_check
              _
            $region116: #{tpu_custom_call.1} parent=113 // pred_check_branch
              %618 = sbr.rel (0) target = $region118
            $region117: #{tpu_custom_call.1} parent=113 // pred_region
              // Predicated region
              $region130: #{tpu_custom_call.1} parent=117 // pred_check
                _
              $region131: #{tpu_custom_call.1} parent=117 // pred_check_branch
                %888 = sbr.rel (0) target = $region133
              $region132: #{tpu_custom_call.1} parent=117 // pred_region
                loop: start=0, step=1, limit=1
                $region134: #{tpu_custom_call.1} parent=132 // loop_pre_header
                  _
                $region135: #{tpu_custom_call.1} parent=132 // loop_header
                  %s890 = sphi 0, %s894
                  %p891 = scmp.ge.s32.totalorder %s890, 1
                  %s895 = sphi %s614, %s614
                  %s896 = sphi %s608, %s608
                $region136: #{tpu_custom_call.1} parent=132 // loop_header_branch
                  %893 = sbr.rel (%p891) target = $region140
                $region137: #{tpu_custom_call.1} parent=132 // loop_body
                  %v897 = vld [vmem:[%s895] sm:$0xff]
                  %898 = vst [vmem:[%s896] sm:$0xff] %v897
                  %v899 = vld [vmem:[%s895 + $0x8] sm:$0xff]
                  %900 = vst [vmem:[%s896 + $0x8] sm:$0xff] %v899
                  %v901 = vld [vmem:[%s895 + $0x10] sm:$0xff]
                  %902 = vst [vmem:[%s896 + $0x10] sm:$0xff] %v901
                  %v903 = vld [vmem:[%s895 + $0x18] sm:$0xff]
                  %904 = vst [vmem:[%s896 + $0x18] sm:$0xff] %v903
                  %v905 = vld [vmem:[%s895 + $0x20] sm:$0xff]
                  %906 = vst [vmem:[%s896 + $0x20] sm:$0xff] %v905
                  %v907 = vld [vmem:[%s895 + $0x28] sm:$0xff]
                  %908 = vst [vmem:[%s896 + $0x28] sm:$0xff] %v907
                  %v909 = vld [vmem:[%s895 + $0x30] sm:$0xff]
                  %910 = vst [vmem:[%s896 + $0x30] sm:$0xff] %v909
                  %v911 = vld [vmem:[%s895 + $0x38] sm:$0xff]
                  %912 = vst [vmem:[%s896 + $0x38] sm:$0xff] %v911
                  %v913 = vld [vmem:[%s895 + $0x40] sm:$0xff]
                  %914 = vst [vmem:[%s896 + $0x40] sm:$0xff] %v913
                  %v915 = vld [vmem:[%s895 + $0x48] sm:$0xff]
                  %916 = vst [vmem:[%s896 + $0x48] sm:$0xff] %v915
                  %v917 = vld [vmem:[%s895 + $0x50] sm:$0xff]
                  %918 = vst [vmem:[%s896 + $0x50] sm:$0xff] %v917
                  %v919 = vld [vmem:[%s895 + $0x58] sm:$0xff]
                  %920 = vst [vmem:[%s896 + $0x58] sm:$0xff] %v919
                  %v921 = vld [vmem:[%s895 + $0x60] sm:$0xff]
                  %922 = vst [vmem:[%s896 + $0x60] sm:$0xff] %v921
                  %v923 = vld [vmem:[%s895 + $0x68] sm:$0xff]
                  %924 = vst [vmem:[%s896 + $0x68] sm:$0xff] %v923
                  %v925 = vld [vmem:[%s895 + $0x70] sm:$0xff]
                  %926 = vst [vmem:[%s896 + $0x70] sm:$0xff] %v925
                  %v927 = vld [vmem:[%s895 + $0x78] sm:$0xff]
                  %928 = vst [vmem:[%s896 + $0x78] sm:$0xff] %v927
                  %v929 = vld [vmem:[%s895 + $0x100] sm:$0xff]
                  %930 = vst [vmem:[%s896 + $0x80] sm:$0xff] %v929
                  %v931 = vld [vmem:[%s895 + $0x108] sm:$0xff]
                  %932 = vst [vmem:[%s896 + $0x88] sm:$0xff] %v931
                  %v933 = vld [vmem:[%s895 + $0x110] sm:$0xff]
                  %934 = vst [vmem:[%s896 + $0x90] sm:$0xff] %v933
                  %v935 = vld [vmem:[%s895 + $0x118] sm:$0xff]
                  %936 = vst [vmem:[%s896 + $0x98] sm:$0xff] %v935
                  %v937 = vld [vmem:[%s895 + $0x120] sm:$0xff]
                  %938 = vst [vmem:[%s896 + $0xa0] sm:$0xff] %v937
                  %v939 = vld [vmem:[%s895 + $0x128] sm:$0xff]
                  %940 = vst [vmem:[%s896 + $0xa8] sm:$0xff] %v939
                  %v941 = vld [vmem:[%s895 + $0x130] sm:$0xff]
                  %942 = vst [vmem:[%s896 + $0xb0] sm:$0xff] %v941
                  %v943 = vld [vmem:[%s895 + $0x138] sm:$0xff]
                  %944 = vst [vmem:[%s896 + $0xb8] sm:$0xff] %v943
                  %v945 = vld [vmem:[%s895 + $0x140] sm:$0xff]
                  %946 = vst [vmem:[%s896 + $0xc0] sm:$0xff] %v945
                  %v947 = vld [vmem:[%s895 + $0x148] sm:$0xff]
                  %948 = vst [vmem:[%s896 + $0xc8] sm:$0xff] %v947
                  %v949 = vld [vmem:[%s895 + $0x150] sm:$0xff]
                  %950 = vst [vmem:[%s896 + $0xd0] sm:$0xff] %v949
                  %v951 = vld [vmem:[%s895 + $0x158] sm:$0xff]
                  %952 = vst [vmem:[%s896 + $0xd8] sm:$0xff] %v951
                  %v953 = vld [vmem:[%s895 + $0x160] sm:$0xff]
                  %954 = vst [vmem:[%s896 + $0xe0] sm:$0xff] %v953
                  %v955 = vld [vmem:[%s895 + $0x168] sm:$0xff]
                  %956 = vst [vmem:[%s896 + $0xe8] sm:$0xff] %v955
                  %v957 = vld [vmem:[%s895 + $0x170] sm:$0xff]
                  %958 = vst [vmem:[%s896 + $0xf0] sm:$0xff] %v957
                  %v959 = vld [vmem:[%s895 + $0x178] sm:$0xff]
                  %960 = vst [vmem:[%s896 + $0xf8] sm:$0xff] %v959
                  %v961 = vld [vmem:[%s895 + $0x200] sm:$0xff]
                  %962 = vst [vmem:[%s896 + $0x100] sm:$0xff] %v961
                  %v963 = vld [vmem:[%s895 + $0x208] sm:$0xff]
                  %964 = vst [vmem:[%s896 + $0x108] sm:$0xff] %v963
                  %v965 = vld [vmem:[%s895 + $0x210] sm:$0xff]
                  %966 = vst [vmem:[%s896 + $0x110] sm:$0xff] %v965
                  %v967 = vld [vmem:[%s895 + $0x218] sm:$0xff]
                  %968 = vst [vmem:[%s896 + $0x118] sm:$0xff] %v967
                  %v969 = vld [vmem:[%s895 + $0x220] sm:$0xff]
                  %970 = vst [vmem:[%s896 + $0x120] sm:$0xff] %v969
                  %v971 = vld [vmem:[%s895 + $0x228] sm:$0xff]
                  %972 = vst [vmem:[%s896 + $0x128] sm:$0xff] %v971
                  %v973 = vld [vmem:[%s895 + $0x230] sm:$0xff]
                  %974 = vst [vmem:[%s896 + $0x130] sm:$0xff] %v973
                  %v975 = vld [vmem:[%s895 + $0x238] sm:$0xff]
                  %976 = vst [vmem:[%s896 + $0x138] sm:$0xff] %v975
                  %v977 = vld [vmem:[%s895 + $0x240] sm:$0xff]
                  %978 = vst [vmem:[%s896 + $0x140] sm:$0xff] %v977
                  %v979 = vld [vmem:[%s895 + $0x248] sm:$0xff]
                  %980 = vst [vmem:[%s896 + $0x148] sm:$0xff] %v979
                  %v981 = vld [vmem:[%s895 + $0x250] sm:$0xff]
                  %982 = vst [vmem:[%s896 + $0x150] sm:$0xff] %v981
                  %v983 = vld [vmem:[%s895 + $0x258] sm:$0xff]
                  %984 = vst [vmem:[%s896 + $0x158] sm:$0xff] %v983
                  %v985 = vld [vmem:[%s895 + $0x260] sm:$0xff]
                  %986 = vst [vmem:[%s896 + $0x160] sm:$0xff] %v985
                  %v987 = vld [vmem:[%s895 + $0x268] sm:$0xff]
                  %988 = vst [vmem:[%s896 + $0x168] sm:$0xff] %v987
                  %v989 = vld [vmem:[%s895 + $0x270] sm:$0xff]
                  %990 = vst [vmem:[%s896 + $0x170] sm:$0xff] %v989
                  %v991 = vld [vmem:[%s895 + $0x278] sm:$0xff]
                  %992 = vst [vmem:[%s896 + $0x178] sm:$0xff] %v991
                  %v993 = vld [vmem:[%s895 + $0x300] sm:$0xff]
                  %994 = vst [vmem:[%s896 + $0x180] sm:$0xff] %v993
                  %v995 = vld [vmem:[%s895 + $0x308] sm:$0xff]
                  %996 = vst [vmem:[%s896 + $0x188] sm:$0xff] %v995
                  %v997 = vld [vmem:[%s895 + $0x310] sm:$0xff]
                  %998 = vst [vmem:[%s896 + $0x190] sm:$0xff] %v997
                  %v999 = vld [vmem:[%s895 + $0x318] sm:$0xff]
                  %1000 = vst [vmem:[%s896 + $0x198] sm:$0xff] %v999
                  %v1001 = vld [vmem:[%s895 + $0x320] sm:$0xff]
                  %1002 = vst [vmem:[%s896 + $0x1a0] sm:$0xff] %v1001
                  %v1003 = vld [vmem:[%s895 + $0x328] sm:$0xff]
                  %1004 = vst [vmem:[%s896 + $0x1a8] sm:$0xff] %v1003
                  %v1005 = vld [vmem:[%s895 + $0x330] sm:$0xff]
                  %1006 = vst [vmem:[%s896 + $0x1b0] sm:$0xff] %v1005
                  %v1007 = vld [vmem:[%s895 + $0x338] sm:$0xff]
                  %1008 = vst [vmem:[%s896 + $0x1b8] sm:$0xff] %v1007
                  %v1009 = vld [vmem:[%s895 + $0x340] sm:$0xff]
                  %1010 = vst [vmem:[%s896 + $0x1c0] sm:$0xff] %v1009
                  %v1011 = vld [vmem:[%s895 + $0x348] sm:$0xff]
                  %1012 = vst [vmem:[%s896 + $0x1c8] sm:$0xff] %v1011
                  %v1013 = vld [vmem:[%s895 + $0x350] sm:$0xff]
                  %1014 = vst [vmem:[%s896 + $0x1d0] sm:$0xff] %v1013
                  %v1015 = vld [vmem:[%s895 + $0x358] sm:$0xff]
                  %1016 = vst [vmem:[%s896 + $0x1d8] sm:$0xff] %v1015
                  %v1017 = vld [vmem:[%s895 + $0x360] sm:$0xff]
                  %1018 = vst [vmem:[%s896 + $0x1e0] sm:$0xff] %v1017
                  %v1019 = vld [vmem:[%s895 + $0x368] sm:$0xff]
                  %1020 = vst [vmem:[%s896 + $0x1e8] sm:$0xff] %v1019
                  %v1021 = vld [vmem:[%s895 + $0x370] sm:$0xff]
                  %1022 = vst [vmem:[%s896 + $0x1f0] sm:$0xff] %v1021
                  %v1023 = vld [vmem:[%s895 + $0x378] sm:$0xff]
                  %1024 = vst [vmem:[%s896 + $0x1f8] sm:$0xff] %v1023
                  %v1025 = vld [vmem:[%s895 + $0x400] sm:$0xff]
                  %1026 = vst [vmem:[%s896 + $0x200] sm:$0xff] %v1025
                  %v1027 = vld [vmem:[%s895 + $0x408] sm:$0xff]
                  %1028 = vst [vmem:[%s896 + $0x208] sm:$0xff] %v1027
                  %v1029 = vld [vmem:[%s895 + $0x410] sm:$0xff]
                  %1030 = vst [vmem:[%s896 + $0x210] sm:$0xff] %v1029
                  %v1031 = vld [vmem:[%s895 + $0x418] sm:$0xff]
                  %1032 = vst [vmem:[%s896 + $0x218] sm:$0xff] %v1031
                  %v1033 = vld [vmem:[%s895 + $0x420] sm:$0xff]
                  %1034 = vst [vmem:[%s896 + $0x220] sm:$0xff] %v1033
                  %v1035 = vld [vmem:[%s895 + $0x428] sm:$0xff]
                  %1036 = vst [vmem:[%s896 + $0x228] sm:$0xff] %v1035
                  %v1037 = vld [vmem:[%s895 + $0x430] sm:$0xff]
                  %1038 = vst [vmem:[%s896 + $0x230] sm:$0xff] %v1037
                  %v1039 = vld [vmem:[%s895 + $0x438] sm:$0xff]
                  %1040 = vst [vmem:[%s896 + $0x238] sm:$0xff] %v1039
                  %v1041 = vld [vmem:[%s895 + $0x440] sm:$0xff]
                  %1042 = vst [vmem:[%s896 + $0x240] sm:$0xff] %v1041
                  %v1043 = vld [vmem:[%s895 + $0x448] sm:$0xff]
                  %1044 = vst [vmem:[%s896 + $0x248] sm:$0xff] %v1043
                  %v1045 = vld [vmem:[%s895 + $0x450] sm:$0xff]
                  %1046 = vst [vmem:[%s896 + $0x250] sm:$0xff] %v1045
                  %v1047 = vld [vmem:[%s895 + $0x458] sm:$0xff]
                  %1048 = vst [vmem:[%s896 + $0x258] sm:$0xff] %v1047
                  %v1049 = vld [vmem:[%s895 + $0x460] sm:$0xff]
                  %1050 = vst [vmem:[%s896 + $0x260] sm:$0xff] %v1049
                  %v1051 = vld [vmem:[%s895 + $0x468] sm:$0xff]
                  %1052 = vst [vmem:[%s896 + $0x268] sm:$0xff] %v1051
                  %v1053 = vld [vmem:[%s895 + $0x470] sm:$0xff]
                  %1054 = vst [vmem:[%s896 + $0x270] sm:$0xff] %v1053
                  %v1055 = vld [vmem:[%s895 + $0x478] sm:$0xff]
                  %1056 = vst [vmem:[%s896 + $0x278] sm:$0xff] %v1055
                  %v1057 = vld [vmem:[%s895 + $0x500] sm:$0xff]
                  %1058 = vst [vmem:[%s896 + $0x280] sm:$0xff] %v1057
                  %v1059 = vld [vmem:[%s895 + $0x508] sm:$0xff]
                  %1060 = vst [vmem:[%s896 + $0x288] sm:$0xff] %v1059
                  %v1061 = vld [vmem:[%s895 + $0x510] sm:$0xff]
                  %1062 = vst [vmem:[%s896 + $0x290] sm:$0xff] %v1061
                  %v1063 = vld [vmem:[%s895 + $0x518] sm:$0xff]
                  %1064 = vst [vmem:[%s896 + $0x298] sm:$0xff] %v1063
                  %v1065 = vld [vmem:[%s895 + $0x520] sm:$0xff]
                  %1066 = vst [vmem:[%s896 + $0x2a0] sm:$0xff] %v1065
                  %v1067 = vld [vmem:[%s895 + $0x528] sm:$0xff]
                  %1068 = vst [vmem:[%s896 + $0x2a8] sm:$0xff] %v1067
                  %v1069 = vld [vmem:[%s895 + $0x530] sm:$0xff]
                  %1070 = vst [vmem:[%s896 + $0x2b0] sm:$0xff] %v1069
                  %v1071 = vld [vmem:[%s895 + $0x538] sm:$0xff]
                  %1072 = vst [vmem:[%s896 + $0x2b8] sm:$0xff] %v1071
                  %v1073 = vld [vmem:[%s895 + $0x540] sm:$0xff]
                  %1074 = vst [vmem:[%s896 + $0x2c0] sm:$0xff] %v1073
                  %v1075 = vld [vmem:[%s895 + $0x548] sm:$0xff]
                  %1076 = vst [vmem:[%s896 + $0x2c8] sm:$0xff] %v1075
                  %v1077 = vld [vmem:[%s895 + $0x550] sm:$0xff]
                  %1078 = vst [vmem:[%s896 + $0x2d0] sm:$0xff] %v1077
                  %v1079 = vld [vmem:[%s895 + $0x558] sm:$0xff]
                  %1080 = vst [vmem:[%s896 + $0x2d8] sm:$0xff] %v1079
                  %v1081 = vld [vmem:[%s895 + $0x560] sm:$0xff]
                  %1082 = vst [vmem:[%s896 + $0x2e0] sm:$0xff] %v1081
                  %v1083 = vld [vmem:[%s895 + $0x568] sm:$0xff]
                  %1084 = vst [vmem:[%s896 + $0x2e8] sm:$0xff] %v1083
                  %v1085 = vld [vmem:[%s895 + $0x570] sm:$0xff]
                  %1086 = vst [vmem:[%s896 + $0x2f0] sm:$0xff] %v1085
                  %v1087 = vld [vmem:[%s895 + $0x578] sm:$0xff]
                  %1088 = vst [vmem:[%s896 + $0x2f8] sm:$0xff] %v1087
                  %v1089 = vld [vmem:[%s895 + $0x600] sm:$0xff]
                  %1090 = vst [vmem:[%s896 + $0x300] sm:$0xff] %v1089
                  %v1091 = vld [vmem:[%s895 + $0x608] sm:$0xff]
                  %1092 = vst [vmem:[%s896 + $0x308] sm:$0xff] %v1091
                  %v1093 = vld [vmem:[%s895 + $0x610] sm:$0xff]
                  %1094 = vst [vmem:[%s896 + $0x310] sm:$0xff] %v1093
                  %v1095 = vld [vmem:[%s895 + $0x618] sm:$0xff]
                  %1096 = vst [vmem:[%s896 + $0x318] sm:$0xff] %v1095
                  %v1097 = vld [vmem:[%s895 + $0x620] sm:$0xff]
                  %1098 = vst [vmem:[%s896 + $0x320] sm:$0xff] %v1097
                  %v1099 = vld [vmem:[%s895 + $0x628] sm:$0xff]
                  %1100 = vst [vmem:[%s896 + $0x328] sm:$0xff] %v1099
                  %v1101 = vld [vmem:[%s895 + $0x630] sm:$0xff]
                  %1102 = vst [vmem:[%s896 + $0x330] sm:$0xff] %v1101
                  %v1103 = vld [vmem:[%s895 + $0x638] sm:$0xff]
                  %1104 = vst [vmem:[%s896 + $0x338] sm:$0xff] %v1103
                  %v1105 = vld [vmem:[%s895 + $0x640] sm:$0xff]
                  %1106 = vst [vmem:[%s896 + $0x340] sm:$0xff] %v1105
                  %v1107 = vld [vmem:[%s895 + $0x648] sm:$0xff]
                  %1108 = vst [vmem:[%s896 + $0x348] sm:$0xff] %v1107
                  %v1109 = vld [vmem:[%s895 + $0x650] sm:$0xff]
                  %1110 = vst [vmem:[%s896 + $0x350] sm:$0xff] %v1109
                  %v1111 = vld [vmem:[%s895 + $0x658] sm:$0xff]
                  %1112 = vst [vmem:[%s896 + $0x358] sm:$0xff] %v1111
                  %v1113 = vld [vmem:[%s895 + $0x660] sm:$0xff]
                  %1114 = vst [vmem:[%s896 + $0x360] sm:$0xff] %v1113
                  %v1115 = vld [vmem:[%s895 + $0x668] sm:$0xff]
                  %1116 = vst [vmem:[%s896 + $0x368] sm:$0xff] %v1115
                  %v1117 = vld [vmem:[%s895 + $0x670] sm:$0xff]
                  %1118 = vst [vmem:[%s896 + $0x370] sm:$0xff] %v1117
                  %v1119 = vld [vmem:[%s895 + $0x678] sm:$0xff]
                  %1120 = vst [vmem:[%s896 + $0x378] sm:$0xff] %v1119
                  %v1121 = vld [vmem:[%s895 + $0x700] sm:$0xff]
                  %1122 = vst [vmem:[%s896 + $0x380] sm:$0xff] %v1121
                  %v1123 = vld [vmem:[%s895 + $0x708] sm:$0xff]
                  %1124 = vst [vmem:[%s896 + $0x388] sm:$0xff] %v1123
                  %v1125 = vld [vmem:[%s895 + $0x710] sm:$0xff]
                  %1126 = vst [vmem:[%s896 + $0x390] sm:$0xff] %v1125
                  %v1127 = vld [vmem:[%s895 + $0x718] sm:$0xff]
                  %1128 = vst [vmem:[%s896 + $0x398] sm:$0xff] %v1127
                  %v1129 = vld [vmem:[%s895 + $0x720] sm:$0xff]
                  %1130 = vst [vmem:[%s896 + $0x3a0] sm:$0xff] %v1129
                  %v1131 = vld [vmem:[%s895 + $0x728] sm:$0xff]
                  %1132 = vst [vmem:[%s896 + $0x3a8] sm:$0xff] %v1131
                  %v1133 = vld [vmem:[%s895 + $0x730] sm:$0xff]
                  %1134 = vst [vmem:[%s896 + $0x3b0] sm:$0xff] %v1133
                  %v1135 = vld [vmem:[%s895 + $0x738] sm:$0xff]
                  %1136 = vst [vmem:[%s896 + $0x3b8] sm:$0xff] %v1135
                  %v1137 = vld [vmem:[%s895 + $0x740] sm:$0xff]
                  %1138 = vst [vmem:[%s896 + $0x3c0] sm:$0xff] %v1137
                  %v1139 = vld [vmem:[%s895 + $0x748] sm:$0xff]
                  %1140 = vst [vmem:[%s896 + $0x3c8] sm:$0xff] %v1139
                  %v1141 = vld [vmem:[%s895 + $0x750] sm:$0xff]
                  %1142 = vst [vmem:[%s896 + $0x3d0] sm:$0xff] %v1141
                  %v1143 = vld [vmem:[%s895 + $0x758] sm:$0xff]
                  %1144 = vst [vmem:[%s896 + $0x3d8] sm:$0xff] %v1143
                  %v1145 = vld [vmem:[%s895 + $0x760] sm:$0xff]
                  %1146 = vst [vmem:[%s896 + $0x3e0] sm:$0xff] %v1145
                  %v1147 = vld [vmem:[%s895 + $0x768] sm:$0xff]
                  %1148 = vst [vmem:[%s896 + $0x3e8] sm:$0xff] %v1147
                  %v1149 = vld [vmem:[%s895 + $0x770] sm:$0xff]
                  %1150 = vst [vmem:[%s896 + $0x3f0] sm:$0xff] %v1149
                  %v1151 = vld [vmem:[%s895 + $0x778] sm:$0xff]
                  %1152 = vst [vmem:[%s896 + $0x3f8] sm:$0xff] %v1151
                $region138: #{tpu_custom_call.1} parent=132 // loop_footer
                  %s894 = sadd.s32 1, %s890
                $region139: #{tpu_custom_call.1} parent=132 // loop_footer_branch
                  %889 = sbr.rel target = $region135
                $region140: #{tpu_custom_call.1} parent=132 // loop_exit
                  _
              $region133: #{tpu_custom_call.1} parent=117 // pred_fallthru
                _
              // Predicated region
              $region141: #{tpu_custom_call.1} parent=117 // pred_check
                _
              $region142: #{tpu_custom_call.1} parent=117 // pred_check_branch
                %1154 = sbr.rel target = $region144
              $region143: #{tpu_custom_call.1} parent=117 // pred_region
                _
              $region144: #{tpu_custom_call.1} parent=117 // pred_fallthru
                _
            $region118: #{tpu_custom_call.1} parent=113 // pred_fallthru
              _
            // Predicated region
            $region119: #{tpu_custom_call.1} parent=113 // pred_check
              _
            $region120: #{tpu_custom_call.1} parent=113 // pred_check_branch
              %620 = sbr.rel target = $region122
            $region121: #{tpu_custom_call.1} parent=113 // pred_region
              %s622 = ssub.s32 256, 1
              loop: start=0, step=1, limit=1
              $region123: #{tpu_custom_call.1} parent=121 // loop_pre_header
                _
              $region124: #{tpu_custom_call.1} parent=121 // loop_header
                %s624 = sphi 0, %s628
                %p625 = scmp.ge.s32.totalorder %s624, 1
                %s629 = sphi %s614, %s614
                %s630 = sphi %s608, %s608
              $region125: #{tpu_custom_call.1} parent=121 // loop_header_branch
                %627 = sbr.rel (%p625) target = $region129
              $region126: #{tpu_custom_call.1} parent=121 // loop_body
                %v631 = vld [vmem:[%s629] sm:%s622]
                %632 = vst [vmem:[%s630] sm:%s622] %v631
                %v633 = vld [vmem:[%s629 + $0x8] sm:%s622]
                %634 = vst [vmem:[%s630 + $0x8] sm:%s622] %v633
                %v635 = vld [vmem:[%s629 + $0x10] sm:%s622]
                %636 = vst [vmem:[%s630 + $0x10] sm:%s622] %v635
                %v637 = vld [vmem:[%s629 + $0x18] sm:%s622]
                %638 = vst [vmem:[%s630 + $0x18] sm:%s622] %v637
                %v639 = vld [vmem:[%s629 + $0x20] sm:%s622]
                %640 = vst [vmem:[%s630 + $0x20] sm:%s622] %v639
                %v641 = vld [vmem:[%s629 + $0x28] sm:%s622]
                %642 = vst [vmem:[%s630 + $0x28] sm:%s622] %v641
                %v643 = vld [vmem:[%s629 + $0x30] sm:%s622]
                %644 = vst [vmem:[%s630 + $0x30] sm:%s622] %v643
                %v645 = vld [vmem:[%s629 + $0x38] sm:%s622]
                %646 = vst [vmem:[%s630 + $0x38] sm:%s622] %v645
                %v647 = vld [vmem:[%s629 + $0x40] sm:%s622]
                %648 = vst [vmem:[%s630 + $0x40] sm:%s622] %v647
                %v649 = vld [vmem:[%s629 + $0x48] sm:%s622]
                %650 = vst [vmem:[%s630 + $0x48] sm:%s622] %v649
                %v651 = vld [vmem:[%s629 + $0x50] sm:%s622]
                %652 = vst [vmem:[%s630 + $0x50] sm:%s622] %v651
                %v653 = vld [vmem:[%s629 + $0x58] sm:%s622]
                %654 = vst [vmem:[%s630 + $0x58] sm:%s622] %v653
                %v655 = vld [vmem:[%s629 + $0x60] sm:%s622]
                %656 = vst [vmem:[%s630 + $0x60] sm:%s622] %v655
                %v657 = vld [vmem:[%s629 + $0x68] sm:%s622]
                %658 = vst [vmem:[%s630 + $0x68] sm:%s622] %v657
                %v659 = vld [vmem:[%s629 + $0x70] sm:%s622]
                %660 = vst [vmem:[%s630 + $0x70] sm:%s622] %v659
                %v661 = vld [vmem:[%s629 + $0x78] sm:%s622]
                %662 = vst [vmem:[%s630 + $0x78] sm:%s622] %v661
                %v663 = vld [vmem:[%s629 + $0x100] sm:%s622]
                %664 = vst [vmem:[%s630 + $0x80] sm:%s622] %v663
                %v665 = vld [vmem:[%s629 + $0x108] sm:%s622]
                %666 = vst [vmem:[%s630 + $0x88] sm:%s622] %v665
                %v667 = vld [vmem:[%s629 + $0x110] sm:%s622]
                %668 = vst [vmem:[%s630 + $0x90] sm:%s622] %v667
                %v669 = vld [vmem:[%s629 + $0x118] sm:%s622]
                %670 = vst [vmem:[%s630 + $0x98] sm:%s622] %v669
                %v671 = vld [vmem:[%s629 + $0x120] sm:%s622]
                %672 = vst [vmem:[%s630 + $0xa0] sm:%s622] %v671
                %v673 = vld [vmem:[%s629 + $0x128] sm:%s622]
                %674 = vst [vmem:[%s630 + $0xa8] sm:%s622] %v673
                %v675 = vld [vmem:[%s629 + $0x130] sm:%s622]
                %676 = vst [vmem:[%s630 + $0xb0] sm:%s622] %v675
                %v677 = vld [vmem:[%s629 + $0x138] sm:%s622]
                %678 = vst [vmem:[%s630 + $0xb8] sm:%s622] %v677
                %v679 = vld [vmem:[%s629 + $0x140] sm:%s622]
                %680 = vst [vmem:[%s630 + $0xc0] sm:%s622] %v679
                %v681 = vld [vmem:[%s629 + $0x148] sm:%s622]
                %682 = vst [vmem:[%s630 + $0xc8] sm:%s622] %v681
                %v683 = vld [vmem:[%s629 + $0x150] sm:%s622]
                %684 = vst [vmem:[%s630 + $0xd0] sm:%s622] %v683
                %v685 = vld [vmem:[%s629 + $0x158] sm:%s622]
                %686 = vst [vmem:[%s630 + $0xd8] sm:%s622] %v685
                %v687 = vld [vmem:[%s629 + $0x160] sm:%s622]
                %688 = vst [vmem:[%s630 + $0xe0] sm:%s622] %v687
                %v689 = vld [vmem:[%s629 + $0x168] sm:%s622]
                %690 = vst [vmem:[%s630 + $0xe8] sm:%s622] %v689
                %v691 = vld [vmem:[%s629 + $0x170] sm:%s622]
                %692 = vst [vmem:[%s630 + $0xf0] sm:%s622] %v691
                %v693 = vld [vmem:[%s629 + $0x178] sm:%s622]
                %694 = vst [vmem:[%s630 + $0xf8] sm:%s622] %v693
                %v695 = vld [vmem:[%s629 + $0x200] sm:%s622]
                %696 = vst [vmem:[%s630 + $0x100] sm:%s622] %v695
                %v697 = vld [vmem:[%s629 + $0x208] sm:%s622]
                %698 = vst [vmem:[%s630 + $0x108] sm:%s622] %v697
                %v699 = vld [vmem:[%s629 + $0x210] sm:%s622]
                %700 = vst [vmem:[%s630 + $0x110] sm:%s622] %v699
                %v701 = vld [vmem:[%s629 + $0x218] sm:%s622]
                %702 = vst [vmem:[%s630 + $0x118] sm:%s622] %v701
                %v703 = vld [vmem:[%s629 + $0x220] sm:%s622]
                %704 = vst [vmem:[%s630 + $0x120] sm:%s622] %v703
                %v705 = vld [vmem:[%s629 + $0x228] sm:%s622]
                %706 = vst [vmem:[%s630 + $0x128] sm:%s622] %v705
                %v707 = vld [vmem:[%s629 + $0x230] sm:%s622]
                %708 = vst [vmem:[%s630 + $0x130] sm:%s622] %v707
                %v709 = vld [vmem:[%s629 + $0x238] sm:%s622]
                %710 = vst [vmem:[%s630 + $0x138] sm:%s622] %v709
                %v711 = vld [vmem:[%s629 + $0x240] sm:%s622]
                %712 = vst [vmem:[%s630 + $0x140] sm:%s622] %v711
                %v713 = vld [vmem:[%s629 + $0x248] sm:%s622]
                %714 = vst [vmem:[%s630 + $0x148] sm:%s622] %v713
                %v715 = vld [vmem:[%s629 + $0x250] sm:%s622]
                %716 = vst [vmem:[%s630 + $0x150] sm:%s622] %v715
                %v717 = vld [vmem:[%s629 + $0x258] sm:%s622]
                %718 = vst [vmem:[%s630 + $0x158] sm:%s622] %v717
                %v719 = vld [vmem:[%s629 + $0x260] sm:%s622]
                %720 = vst [vmem:[%s630 + $0x160] sm:%s622] %v719
                %v721 = vld [vmem:[%s629 + $0x268] sm:%s622]
                %722 = vst [vmem:[%s630 + $0x168] sm:%s622] %v721
                %v723 = vld [vmem:[%s629 + $0x270] sm:%s622]
                %724 = vst [vmem:[%s630 + $0x170] sm:%s622] %v723
                %v725 = vld [vmem:[%s629 + $0x278] sm:%s622]
                %726 = vst [vmem:[%s630 + $0x178] sm:%s622] %v725
                %v727 = vld [vmem:[%s629 + $0x300] sm:%s622]
                %728 = vst [vmem:[%s630 + $0x180] sm:%s622] %v727
                %v729 = vld [vmem:[%s629 + $0x308] sm:%s622]
                %730 = vst [vmem:[%s630 + $0x188] sm:%s622] %v729
                %v731 = vld [vmem:[%s629 + $0x310] sm:%s622]
                %732 = vst [vmem:[%s630 + $0x190] sm:%s622] %v731
                %v733 = vld [vmem:[%s629 + $0x318] sm:%s622]
                %734 = vst [vmem:[%s630 + $0x198] sm:%s622] %v733
                %v735 = vld [vmem:[%s629 + $0x320] sm:%s622]
                %736 = vst [vmem:[%s630 + $0x1a0] sm:%s622] %v735
                %v737 = vld [vmem:[%s629 + $0x328] sm:%s622]
                %738 = vst [vmem:[%s630 + $0x1a8] sm:%s622] %v737
                %v739 = vld [vmem:[%s629 + $0x330] sm:%s622]
                %740 = vst [vmem:[%s630 + $0x1b0] sm:%s622] %v739
                %v741 = vld [vmem:[%s629 + $0x338] sm:%s622]
                %742 = vst [vmem:[%s630 + $0x1b8] sm:%s622] %v741
                %v743 = vld [vmem:[%s629 + $0x340] sm:%s622]
                %744 = vst [vmem:[%s630 + $0x1c0] sm:%s622] %v743
                %v745 = vld [vmem:[%s629 + $0x348] sm:%s622]
                %746 = vst [vmem:[%s630 + $0x1c8] sm:%s622] %v745
                %v747 = vld [vmem:[%s629 + $0x350] sm:%s622]
                %748 = vst [vmem:[%s630 + $0x1d0] sm:%s622] %v747
                %v749 = vld [vmem:[%s629 + $0x358] sm:%s622]
                %750 = vst [vmem:[%s630 + $0x1d8] sm:%s622] %v749
                %v751 = vld [vmem:[%s629 + $0x360] sm:%s622]
                %752 = vst [vmem:[%s630 + $0x1e0] sm:%s622] %v751
                %v753 = vld [vmem:[%s629 + $0x368] sm:%s622]
                %754 = vst [vmem:[%s630 + $0x1e8] sm:%s622] %v753
                %v755 = vld [vmem:[%s629 + $0x370] sm:%s622]
                %756 = vst [vmem:[%s630 + $0x1f0] sm:%s622] %v755
                %v757 = vld [vmem:[%s629 + $0x378] sm:%s622]
                %758 = vst [vmem:[%s630 + $0x1f8] sm:%s622] %v757
                %v759 = vld [vmem:[%s629 + $0x400] sm:%s622]
                %760 = vst [vmem:[%s630 + $0x200] sm:%s622] %v759
                %v761 = vld [vmem:[%s629 + $0x408] sm:%s622]
                %762 = vst [vmem:[%s630 + $0x208] sm:%s622] %v761
                %v763 = vld [vmem:[%s629 + $0x410] sm:%s622]
                %764 = vst [vmem:[%s630 + $0x210] sm:%s622] %v763
                %v765 = vld [vmem:[%s629 + $0x418] sm:%s622]
                %766 = vst [vmem:[%s630 + $0x218] sm:%s622] %v765
                %v767 = vld [vmem:[%s629 + $0x420] sm:%s622]
                %768 = vst [vmem:[%s630 + $0x220] sm:%s622] %v767
                %v769 = vld [vmem:[%s629 + $0x428] sm:%s622]
                %770 = vst [vmem:[%s630 + $0x228] sm:%s622] %v769
                %v771 = vld [vmem:[%s629 + $0x430] sm:%s622]
                %772 = vst [vmem:[%s630 + $0x230] sm:%s622] %v771
                %v773 = vld [vmem:[%s629 + $0x438] sm:%s622]
                %774 = vst [vmem:[%s630 + $0x238] sm:%s622] %v773
                %v775 = vld [vmem:[%s629 + $0x440] sm:%s622]
                %776 = vst [vmem:[%s630 + $0x240] sm:%s622] %v775
                %v777 = vld [vmem:[%s629 + $0x448] sm:%s622]
                %778 = vst [vmem:[%s630 + $0x248] sm:%s622] %v777
                %v779 = vld [vmem:[%s629 + $0x450] sm:%s622]
                %780 = vst [vmem:[%s630 + $0x250] sm:%s622] %v779
                %v781 = vld [vmem:[%s629 + $0x458] sm:%s622]
                %782 = vst [vmem:[%s630 + $0x258] sm:%s622] %v781
                %v783 = vld [vmem:[%s629 + $0x460] sm:%s622]
                %784 = vst [vmem:[%s630 + $0x260] sm:%s622] %v783
                %v785 = vld [vmem:[%s629 + $0x468] sm:%s622]
                %786 = vst [vmem:[%s630 + $0x268] sm:%s622] %v785
                %v787 = vld [vmem:[%s629 + $0x470] sm:%s622]
                %788 = vst [vmem:[%s630 + $0x270] sm:%s622] %v787
                %v789 = vld [vmem:[%s629 + $0x478] sm:%s622]
                %790 = vst [vmem:[%s630 + $0x278] sm:%s622] %v789
                %v791 = vld [vmem:[%s629 + $0x500] sm:%s622]
                %792 = vst [vmem:[%s630 + $0x280] sm:%s622] %v791
                %v793 = vld [vmem:[%s629 + $0x508] sm:%s622]
                %794 = vst [vmem:[%s630 + $0x288] sm:%s622] %v793
                %v795 = vld [vmem:[%s629 + $0x510] sm:%s622]
                %796 = vst [vmem:[%s630 + $0x290] sm:%s622] %v795
                %v797 = vld [vmem:[%s629 + $0x518] sm:%s622]
                %798 = vst [vmem:[%s630 + $0x298] sm:%s622] %v797
                %v799 = vld [vmem:[%s629 + $0x520] sm:%s622]
                %800 = vst [vmem:[%s630 + $0x2a0] sm:%s622] %v799
                %v801 = vld [vmem:[%s629 + $0x528] sm:%s622]
                %802 = vst [vmem:[%s630 + $0x2a8] sm:%s622] %v801
                %v803 = vld [vmem:[%s629 + $0x530] sm:%s622]
                %804 = vst [vmem:[%s630 + $0x2b0] sm:%s622] %v803
                %v805 = vld [vmem:[%s629 + $0x538] sm:%s622]
                %806 = vst [vmem:[%s630 + $0x2b8] sm:%s622] %v805
                %v807 = vld [vmem:[%s629 + $0x540] sm:%s622]
                %808 = vst [vmem:[%s630 + $0x2c0] sm:%s622] %v807
                %v809 = vld [vmem:[%s629 + $0x548] sm:%s622]
                %810 = vst [vmem:[%s630 + $0x2c8] sm:%s622] %v809
                %v811 = vld [vmem:[%s629 + $0x550] sm:%s622]
                %812 = vst [vmem:[%s630 + $0x2d0] sm:%s622] %v811
                %v813 = vld [vmem:[%s629 + $0x558] sm:%s622]
                %814 = vst [vmem:[%s630 + $0x2d8] sm:%s622] %v813
                %v815 = vld [vmem:[%s629 + $0x560] sm:%s622]
                %816 = vst [vmem:[%s630 + $0x2e0] sm:%s622] %v815
                %v817 = vld [vmem:[%s629 + $0x568] sm:%s622]
                %818 = vst [vmem:[%s630 + $0x2e8] sm:%s622] %v817
                %v819 = vld [vmem:[%s629 + $0x570] sm:%s622]
                %820 = vst [vmem:[%s630 + $0x2f0] sm:%s622] %v819
                %v821 = vld [vmem:[%s629 + $0x578] sm:%s622]
                %822 = vst [vmem:[%s630 + $0x2f8] sm:%s622] %v821
                %v823 = vld [vmem:[%s629 + $0x600] sm:%s622]
                %824 = vst [vmem:[%s630 + $0x300] sm:%s622] %v823
                %v825 = vld [vmem:[%s629 + $0x608] sm:%s622]
                %826 = vst [vmem:[%s630 + $0x308] sm:%s622] %v825
                %v827 = vld [vmem:[%s629 + $0x610] sm:%s622]
                %828 = vst [vmem:[%s630 + $0x310] sm:%s622] %v827
                %v829 = vld [vmem:[%s629 + $0x618] sm:%s622]
                %830 = vst [vmem:[%s630 + $0x318] sm:%s622] %v829
                %v831 = vld [vmem:[%s629 + $0x620] sm:%s622]
                %832 = vst [vmem:[%s630 + $0x320] sm:%s622] %v831
                %v833 = vld [vmem:[%s629 + $0x628] sm:%s622]
                %834 = vst [vmem:[%s630 + $0x328] sm:%s622] %v833
                %v835 = vld [vmem:[%s629 + $0x630] sm:%s622]
                %836 = vst [vmem:[%s630 + $0x330] sm:%s622] %v835
                %v837 = vld [vmem:[%s629 + $0x638] sm:%s622]
                %838 = vst [vmem:[%s630 + $0x338] sm:%s622] %v837
                %v839 = vld [vmem:[%s629 + $0x640] sm:%s622]
                %840 = vst [vmem:[%s630 + $0x340] sm:%s622] %v839
                %v841 = vld [vmem:[%s629 + $0x648] sm:%s622]
                %842 = vst [vmem:[%s630 + $0x348] sm:%s622] %v841
                %v843 = vld [vmem:[%s629 + $0x650] sm:%s622]
                %844 = vst [vmem:[%s630 + $0x350] sm:%s622] %v843
                %v845 = vld [vmem:[%s629 + $0x658] sm:%s622]
                %846 = vst [vmem:[%s630 + $0x358] sm:%s622] %v845
                %v847 = vld [vmem:[%s629 + $0x660] sm:%s622]
                %848 = vst [vmem:[%s630 + $0x360] sm:%s622] %v847
                %v849 = vld [vmem:[%s629 + $0x668] sm:%s622]
                %850 = vst [vmem:[%s630 + $0x368] sm:%s622] %v849
                %v851 = vld [vmem:[%s629 + $0x670] sm:%s622]
                %852 = vst [vmem:[%s630 + $0x370] sm:%s622] %v851
                %v853 = vld [vmem:[%s629 + $0x678] sm:%s622]
                %854 = vst [vmem:[%s630 + $0x378] sm:%s622] %v853
                %v855 = vld [vmem:[%s629 + $0x700] sm:%s622]
                %856 = vst [vmem:[%s630 + $0x380] sm:%s622] %v855
                %v857 = vld [vmem:[%s629 + $0x708] sm:%s622]
                %858 = vst [vmem:[%s630 + $0x388] sm:%s622] %v857
                %v859 = vld [vmem:[%s629 + $0x710] sm:%s622]
                %860 = vst [vmem:[%s630 + $0x390] sm:%s622] %v859
                %v861 = vld [vmem:[%s629 + $0x718] sm:%s622]
                %862 = vst [vmem:[%s630 + $0x398] sm:%s622] %v861
                %v863 = vld [vmem:[%s629 + $0x720] sm:%s622]
                %864 = vst [vmem:[%s630 + $0x3a0] sm:%s622] %v863
                %v865 = vld [vmem:[%s629 + $0x728] sm:%s622]
                %866 = vst [vmem:[%s630 + $0x3a8] sm:%s622] %v865
                %v867 = vld [vmem:[%s629 + $0x730] sm:%s622]
                %868 = vst [vmem:[%s630 + $0x3b0] sm:%s622] %v867
                %v869 = vld [vmem:[%s629 + $0x738] sm:%s622]
                %870 = vst [vmem:[%s630 + $0x3b8] sm:%s622] %v869
                %v871 = vld [vmem:[%s629 + $0x740] sm:%s622]
                %872 = vst [vmem:[%s630 + $0x3c0] sm:%s622] %v871
                %v873 = vld [vmem:[%s629 + $0x748] sm:%s622]
                %874 = vst [vmem:[%s630 + $0x3c8] sm:%s622] %v873
                %v875 = vld [vmem:[%s629 + $0x750] sm:%s622]
                %876 = vst [vmem:[%s630 + $0x3d0] sm:%s622] %v875
                %v877 = vld [vmem:[%s629 + $0x758] sm:%s622]
                %878 = vst [vmem:[%s630 + $0x3d8] sm:%s622] %v877
                %v879 = vld [vmem:[%s629 + $0x760] sm:%s622]
                %880 = vst [vmem:[%s630 + $0x3e0] sm:%s622] %v879
                %v881 = vld [vmem:[%s629 + $0x768] sm:%s622]
                %882 = vst [vmem:[%s630 + $0x3e8] sm:%s622] %v881
                %v883 = vld [vmem:[%s629 + $0x770] sm:%s622]
                %884 = vst [vmem:[%s630 + $0x3f0] sm:%s622] %v883
                %v885 = vld [vmem:[%s629 + $0x778] sm:%s622]
                %886 = vst [vmem:[%s630 + $0x3f8] sm:%s622] %v885
              $region127: #{tpu_custom_call.1} parent=121 // loop_footer
                %s628 = sadd.s32 1, %s624
              $region128: #{tpu_custom_call.1} parent=121 // loop_footer_branch
                %623 = sbr.rel target = $region124
              $region129: #{tpu_custom_call.1} parent=121 // loop_exit
                _
            $region122: #{tpu_custom_call.1} parent=113 // pred_fallthru
              _
          $region114: #{tpu_custom_call.1} parent=109 // pred_fallthru
            _
          %1155 = vnop
        $region110: #{tpu_custom_call.1} parent=47 // pred_fallthru
          _
      $region48: #{tpu_custom_call.1} parent=5 // pred_fallthru
        _
      %p1156 = scmp.le.s32.totalorder 1, %s24
      %p1157 = scmp.lt.s32.totalorder %s24, 3
      %p1158 = pnand %p1156, %p1157
      %p1159 = pneg %p1158
      // Predicated region
      $region145: #{tpu_custom_call.1} parent=5 // pred_check
        _
      $region146: #{tpu_custom_call.1} parent=5 // pred_check_branch
        %1161 = sbr.rel (%p1158) target = $region148
      $region147: #{tpu_custom_call.1} parent=5 // pred_region
        %s1162 = ssub.s32 %s24, 1
        %s1163 = sand.u32 %s39, 1
        %s1164 = sand.u32 %s39, 1
        %s1165 = smul.addr %s1164, 128
        %s1166 = scalar_lea.vmem [#allocation2], %s1165
        // Predicated region
        $region149: #{tpu_custom_call.1} parent=147 // pred_check
          %p1167 = pneg %p52
        $region150: #{tpu_custom_call.1} parent=147 // pred_check_branch
          %1169 = sbr.rel (%p1167) target = $region152
        $region151: #{tpu_custom_call.1} parent=147 // pred_region
          _
        $region152: #{tpu_custom_call.1} parent=147 // pred_fallthru
          _
        %s1170 = sand.u32 %s304, 1
        %s1171 = sand.u32 %s304, 1
        %s1172 = smul.addr %s1171, 1024
        %s1173 = scalar_lea.vmem [#allocation3], %s1172
        // Predicated region
        $region153: #{tpu_custom_call.1} parent=147 // pred_check
          %p1174 = pneg %p317
        $region154: #{tpu_custom_call.1} parent=147 // pred_check_branch
          %1176 = sbr.rel (%p1174) target = $region156
        $region155: #{tpu_custom_call.1} parent=147 // pred_region
          _
        $region156: #{tpu_custom_call.1} parent=147 // pred_fallthru
          _
        %s1177 = sand.u32 %s39, 1
        %s1178 = sand.u32 %s39, 1
        %s1179 = smul.addr %s1178, 128
        %s1180 = scalar_lea.vmem [#allocation2], %s1179
        %p1181 = pneg %p52
        %p1182 = pneg %p49
        %s1183 = smul.u32 16, %s29
        %p1184 = scmp.lt.s32.totalorder %s1183, 31
        %s1185 = scalar_select %p1184, %s1183, 31
        %s1186 = smul.addr %s1185, 8
        %s1187 = scalar_lea.vmem %s1, %s1186
        %p1188 = pneg %p78
        %p1189 = pneg %p75
        %s1190 = smul.u32 16, %s29
        %p1191 = scmp.lt.s32.totalorder %s1190, 31
        %s1192 = scalar_select %p1191, %s1190, 31
        %s1193 = smul.addr %s1192, 2
        %s1194 = smul.addr %s1193, 8
        %s1195 = scalar_lea.vmem %s2, %s1194
        %p1196 = pneg %p104
        %p1197 = pneg %p101
        %p1198 = pneg %p125
        %p1199 = pneg %p122
        %s1200 = smul.u32 16, %s29
        %p1201 = scmp.lt.s32.totalorder %s1200, 31
        %s1202 = scalar_select %p1201, %s1200, 31
        %s1203 = smul.addr %s1202, 8
        %s1204 = scalar_lea.vmem %s4, %s1203
        %p1205 = pneg %p151
        %p1206 = pneg %p148
        %p1207 = pneg %p172
        %p1208 = pneg %p169
        %s1209 = smul.u32 16, %s29
        %p1210 = scmp.lt.s32.totalorder %s1209, 31
        %s1211 = scalar_select %p1210, %s1209, 31
        %s1212 = smul.addr %s1211, 8
        %s1213 = scalar_lea.vmem %s6, %s1212
        %p1214 = pneg %p198
        %p1215 = pneg %p195
        %p1216 = pneg %p219
        %p1217 = pneg %p216
        %p1218 = pneg %p240
        %p1219 = pneg %p237
        %p1220 = pneg %p261
        %p1221 = pneg %p258
        %p1222 = scmp.lt.s32.totalorder %s29, 1
        %s1223 = scalar_select %p1222, %s29, 1
        %p1224 = scmp.lt.s32.totalorder %s29, 1
        %s1225 = scalar_select %p1224, %s29, 1
        %s1226 = smul.addr %s1223, 2
        %s1227 = sadd.s32 %s1225, %s1226
        %s1228 = smul.addr %s1227, 8
        %s1229 = scalar_lea.vmem %s10, %s1228
        %p1230 = pneg %p289
        %p1231 = pneg %p286
        %s1232 = sand.u32 %s304, 1
        %s1233 = sand.u32 %s304, 1
        %s1234 = smul.addr %s1233, 1024
        %s1235 = scalar_lea.vmem [#allocation3], %s1234
        %p1236 = pneg %p317
        %p1237 = pneg %p314
        %p1238 = pneg %p338
        %p1239 = pneg %p335
        %p1240 = pneg %p359
        %p1241 = pneg %p356
        %p1242 = pneg %p380
        %p1243 = pneg %p377
        %p1244 = pneg %p406
        %p1245 = pneg %p403
        %s1246 = sand.u32 %s393, 1
        %s1247 = scalar_lea.sflag [#allocation5], %s1246
        %s1248 = sand.u32 %s393, 1
        %s1249 = smul.addr %s1248, 8
        %s1250 = scalar_lea.vmem [#allocation4], %s1249
        %s1251 = smul.u32 16, %s29
        %s1252 = smul.u32 16, %s29
        %p1253 = scmp.lt.s32.totalorder %s1252, 31
        %s1254 = scalar_select %p1253, %s1252, 31
        %s1255 = smul.addr %s1254, 8
        %s1256 = scalar_lea.vmem %s1, %s1255
        %s1257 = smul.u32 16, %s29
        %s1258 = smul.u32 16, %s29
        %p1259 = scmp.lt.s32.totalorder %s1258, 31
        %s1260 = scalar_select %p1259, %s1258, 31
        %s1261 = smul.addr %s1260, 2
        %s1262 = smul.addr %s1261, 8
        %s1263 = scalar_lea.vmem %s2, %s1262
        %s1264 = smul.u32 16, %s29
        %s1265 = smul.u32 16, %s29
        %p1266 = scmp.lt.s32.totalorder %s1265, 31
        %s1267 = scalar_select %p1266, %s1265, 31
        %s1268 = smul.addr %s1267, 8
        %s1269 = scalar_lea.vmem %s4, %s1268
        %s1270 = smul.u32 16, %s29
        %s1271 = smul.u32 16, %s29
        %p1272 = scmp.lt.s32.totalorder %s1271, 31
        %s1273 = scalar_select %p1272, %s1271, 31
        %s1274 = smul.addr %s1273, 8
        %s1275 = scalar_lea.vmem %s6, %s1274
        %s1276 = smul.u32 16, %s29
        %p1277 = scmp.lt.s32.totalorder %s29, 1
        %s1278 = scalar_select %p1277, %s29, 1
        %p1279 = scmp.lt.s32.totalorder %s29, 1
        %s1280 = scalar_select %p1279, %s29, 1
        %s1281 = smul.addr %s1278, 2
        %s1282 = sadd.s32 %s1280, %s1281
        %s1283 = smul.addr %s1282, 8
        %s1284 = scalar_lea.vmem %s10, %s1283
        %s1285 = smul.u32 8, %s29
        %s1286 = smul.u32 16, %s29
        %v1287 = vld [vmem:[%s1166] sm:$0xff]
        %v1288 = vld [vmem:[%s1166 + $0x8] sm:$0xff]
        %v1289 = vld [vmem:[%s1166 + $0x10] sm:$0xff]
        %v1290 = vld [vmem:[%s1166 + $0x18] sm:$0xff]
        %v1291 = vld [vmem:[%s1166 + $0x20] sm:$0xff]
        %v1292 = vld [vmem:[%s1166 + $0x28] sm:$0xff]
        %v1293 = vld [vmem:[%s1166 + $0x30] sm:$0xff]
        %v1294 = vld [vmem:[%s1166 + $0x38] sm:$0xff]
        %v1295 = vld [vmem:[%s1166 + $0x40] sm:$0xff]
        %v1296 = vld [vmem:[%s1166 + $0x48] sm:$0xff]
        %v1297 = vld [vmem:[%s1166 + $0x50] sm:$0xff]
        %v1298 = vld [vmem:[%s1166 + $0x58] sm:$0xff]
        %v1299 = vld [vmem:[%s1166 + $0x60] sm:$0xff]
        %v1300 = vld [vmem:[%s1166 + $0x68] sm:$0xff]
        %v1301 = vld [vmem:[%s1166 + $0x70] sm:$0xff]
        %v1302 = vld [vmem:[%s1166 + $0x78] sm:$0xff]
        %v1303 = vld [vmem:[%s1263] sm:$0xff]
        %v1304 = vld [vmem:[%s1263 + $0x8] sm:$0xff]
        %v1305 = vld [vmem:[%s1263 + $0x10] sm:$0xff]
        %v1306 = vld [vmem:[%s1263 + $0x18] sm:$0xff]
        %v1307 = vld [vmem:[%s1263 + $0x20] sm:$0xff]
        %v1308 = vld [vmem:[%s1263 + $0x28] sm:$0xff]
        %v1309 = vld [vmem:[%s1263 + $0x30] sm:$0xff]
        %v1310 = vld [vmem:[%s1263 + $0x38] sm:$0xff]
        %v1311 = vld [vmem:[%s1263 + $0x40] sm:$0xff]
        %v1312 = vld [vmem:[%s1263 + $0x48] sm:$0xff]
        %v1313 = vld [vmem:[%s1263 + $0x50] sm:$0xff]
        %v1314 = vld [vmem:[%s1263 + $0x58] sm:$0xff]
        %v1315 = vld [vmem:[%s1263 + $0x60] sm:$0xff]
        %v1316 = vld [vmem:[%s1263 + $0x68] sm:$0xff]
        %v1317 = vld [vmem:[%s1263 + $0x70] sm:$0xff]
        %v1318 = vld [vmem:[%s1263 + $0x78] sm:$0xff]
        %v1319 = vld [vmem:[%s1263 + $0x80] sm:$0xff]
        %v1320 = vld [vmem:[%s1263 + $0x88] sm:$0xff]
        %v1321 = vld [vmem:[%s1263 + $0x90] sm:$0xff]
        %v1322 = vld [vmem:[%s1263 + $0x98] sm:$0xff]
        %v1323 = vld [vmem:[%s1263 + $0xa0] sm:$0xff]
        %v1324 = vld [vmem:[%s1263 + $0xa8] sm:$0xff]
        %v1325 = vld [vmem:[%s1263 + $0xb0] sm:$0xff]
        %v1326 = vld [vmem:[%s1263 + $0xb8] sm:$0xff]
        %v1327 = vld [vmem:[%s1263 + $0xc0] sm:$0xff]
        %v1328 = vld [vmem:[%s1263 + $0xc8] sm:$0xff]
        %v1329 = vld [vmem:[%s1263 + $0xd0] sm:$0xff]
        %v1330 = vld [vmem:[%s1263 + $0xd8] sm:$0xff]
        %v1331 = vld [vmem:[%s1263 + $0xe0] sm:$0xff]
        %v1332 = vld [vmem:[%s1263 + $0xe8] sm:$0xff]
        %v1333 = vld [vmem:[%s1263 + $0xf0] sm:$0xff]
        %v1334 = vld [vmem:[%s1263 + $0xf8] sm:$0xff]
        %v1335 = vld [vmem:[%s7] sm:$0xff]
        %v1336 = vld [vmem:[%s7 + $0x8] sm:$0xff]
        %v1337 = vld [vmem:[%s7 + $0x10] sm:$0xff]
        %v1338 = vld [vmem:[%s7 + $0x18] sm:$0xff]
        %v1339 = vld [vmem:[%s7 + $0x20] sm:$0xff]
        %v1340 = vld [vmem:[%s7 + $0x28] sm:$0xff]
        %v1341 = vld [vmem:[%s7 + $0x30] sm:$0xff]
        %v1342 = vld [vmem:[%s7 + $0x38] sm:$0xff]
        %v1343 = vld [vmem:[%s7 + $0x40] sm:$0xff]
        %v1344 = vld [vmem:[%s7 + $0x48] sm:$0xff]
        %v1345 = vld [vmem:[%s7 + $0x50] sm:$0xff]
        %v1346 = vld [vmem:[%s7 + $0x58] sm:$0xff]
        %v1347 = vld [vmem:[%s7 + $0x60] sm:$0xff]
        %v1348 = vld [vmem:[%s7 + $0x68] sm:$0xff]
        %v1349 = vld [vmem:[%s7 + $0x70] sm:$0xff]
        %v1350 = vld [vmem:[%s7 + $0x78] sm:$0xff]
        %v1351 = vld [vmem:[%s7 + $0x80] sm:$0xff]
        %v1352 = vld [vmem:[%s7 + $0x88] sm:$0xff]
        %v1353 = vld [vmem:[%s7 + $0x90] sm:$0xff]
        %v1354 = vld [vmem:[%s7 + $0x98] sm:$0xff]
        %v1355 = vld [vmem:[%s7 + $0xa0] sm:$0xff]
        %v1356 = vld [vmem:[%s7 + $0xa8] sm:$0xff]
        %v1357 = vld [vmem:[%s7 + $0xb0] sm:$0xff]
        %v1358 = vld [vmem:[%s7 + $0xb8] sm:$0xff]
        %v1359 = vld [vmem:[%s1256] sm:$0xff]
        %v1360 = vld [vmem:[%s1256 + $0x8] sm:$0xff]
        %v1361 = vld [vmem:[%s1256 + $0x10] sm:$0xff]
        %v1362 = vld [vmem:[%s1256 + $0x18] sm:$0xff]
        %v1363 = vld [vmem:[%s1256 + $0x20] sm:$0xff]
        %v1364 = vld [vmem:[%s1256 + $0x28] sm:$0xff]
        %v1365 = vld [vmem:[%s1256 + $0x30] sm:$0xff]
        %v1366 = vld [vmem:[%s1256 + $0x38] sm:$0xff]
        %v1367 = vld [vmem:[%s1256 + $0x40] sm:$0xff]
        %v1368 = vld [vmem:[%s1256 + $0x48] sm:$0xff]
        %v1369 = vld [vmem:[%s1256 + $0x50] sm:$0xff]
        %v1370 = vld [vmem:[%s1256 + $0x58] sm:$0xff]
        %v1371 = vld [vmem:[%s1256 + $0x60] sm:$0xff]
        %v1372 = vld [vmem:[%s1256 + $0x68] sm:$0xff]
        %v1373 = vld [vmem:[%s1256 + $0x70] sm:$0xff]
        %v1374 = vld [vmem:[%s1256 + $0x78] sm:$0xff]
        %1375 = vmatprep.subr.mxu0 0.0
        %1376 = vmatpush1.msra.mxu0 %v1374
        %1377 = vmatprep.subr.mxu0 0.0
        %1378 = vmatpush1.msra.mxu0 %v1373
        %1379 = vmatprep.subr.mxu0 0.0
        %1380 = vmatpush1.msra.mxu0 %v1372
        %1381 = vmatprep.subr.mxu0 0.0
        %1382 = vmatpush1.msra.mxu0 %v1371
        %1383 = vmatprep.subr.mxu0 0.0
        %1384 = vmatpush1.msra.mxu0 %v1370
        %1385 = vmatprep.subr.mxu0 0.0
        %1386 = vmatpush1.msra.mxu0 %v1369
        %1387 = vmatprep.subr.mxu0 0.0
        %1388 = vmatpush1.msra.mxu0 %v1368
        %1389 = vmatprep.subr.mxu0 0.0
        %1390 = vmatpush1.msra.mxu0 %v1367
        %1391 = vmatprep.subr.mxu0 0.0
        %1392 = vmatpush1.msra.mxu0 %v1366
        %1393 = vmatprep.subr.mxu0 0.0
        %1394 = vmatpush1.msra.mxu0 %v1365
        %1395 = vmatprep.subr.mxu0 0.0
        %1396 = vmatpush1.msra.mxu0 %v1364
        %1397 = vmatprep.subr.mxu0 0.0
        %1398 = vmatpush1.msra.mxu0 %v1363
        %1399 = vmatprep.subr.mxu0 0.0
        %1400 = vmatpush1.msra.mxu0 %v1362
        %1401 = vmatprep.subr.mxu0 0.0
        %1402 = vmatpush1.msra.mxu0 %v1361
        %1403 = vmatprep.subr.mxu0 0.0
        %1404 = vmatpush1.msra.mxu0 %v1360
        %1405 = vmatprep.subr.mxu0 0.0
        %1406 = vmatpush1.msra.mxu0 %v1359
        %1407 = vmatprep.subr.mxu0 0.0
        %1408 = vmatpush2.msra.mxu0 0.0
        %1409 = vmatprep.subr.mxu0 0.0
        %1410 = vmatpush2.msra.mxu0 0.0
        %1411 = vmatprep.subr.mxu0 0.0
        %1412 = vmatpush2.msra.mxu0 0.0
        %1413 = vmatprep.subr.mxu0 0.0
        %1414 = vmatpush2.msra.mxu0 0.0
        %1415 = vmatprep.subr.mxu0 0.0
        %1416 = vmatpush2.msra.mxu0 0.0
        %1417 = vmatprep.subr.mxu0 0.0
        %1418 = vmatpush2.msra.mxu0 0.0
        %1419 = vmatprep.subr.mxu0 0.0
        %1420 = vmatpush2.msra.mxu0 0.0
        %1421 = vmatprep.subr.mxu0 0.0
        %1422 = vmatpush2.msra.mxu0 0.0
        %1423 = vmatprep.subr.mxu0 0.0
        %1424 = vmatpush2.msra.mxu0 0.0
        %1425 = vmatprep.subr.mxu0 0.0
        %1426 = vmatpush2.msra.mxu0 0.0
        %1427 = vmatprep.subr.mxu0 0.0
        %1428 = vmatpush2.msra.mxu0 0.0
        %1429 = vmatprep.subr.mxu0 0.0
        %1430 = vmatpush2.msra.mxu0 0.0
        %1431 = vmatprep.subr.mxu0 0.0
        %1432 = vmatpush2.msra.mxu0 0.0
        %1433 = vmatprep.subr.mxu0 0.0
        %1434 = vmatpush2.msra.mxu0 0.0
        %1435 = vmatprep.subr.mxu0 0.0
        %1436 = vmatpush2.msra.mxu0 0.0
        %1437 = vmatprep.subr.mxu0 0.0
        %1438 = vmatpush2.msra.mxu0 0.0
        %1439 = vmatprep.mubr.f32.mxu0 0.0
        %1440 = vmatmul.mubr.f32.gmra.mxu0 %v1287
        %v1441 = vpop.f32.mrf.mxu0
        %v1442 = vadd.f32 0.0, %v1441
        %v1443 = vpop.f32.mrf.mxu0
        %1444 = vmatprep.mubr.f32.mxu0 0.0
        %1445 = vmatmul.mubr.f32.gmra.mxu0 %v1288
        %v1446 = vpop.f32.mrf.mxu0
        %v1447 = vadd.f32 0.0, %v1446
        %v1448 = vpop.f32.mrf.mxu0
        %1449 = vmatprep.mubr.f32.mxu0 0.0
        %1450 = vmatmul.mubr.f32.gmra.mxu0 %v1289
        %v1451 = vpop.f32.mrf.mxu0
        %v1452 = vadd.f32 0.0, %v1451
        %v1453 = vpop.f32.mrf.mxu0
        %1454 = vmatprep.mubr.f32.mxu0 0.0
        %1455 = vmatmul.mubr.f32.gmra.mxu0 %v1290
        %v1456 = vpop.f32.mrf.mxu0
        %v1457 = vadd.f32 0.0, %v1456
        %v1458 = vpop.f32.mrf.mxu0
        %1459 = vmatprep.mubr.f32.mxu0 0.0
        %1460 = vmatmul.mubr.f32.gmra.mxu0 %v1291
        %v1461 = vpop.f32.mrf.mxu0
        %v1462 = vadd.f32 0.0, %v1461
        %v1463 = vpop.f32.mrf.mxu0
        %1464 = vmatprep.mubr.f32.mxu0 0.0
        %1465 = vmatmul.mubr.f32.gmra.mxu0 %v1292
        %v1466 = vpop.f32.mrf.mxu0
        %v1467 = vadd.f32 0.0, %v1466
        %v1468 = vpop.f32.mrf.mxu0
        %1469 = vmatprep.mubr.f32.mxu0 0.0
        %1470 = vmatmul.mubr.f32.gmra.mxu0 %v1293
        %v1471 = vpop.f32.mrf.mxu0
        %v1472 = vadd.f32 0.0, %v1471
        %v1473 = vpop.f32.mrf.mxu0
        %1474 = vmatprep.mubr.f32.mxu0 0.0
        %1475 = vmatmul.mubr.f32.gmra.mxu0 %v1294
        %v1476 = vpop.f32.mrf.mxu0
        %v1477 = vadd.f32 0.0, %v1476
        %v1478 = vpop.f32.mrf.mxu0
        %1479 = vmatprep.mubr.f32.mxu0 0.0
        %1480 = vmatmul.mubr.f32.gmra.mxu0 %v1295
        %v1481 = vpop.f32.mrf.mxu0
        %v1482 = vadd.f32 0.0, %v1481
        %v1483 = vpop.f32.mrf.mxu0
        %1484 = vmatprep.mubr.f32.mxu0 0.0
        %1485 = vmatmul.mubr.f32.gmra.mxu0 %v1296
        %v1486 = vpop.f32.mrf.mxu0
        %v1487 = vadd.f32 0.0, %v1486
        %v1488 = vpop.f32.mrf.mxu0
        %1489 = vmatprep.mubr.f32.mxu0 0.0
        %1490 = vmatmul.mubr.f32.gmra.mxu0 %v1297
        %v1491 = vpop.f32.mrf.mxu0
        %v1492 = vadd.f32 0.0, %v1491
        %v1493 = vpop.f32.mrf.mxu0
        %1494 = vmatprep.mubr.f32.mxu0 0.0
        %1495 = vmatmul.mubr.f32.gmra.mxu0 %v1298
        %v1496 = vpop.f32.mrf.mxu0
        %v1497 = vadd.f32 0.0, %v1496
        %v1498 = vpop.f32.mrf.mxu0
        %1499 = vmatprep.mubr.f32.mxu0 0.0
        %1500 = vmatmul.mubr.f32.gmra.mxu0 %v1299
        %v1501 = vpop.f32.mrf.mxu0
        %v1502 = vadd.f32 0.0, %v1501
        %v1503 = vpop.f32.mrf.mxu0
        %1504 = vmatprep.mubr.f32.mxu0 0.0
        %1505 = vmatmul.mubr.f32.gmra.mxu0 %v1300
        %v1506 = vpop.f32.mrf.mxu0
        %v1507 = vadd.f32 0.0, %v1506
        %v1508 = vpop.f32.mrf.mxu0
        %1509 = vmatprep.mubr.f32.mxu0 0.0
        %1510 = vmatmul.mubr.f32.gmra.mxu0 %v1301
        %v1511 = vpop.f32.mrf.mxu0
        %v1512 = vadd.f32 0.0, %v1511
        %v1513 = vpop.f32.mrf.mxu0
        %1514 = vmatprep.mubr.f32.mxu0 0.0
        %1515 = vmatmul.mubr.f32.gmra.mxu0 %v1302
        %v1516 = vpop.f32.mrf.mxu0
        %v1517 = vadd.f32 0.0, %v1516
        %v1518 = vpop.f32.mrf.mxu0
        %1519 = vdwg.mxu0
        %v1520 = vld [vmem:[%s3] sm:$0xff]
        %v1521 = vld [vmem:[%s3 + $0x8] sm:$0xff]
        %v1522 = vld [vmem:[%s3 + $0x10] sm:$0xff]
        %v1523 = vld [vmem:[%s3 + $0x18] sm:$0xff]
        %vm1524 = vcmask 130048
        %v1526 = vsel %vm1524, %v1442, 0
        %v1529 = vsel %vm1524, %v1447, 0
        %v1532 = vsel %vm1524, %v1452, 0
        %v1535 = vsel %vm1524, %v1457, 0
        %v1538 = vsel %vm1524, %v1462, 0
        %v1541 = vsel %vm1524, %v1467, 0
        %v1544 = vsel %vm1524, %v1472, 0
        %v1547 = vsel %vm1524, %v1477, 0
        %v1550 = vsel %vm1524, %v1482, 0
        %v1553 = vsel %vm1524, %v1487, 0
        %v1556 = vsel %vm1524, %v1492, 0
        %v1559 = vsel %vm1524, %v1497, 0
        %v1562 = vsel %vm1524, %v1502, 0
        %v1565 = vsel %vm1524, %v1507, 0
        %v1568 = vsel %vm1524, %v1512, 0
        %v1571 = vsel %vm1524, %v1517, 0
        %1573 = vmatprep.subr.mxu0 0.0
        %1574 = vmatpush1.msra.mxu0 0.0
        %1575 = vmatprep.subr.mxu0 0.0
        %1576 = vmatpush1.msra.mxu0 0.0
        %1577 = vmatprep.subr.mxu0 0.0
        %1578 = vmatpush1.msra.mxu0 0.0
        %1579 = vmatprep.subr.mxu0 0.0
        %1580 = vmatpush1.msra.mxu0 0.0
        %1581 = vmatprep.subr.mxu0 0.0
        %1582 = vmatpush1.msra.mxu0 0.0
        %1583 = vmatprep.subr.mxu0 0.0
        %1584 = vmatpush1.msra.mxu0 0.0
        %1585 = vmatprep.subr.mxu0 0.0
        %1586 = vmatpush1.msra.mxu0 0.0
        %1587 = vmatprep.subr.mxu0 0.0
        %1588 = vmatpush1.msra.mxu0 0.0
        %1589 = vmatprep.subr.mxu0 0.0
        %1590 = vmatpush1.msra.mxu0 0.0
        %1591 = vmatprep.subr.mxu0 0.0
        %1592 = vmatpush1.msra.mxu0 0.0
        %1593 = vmatprep.subr.mxu0 0.0
        %1594 = vmatpush1.msra.mxu0 0.0
        %1595 = vmatprep.subr.mxu0 0.0
        %1596 = vmatpush1.msra.mxu0 0.0
        %1597 = vmatprep.subr.mxu0 0.0
        %1598 = vmatpush1.msra.mxu0 0.0
        %1599 = vmatprep.subr.mxu0 0.0
        %1600 = vmatpush1.msra.mxu0 0.0
        %1601 = vmatprep.subr.mxu0 %v1523
        %1602 = vmatpush1.msra.mxu0 %v1522
        %1603 = vmatprep.subr.mxu0 %v1521
        %1604 = vmatpush1.msra.mxu0 %v1520
        %1605 = vmatprep.subr.mxu0 0.0
        %1606 = vmatpush2.msra.mxu0 0.0
        %1607 = vmatprep.subr.mxu0 0.0
        %1608 = vmatpush2.msra.mxu0 0.0
        %1609 = vmatprep.subr.mxu0 0.0
        %1610 = vmatpush2.msra.mxu0 0.0
        %1611 = vmatprep.subr.mxu0 0.0
        %1612 = vmatpush2.msra.mxu0 0.0
        %1613 = vmatprep.subr.mxu0 0.0
        %1614 = vmatpush2.msra.mxu0 0.0
        %1615 = vmatprep.subr.mxu0 0.0
        %1616 = vmatpush2.msra.mxu0 0.0
        %1617 = vmatprep.subr.mxu0 0.0
        %1618 = vmatpush2.msra.mxu0 0.0
        %1619 = vmatprep.subr.mxu0 0.0
        %1620 = vmatpush2.msra.mxu0 0.0
        %1621 = vmatprep.subr.mxu0 0.0
        %1622 = vmatpush2.msra.mxu0 0.0
        %1623 = vmatprep.subr.mxu0 0.0
        %1624 = vmatpush2.msra.mxu0 0.0
        %1625 = vmatprep.subr.mxu0 0.0
        %1626 = vmatpush2.msra.mxu0 0.0
        %1627 = vmatprep.subr.mxu0 0.0
        %1628 = vmatpush2.msra.mxu0 0.0
        %1629 = vmatprep.subr.mxu0 0.0
        %1630 = vmatpush2.msra.mxu0 0.0
        %1631 = vmatprep.subr.mxu0 0.0
        %1632 = vmatpush2.msra.mxu0 0.0
        %1633 = vmatprep.subr.mxu0 0.0
        %1634 = vmatpush2.msra.mxu0 0.0
        %1635 = vmatprep.subr.mxu0 0.0
        %1636 = vmatpush2.msra.mxu0 0.0
        %1637 = vmatprep.mubr.f32.mxu0 0.0
        %1638 = vmatmul.mubr.f32.gmra.mxu0 %v1526
        %v1639 = vpop.f32.mrf.mxu0
        %v1640 = vadd.f32 0.0, %v1639
        %v1641 = vpop.f32.mrf.mxu0
        %v1642 = vadd.f32 0.0, %v1641
        %1643 = vmatprep.mubr.f32.mxu0 0.0
        %1644 = vmatmul.mubr.f32.gmra.mxu0 %v1529
        %v1645 = vpop.f32.mrf.mxu0
        %v1646 = vadd.f32 0.0, %v1645
        %v1647 = vpop.f32.mrf.mxu0
        %v1648 = vadd.f32 0.0, %v1647
        %1649 = vmatprep.mubr.f32.mxu0 0.0
        %1650 = vmatmul.mubr.f32.gmra.mxu0 %v1532
        %v1651 = vpop.f32.mrf.mxu0
        %v1652 = vadd.f32 0.0, %v1651
        %v1653 = vpop.f32.mrf.mxu0
        %v1654 = vadd.f32 0.0, %v1653
        %1655 = vmatprep.mubr.f32.mxu0 0.0
        %1656 = vmatmul.mubr.f32.gmra.mxu0 %v1535
        %v1657 = vpop.f32.mrf.mxu0
        %v1658 = vadd.f32 0.0, %v1657
        %v1659 = vpop.f32.mrf.mxu0
        %v1660 = vadd.f32 0.0, %v1659
        %1661 = vmatprep.mubr.f32.mxu0 0.0
        %1662 = vmatmul.mubr.f32.gmra.mxu0 %v1538
        %v1663 = vpop.f32.mrf.mxu0
        %v1664 = vadd.f32 0.0, %v1663
        %v1665 = vpop.f32.mrf.mxu0
        %v1666 = vadd.f32 0.0, %v1665
        %1667 = vmatprep.mubr.f32.mxu0 0.0
        %1668 = vmatmul.mubr.f32.gmra.mxu0 %v1541
        %v1669 = vpop.f32.mrf.mxu0
        %v1670 = vadd.f32 0.0, %v1669
        %v1671 = vpop.f32.mrf.mxu0
        %v1672 = vadd.f32 0.0, %v1671
        %1673 = vmatprep.mubr.f32.mxu0 0.0
        %1674 = vmatmul.mubr.f32.gmra.mxu0 %v1544
        %v1675 = vpop.f32.mrf.mxu0
        %v1676 = vadd.f32 0.0, %v1675
        %v1677 = vpop.f32.mrf.mxu0
        %v1678 = vadd.f32 0.0, %v1677
        %1679 = vmatprep.mubr.f32.mxu0 0.0
        %1680 = vmatmul.mubr.f32.gmra.mxu0 %v1547
        %v1681 = vpop.f32.mrf.mxu0
        %v1682 = vadd.f32 0.0, %v1681
        %v1683 = vpop.f32.mrf.mxu0
        %v1684 = vadd.f32 0.0, %v1683
        %1685 = vmatprep.mubr.f32.mxu0 0.0
        %1686 = vmatmul.mubr.f32.gmra.mxu0 %v1550
        %v1687 = vpop.f32.mrf.mxu0
        %v1688 = vadd.f32 0.0, %v1687
        %v1689 = vpop.f32.mrf.mxu0
        %v1690 = vadd.f32 0.0, %v1689
        %1691 = vmatprep.mubr.f32.mxu0 0.0
        %1692 = vmatmul.mubr.f32.gmra.mxu0 %v1553
        %v1693 = vpop.f32.mrf.mxu0
        %v1694 = vadd.f32 0.0, %v1693
        %v1695 = vpop.f32.mrf.mxu0
        %v1696 = vadd.f32 0.0, %v1695
        %1697 = vmatprep.mubr.f32.mxu0 0.0
        %1698 = vmatmul.mubr.f32.gmra.mxu0 %v1556
        %v1699 = vpop.f32.mrf.mxu0
        %v1700 = vadd.f32 0.0, %v1699
        %v1701 = vpop.f32.mrf.mxu0
        %v1702 = vadd.f32 0.0, %v1701
        %1703 = vmatprep.mubr.f32.mxu0 0.0
        %1704 = vmatmul.mubr.f32.gmra.mxu0 %v1559
        %v1705 = vpop.f32.mrf.mxu0
        %v1706 = vadd.f32 0.0, %v1705
        %v1707 = vpop.f32.mrf.mxu0
        %v1708 = vadd.f32 0.0, %v1707
        %1709 = vmatprep.mubr.f32.mxu0 0.0
        %1710 = vmatmul.mubr.f32.gmra.mxu0 %v1562
        %v1711 = vpop.f32.mrf.mxu0
        %v1712 = vadd.f32 0.0, %v1711
        %v1713 = vpop.f32.mrf.mxu0
        %v1714 = vadd.f32 0.0, %v1713
        %1715 = vmatprep.mubr.f32.mxu0 0.0
        %1716 = vmatmul.mubr.f32.gmra.mxu0 %v1565
        %v1717 = vpop.f32.mrf.mxu0
        %v1718 = vadd.f32 0.0, %v1717
        %v1719 = vpop.f32.mrf.mxu0
        %v1720 = vadd.f32 0.0, %v1719
        %1721 = vmatprep.mubr.f32.mxu0 0.0
        %1722 = vmatmul.mubr.f32.gmra.mxu0 %v1568
        %v1723 = vpop.f32.mrf.mxu0
        %v1724 = vadd.f32 0.0, %v1723
        %v1725 = vpop.f32.mrf.mxu0
        %v1726 = vadd.f32 0.0, %v1725
        %1727 = vmatprep.mubr.f32.mxu0 0.0
        %1728 = vmatmul.mubr.f32.gmra.mxu0 %v1571
        %v1729 = vpop.f32.mrf.mxu0
        %v1730 = vadd.f32 0.0, %v1729
        %v1731 = vpop.f32.mrf.mxu0
        %v1732 = vadd.f32 0.0, %v1731
        %1733 = vdwg.mxu0
        %v1734 = vmul.f32 %v1640, %v1303
        %v1735 = vmul.f32 %v1642, %v1304
        %v1736 = vmul.f32 %v1646, %v1305
        %v1737 = vmul.f32 %v1648, %v1306
        %v1738 = vmul.f32 %v1652, %v1307
        %v1739 = vmul.f32 %v1654, %v1308
        %v1740 = vmul.f32 %v1658, %v1309
        %v1741 = vmul.f32 %v1660, %v1310
        %v1742 = vmul.f32 %v1664, %v1311
        %v1743 = vmul.f32 %v1666, %v1312
        %v1744 = vmul.f32 %v1670, %v1313
        %v1745 = vmul.f32 %v1672, %v1314
        %v1746 = vmul.f32 %v1676, %v1315
        %v1747 = vmul.f32 %v1678, %v1316
        %v1748 = vmul.f32 %v1682, %v1317
        %v1749 = vmul.f32 %v1684, %v1318
        %v1750 = vmul.f32 %v1688, %v1319
        %v1751 = vmul.f32 %v1690, %v1320
        %v1752 = vmul.f32 %v1694, %v1321
        %v1753 = vmul.f32 %v1696, %v1322
        %v1754 = vmul.f32 %v1700, %v1323
        %v1755 = vmul.f32 %v1702, %v1324
        %v1756 = vmul.f32 %v1706, %v1325
        %v1757 = vmul.f32 %v1708, %v1326
        %v1758 = vmul.f32 %v1712, %v1327
        %v1759 = vmul.f32 %v1714, %v1328
        %v1760 = vmul.f32 %v1718, %v1329
        %v1761 = vmul.f32 %v1720, %v1330
        %v1762 = vmul.f32 %v1724, %v1331
        %v1763 = vmul.f32 %v1726, %v1332
        %v1764 = vmul.f32 %v1730, %v1333
        %v1765 = vmul.f32 %v1732, %v1334
        %v1766 = vld [vmem:[%s1269] sm:$0xff]
        %v1767 = vld [vmem:[%s1269 + $0x8] sm:$0xff]
        %v1768 = vld [vmem:[%s1269 + $0x10] sm:$0xff]
        %v1769 = vld [vmem:[%s1269 + $0x18] sm:$0xff]
        %v1770 = vld [vmem:[%s1269 + $0x20] sm:$0xff]
        %v1771 = vld [vmem:[%s1269 + $0x28] sm:$0xff]
        %v1772 = vld [vmem:[%s1269 + $0x30] sm:$0xff]
        %v1773 = vld [vmem:[%s1269 + $0x38] sm:$0xff]
        %v1774 = vld [vmem:[%s1269 + $0x40] sm:$0xff]
        %v1775 = vld [vmem:[%s1269 + $0x48] sm:$0xff]
        %v1776 = vld [vmem:[%s1269 + $0x50] sm:$0xff]
        %v1777 = vld [vmem:[%s1269 + $0x58] sm:$0xff]
        %v1778 = vld [vmem:[%s1269 + $0x60] sm:$0xff]
        %v1779 = vld [vmem:[%s1269 + $0x68] sm:$0xff]
        %v1780 = vld [vmem:[%s1269 + $0x70] sm:$0xff]
        %v1781 = vld [vmem:[%s1269 + $0x78] sm:$0xff]
        %vm1782 = vcmask 523264
        %v1784 = vsel %vm1782, %v1735, 0
        %v1787 = vsel %vm1782, %v1737, 0
        %v1790 = vsel %vm1782, %v1739, 0
        %v1793 = vsel %vm1782, %v1741, 0
        %v1796 = vsel %vm1782, %v1743, 0
        %v1799 = vsel %vm1782, %v1745, 0
        %v1802 = vsel %vm1782, %v1747, 0
        %v1805 = vsel %vm1782, %v1749, 0
        %v1808 = vsel %vm1782, %v1751, 0
        %v1811 = vsel %vm1782, %v1753, 0
        %v1814 = vsel %vm1782, %v1755, 0
        %v1817 = vsel %vm1782, %v1757, 0
        %v1820 = vsel %vm1782, %v1759, 0
        %v1823 = vsel %vm1782, %v1761, 0
        %v1826 = vsel %vm1782, %v1763, 0
        %v1829 = vsel %vm1782, %v1765, 0
        %1831 = vmatprep.subr.mxu0 0.0
        %1832 = vmatpush1.msra.mxu0 %v1350
        %1833 = vmatprep.subr.mxu0 0.0
        %1834 = vmatpush1.msra.mxu0 %v1349
        %1835 = vmatprep.subr.mxu0 0.0
        %1836 = vmatpush1.msra.mxu0 %v1348
        %1837 = vmatprep.subr.mxu0 0.0
        %1838 = vmatpush1.msra.mxu0 %v1347
        %1839 = vmatprep.subr.mxu0 0.0
        %1840 = vmatpush1.msra.mxu0 %v1346
        %1841 = vmatprep.subr.mxu0 0.0
        %1842 = vmatpush1.msra.mxu0 %v1345
        %1843 = vmatprep.subr.mxu0 0.0
        %1844 = vmatpush1.msra.mxu0 %v1344
        %1845 = vmatprep.subr.mxu0 0.0
        %1846 = vmatpush1.msra.mxu0 %v1343
        %1847 = vmatprep.subr.mxu0 0.0
        %1848 = vmatpush1.msra.mxu0 %v1342
        %1849 = vmatprep.subr.mxu0 0.0
        %1850 = vmatpush1.msra.mxu0 %v1341
        %1851 = vmatprep.subr.mxu0 0.0
        %1852 = vmatpush1.msra.mxu0 %v1340
        %1853 = vmatprep.subr.mxu0 0.0
        %1854 = vmatpush1.msra.mxu0 %v1339
        %1855 = vmatprep.subr.mxu0 0.0
        %1856 = vmatpush1.msra.mxu0 %v1338
        %1857 = vmatprep.subr.mxu0 0.0
        %1858 = vmatpush1.msra.mxu0 %v1337
        %1859 = vmatprep.subr.mxu0 0.0
        %1860 = vmatpush1.msra.mxu0 %v1336
        %1861 = vmatprep.subr.mxu0 0.0
        %1862 = vmatpush1.msra.mxu0 %v1335
        %1863 = vmatprep.subr.mxu0 0.0
        %1864 = vmatpush2.msra.mxu0 0.0
        %1865 = vmatprep.subr.mxu0 0.0
        %1866 = vmatpush2.msra.mxu0 0.0
        %1867 = vmatprep.subr.mxu0 0.0
        %1868 = vmatpush2.msra.mxu0 0.0
        %1869 = vmatprep.subr.mxu0 0.0
        %1870 = vmatpush2.msra.mxu0 0.0
        %1871 = vmatprep.subr.mxu0 0.0
        %1872 = vmatpush2.msra.mxu0 0.0
        %1873 = vmatprep.subr.mxu0 0.0
        %1874 = vmatpush2.msra.mxu0 0.0
        %1875 = vmatprep.subr.mxu0 0.0
        %1876 = vmatpush2.msra.mxu0 0.0
        %1877 = vmatprep.subr.mxu0 0.0
        %1878 = vmatpush2.msra.mxu0 0.0
        %1879 = vmatprep.subr.mxu0 0.0
        %1880 = vmatpush2.msra.mxu0 %v1358
        %1881 = vmatprep.subr.mxu0 0.0
        %1882 = vmatpush2.msra.mxu0 %v1357
        %1883 = vmatprep.subr.mxu0 0.0
        %1884 = vmatpush2.msra.mxu0 %v1356
        %1885 = vmatprep.subr.mxu0 0.0
        %1886 = vmatpush2.msra.mxu0 %v1355
        %1887 = vmatprep.subr.mxu0 0.0
        %1888 = vmatpush2.msra.mxu0 %v1354
        %1889 = vmatprep.subr.mxu0 0.0
        %1890 = vmatpush2.msra.mxu0 %v1353
        %1891 = vmatprep.subr.mxu0 0.0
        %1892 = vmatpush2.msra.mxu0 %v1352
        %1893 = vmatprep.subr.mxu0 0.0
        %1894 = vmatpush2.msra.mxu0 %v1351
        %1895 = vmatprep.mubr.f32.mxu0 %v1784
        %1896 = vmatmul.mubr.f32.gmra.mxu0 %v1734
        %v1897 = vpop.f32.mrf.mxu0
        %v1898 = vadd.f32 %v1766, %v1897
        %v1899 = vpop.f32.mrf.mxu0
        %1900 = vmatprep.mubr.f32.mxu0 %v1787
        %1901 = vmatmul.mubr.f32.gmra.mxu0 %v1736
        %v1902 = vpop.f32.mrf.mxu0
        %v1903 = vadd.f32 %v1767, %v1902
        %v1904 = vpop.f32.mrf.mxu0
        %1905 = vmatprep.mubr.f32.mxu0 %v1790
        %1906 = vmatmul.mubr.f32.gmra.mxu0 %v1738
        %v1907 = vpop.f32.mrf.mxu0
        %v1908 = vadd.f32 %v1768, %v1907
        %v1909 = vpop.f32.mrf.mxu0
        %1910 = vmatprep.mubr.f32.mxu0 %v1793
        %1911 = vmatmul.mubr.f32.gmra.mxu0 %v1740
        %v1912 = vpop.f32.mrf.mxu0
        %v1913 = vadd.f32 %v1769, %v1912
        %v1914 = vpop.f32.mrf.mxu0
        %1915 = vmatprep.mubr.f32.mxu0 %v1796
        %1916 = vmatmul.mubr.f32.gmra.mxu0 %v1742
        %v1917 = vpop.f32.mrf.mxu0
        %v1918 = vadd.f32 %v1770, %v1917
        %v1919 = vpop.f32.mrf.mxu0
        %1920 = vmatprep.mubr.f32.mxu0 %v1799
        %1921 = vmatmul.mubr.f32.gmra.mxu0 %v1744
        %v1922 = vpop.f32.mrf.mxu0
        %v1923 = vadd.f32 %v1771, %v1922
        %v1924 = vpop.f32.mrf.mxu0
        %1925 = vmatprep.mubr.f32.mxu0 %v1802
        %1926 = vmatmul.mubr.f32.gmra.mxu0 %v1746
        %v1927 = vpop.f32.mrf.mxu0
        %v1928 = vadd.f32 %v1772, %v1927
        %v1929 = vpop.f32.mrf.mxu0
        %1930 = vmatprep.mubr.f32.mxu0 %v1805
        %1931 = vmatmul.mubr.f32.gmra.mxu0 %v1748
        %v1932 = vpop.f32.mrf.mxu0
        %v1933 = vadd.f32 %v1773, %v1932
        %v1934 = vpop.f32.mrf.mxu0
        %1935 = vmatprep.mubr.f32.mxu0 %v1808
        %1936 = vmatmul.mubr.f32.gmra.mxu0 %v1750
        %v1937 = vpop.f32.mrf.mxu0
        %v1938 = vadd.f32 %v1774, %v1937
        %v1939 = vpop.f32.mrf.mxu0
        %1940 = vmatprep.mubr.f32.mxu0 %v1811
        %1941 = vmatmul.mubr.f32.gmra.mxu0 %v1752
        %v1942 = vpop.f32.mrf.mxu0
        %v1943 = vadd.f32 %v1775, %v1942
        %v1944 = vpop.f32.mrf.mxu0
        %1945 = vmatprep.mubr.f32.mxu0 %v1814
        %1946 = vmatmul.mubr.f32.gmra.mxu0 %v1754
        %v1947 = vpop.f32.mrf.mxu0
        %v1948 = vadd.f32 %v1776, %v1947
        %v1949 = vpop.f32.mrf.mxu0
        %1950 = vmatprep.mubr.f32.mxu0 %v1817
        %1951 = vmatmul.mubr.f32.gmra.mxu0 %v1756
        %v1952 = vpop.f32.mrf.mxu0
        %v1953 = vadd.f32 %v1777, %v1952
        %v1954 = vpop.f32.mrf.mxu0
        %1955 = vmatprep.mubr.f32.mxu0 %v1820
        %1956 = vmatmul.mubr.f32.gmra.mxu0 %v1758
        %v1957 = vpop.f32.mrf.mxu0
        %v1958 = vadd.f32 %v1778, %v1957
        %v1959 = vpop.f32.mrf.mxu0
        %1960 = vmatprep.mubr.f32.mxu0 %v1823
        %1961 = vmatmul.mubr.f32.gmra.mxu0 %v1760
        %v1962 = vpop.f32.mrf.mxu0
        %v1963 = vadd.f32 %v1779, %v1962
        %v1964 = vpop.f32.mrf.mxu0
        %1965 = vmatprep.mubr.f32.mxu0 %v1826
        %1966 = vmatmul.mubr.f32.gmra.mxu0 %v1762
        %v1967 = vpop.f32.mrf.mxu0
        %v1968 = vadd.f32 %v1780, %v1967
        %v1969 = vpop.f32.mrf.mxu0
        %1970 = vmatprep.mubr.f32.mxu0 %v1829
        %1971 = vmatmul.mubr.f32.gmra.mxu0 %v1764
        %v1972 = vpop.f32.mrf.mxu0
        %v1973 = vadd.f32 %v1781, %v1972
        %v1974 = vpop.f32.mrf.mxu0
        %1975 = vdwg.mxu0
        %v1976 = vmax.f32 %v1898, 0.0
        %v1977 = vmax.f32 %v1903, 0.0
        %v1978 = vmax.f32 %v1908, 0.0
        %v1979 = vmax.f32 %v1913, 0.0
        %v1980 = vmax.f32 %v1918, 0.0
        %v1981 = vmax.f32 %v1923, 0.0
        %v1982 = vmax.f32 %v1928, 0.0
        %v1983 = vmax.f32 %v1933, 0.0
        %v1984 = vmax.f32 %v1938, 0.0
        %v1985 = vmax.f32 %v1943, 0.0
        %v1986 = vmax.f32 %v1948, 0.0
        %v1987 = vmax.f32 %v1953, 0.0
        %v1988 = vmax.f32 %v1958, 0.0
        %v1989 = vmax.f32 %v1963, 0.0
        %v1990 = vmax.f32 %v1968, 0.0
        %v1991 = vmax.f32 %v1973, 0.0
        %1992 = vmatprep.subr.mxu0 0.0
        %1993 = vmatpush1.msra.mxu0 %v1991
        %1994 = vmatprep.subr.mxu0 0.0
        %1995 = vmatpush1.msra.mxu0 %v1990
        %1996 = vmatprep.subr.mxu0 0.0
        %1997 = vmatpush1.msra.mxu0 %v1989
        %1998 = vmatprep.subr.mxu0 0.0
        %1999 = vmatpush1.msra.mxu0 %v1988
        %2000 = vmatprep.subr.mxu0 0.0
        %2001 = vmatpush1.msra.mxu0 %v1987
        %2002 = vmatprep.subr.mxu0 0.0
        %2003 = vmatpush1.msra.mxu0 %v1986
        %2004 = vmatprep.subr.mxu0 0.0
        %2005 = vmatpush1.msra.mxu0 %v1985
        %2006 = vmatprep.subr.mxu0 0.0
        %2007 = vmatpush1.msra.mxu0 %v1984
        %2008 = vmatprep.subr.mxu0 0.0
        %2009 = vmatpush1.msra.mxu0 %v1983
        %2010 = vmatprep.subr.mxu0 0.0
        %2011 = vmatpush1.msra.mxu0 %v1982
        %2012 = vmatprep.subr.mxu0 0.0
        %2013 = vmatpush1.msra.mxu0 %v1981
        %2014 = vmatprep.subr.mxu0 0.0
        %2015 = vmatpush1.msra.mxu0 %v1980
        %2016 = vmatprep.subr.mxu0 0.0
        %2017 = vmatpush1.msra.mxu0 %v1979
        %2018 = vmatprep.subr.mxu0 0.0
        %2019 = vmatpush1.msra.mxu0 %v1978
        %2020 = vmatprep.subr.mxu0 0.0
        %2021 = vmatpush1.msra.mxu0 %v1977
        %2022 = vmatprep.subr.mxu0 0.0
        %2023 = vmatpush1.msra.mxu0 %v1976
        %2024 = vmatprep.subr.mxu0 0.0
        %2025 = vmatpush2.msra.mxu0 0.0
        %2026 = vmatprep.subr.mxu0 0.0
        %2027 = vmatpush2.msra.mxu0 0.0
        %2028 = vmatprep.subr.mxu0 0.0
        %2029 = vmatpush2.msra.mxu0 0.0
        %2030 = vmatprep.subr.mxu0 0.0
        %2031 = vmatpush2.msra.mxu0 0.0
        %2032 = vmatprep.subr.mxu0 0.0
        %2033 = vmatpush2.msra.mxu0 0.0
        %2034 = vmatprep.subr.mxu0 0.0
        %2035 = vmatpush2.msra.mxu0 0.0
        %2036 = vmatprep.subr.mxu0 0.0
        %2037 = vmatpush2.msra.mxu0 0.0
        %2038 = vmatprep.subr.mxu0 0.0
        %2039 = vmatpush2.msra.mxu0 0.0
        %2040 = vmatprep.subr.mxu0 0.0
        %2041 = vmatpush2.msra.mxu0 0.0
        %2042 = vmatprep.subr.mxu0 0.0
        %2043 = vmatpush2.msra.mxu0 0.0
        %2044 = vmatprep.subr.mxu0 0.0
        %2045 = vmatpush2.msra.mxu0 0.0
        %2046 = vmatprep.subr.mxu0 0.0
        %2047 = vmatpush2.msra.mxu0 0.0
        %2048 = vmatprep.subr.mxu0 0.0
        %2049 = vmatpush2.msra.mxu0 0.0
        %2050 = vmatprep.subr.mxu0 0.0
        %2051 = vmatpush2.msra.mxu0 0.0
        %2052 = vmatprep.subr.mxu0 0.0
        %2053 = vmatpush2.msra.mxu0 0.0
        %2054 = vmatprep.subr.mxu0 0.0
        %2055 = vmatpush2.msra.mxu0 0.0
        %2056 = vmatprep.mubr.f32.mxu0 0.0
        %2057 = vmatmul.mubr.f32.gmra.mxu0 %v1287
        %v2058 = vpop.f32.mrf.mxu0
        %v2059 = vadd.f32 0.0, %v2058
        %v2060 = vpop.f32.mrf.mxu0
        %2061 = vmatprep.mubr.f32.mxu0 0.0
        %2062 = vmatmul.mubr.f32.gmra.mxu0 %v1288
        %v2063 = vpop.f32.mrf.mxu0
        %v2064 = vadd.f32 0.0, %v2063
        %v2065 = vpop.f32.mrf.mxu0
        %2066 = vmatprep.mubr.f32.mxu0 0.0
        %2067 = vmatmul.mubr.f32.gmra.mxu0 %v1289
        %v2068 = vpop.f32.mrf.mxu0
        %v2069 = vadd.f32 0.0, %v2068
        %v2070 = vpop.f32.mrf.mxu0
        %2071 = vmatprep.mubr.f32.mxu0 0.0
        %2072 = vmatmul.mubr.f32.gmra.mxu0 %v1290
        %v2073 = vpop.f32.mrf.mxu0
        %v2074 = vadd.f32 0.0, %v2073
        %v2075 = vpop.f32.mrf.mxu0
        %2076 = vmatprep.mubr.f32.mxu0 0.0
        %2077 = vmatmul.mubr.f32.gmra.mxu0 %v1291
        %v2078 = vpop.f32.mrf.mxu0
        %v2079 = vadd.f32 0.0, %v2078
        %v2080 = vpop.f32.mrf.mxu0
        %2081 = vmatprep.mubr.f32.mxu0 0.0
        %2082 = vmatmul.mubr.f32.gmra.mxu0 %v1292
        %v2083 = vpop.f32.mrf.mxu0
        %v2084 = vadd.f32 0.0, %v2083
        %v2085 = vpop.f32.mrf.mxu0
        %2086 = vmatprep.mubr.f32.mxu0 0.0
        %2087 = vmatmul.mubr.f32.gmra.mxu0 %v1293
        %v2088 = vpop.f32.mrf.mxu0
        %v2089 = vadd.f32 0.0, %v2088
        %v2090 = vpop.f32.mrf.mxu0
        %2091 = vmatprep.mubr.f32.mxu0 0.0
        %2092 = vmatmul.mubr.f32.gmra.mxu0 %v1294
        %v2093 = vpop.f32.mrf.mxu0
        %v2094 = vadd.f32 0.0, %v2093
        %v2095 = vpop.f32.mrf.mxu0
        %2096 = vmatprep.mubr.f32.mxu0 0.0
        %2097 = vmatmul.mubr.f32.gmra.mxu0 %v1295
        %v2098 = vpop.f32.mrf.mxu0
        %v2099 = vadd.f32 0.0, %v2098
        %v2100 = vpop.f32.mrf.mxu0
        %2101 = vmatprep.mubr.f32.mxu0 0.0
        %2102 = vmatmul.mubr.f32.gmra.mxu0 %v1296
        %v2103 = vpop.f32.mrf.mxu0
        %v2104 = vadd.f32 0.0, %v2103
        %v2105 = vpop.f32.mrf.mxu0
        %2106 = vmatprep.mubr.f32.mxu0 0.0
        %2107 = vmatmul.mubr.f32.gmra.mxu0 %v1297
        %v2108 = vpop.f32.mrf.mxu0
        %v2109 = vadd.f32 0.0, %v2108
        %v2110 = vpop.f32.mrf.mxu0
        %2111 = vmatprep.mubr.f32.mxu0 0.0
        %2112 = vmatmul.mubr.f32.gmra.mxu0 %v1298
        %v2113 = vpop.f32.mrf.mxu0
        %v2114 = vadd.f32 0.0, %v2113
        %v2115 = vpop.f32.mrf.mxu0
        %2116 = vmatprep.mubr.f32.mxu0 0.0
        %2117 = vmatmul.mubr.f32.gmra.mxu0 %v1299
        %v2118 = vpop.f32.mrf.mxu0
        %v2119 = vadd.f32 0.0, %v2118
        %v2120 = vpop.f32.mrf.mxu0
        %2121 = vmatprep.mubr.f32.mxu0 0.0
        %2122 = vmatmul.mubr.f32.gmra.mxu0 %v1300
        %v2123 = vpop.f32.mrf.mxu0
        %v2124 = vadd.f32 0.0, %v2123
        %v2125 = vpop.f32.mrf.mxu0
        %2126 = vmatprep.mubr.f32.mxu0 0.0
        %2127 = vmatmul.mubr.f32.gmra.mxu0 %v1301
        %v2128 = vpop.f32.mrf.mxu0
        %v2129 = vadd.f32 0.0, %v2128
        %v2130 = vpop.f32.mrf.mxu0
        %2131 = vmatprep.mubr.f32.mxu0 0.0
        %2132 = vmatmul.mubr.f32.gmra.mxu0 %v1302
        %v2133 = vpop.f32.mrf.mxu0
        %v2134 = vadd.f32 0.0, %v2133
        %v2135 = vpop.f32.mrf.mxu0
        %2136 = vdwg.mxu0
        %v2137 = vld [vmem:[%s5] sm:$0xff]
        %v2138 = vld [vmem:[%s5 + $0x8] sm:$0xff]
        %v2139 = vld [vmem:[%s5 + $0x10] sm:$0xff]
        %v2140 = vld [vmem:[%s5 + $0x18] sm:$0xff]
        %v2141 = vld [vmem:[%s5 + $0x20] sm:$0xff]
        %v2142 = vld [vmem:[%s5 + $0x28] sm:$0xff]
        %v2143 = vld [vmem:[%s5 + $0x30] sm:$0xff]
        %v2144 = vld [vmem:[%s5 + $0x38] sm:$0xff]
        %vm2145 = vcmask 261120
        %v2147 = vsel %vm2145, %v2059, 0
        %v2150 = vsel %vm2145, %v2064, 0
        %v2153 = vsel %vm2145, %v2069, 0
        %v2156 = vsel %vm2145, %v2074, 0
        %v2159 = vsel %vm2145, %v2079, 0
        %v2162 = vsel %vm2145, %v2084, 0
        %v2165 = vsel %vm2145, %v2089, 0
        %v2168 = vsel %vm2145, %v2094, 0
        %v2171 = vsel %vm2145, %v2099, 0
        %v2174 = vsel %vm2145, %v2104, 0
        %v2177 = vsel %vm2145, %v2109, 0
        %v2180 = vsel %vm2145, %v2114, 0
        %v2183 = vsel %vm2145, %v2119, 0
        %v2186 = vsel %vm2145, %v2124, 0
        %v2189 = vsel %vm2145, %v2129, 0
        %v2192 = vsel %vm2145, %v2134, 0
        %2194 = vmatprep.subr.mxu0 0.0
        %2195 = vmatpush1.msra.mxu0 0.0
        %2196 = vmatprep.subr.mxu0 0.0
        %2197 = vmatpush1.msra.mxu0 0.0
        %2198 = vmatprep.subr.mxu0 0.0
        %2199 = vmatpush1.msra.mxu0 0.0
        %2200 = vmatprep.subr.mxu0 0.0
        %2201 = vmatpush1.msra.mxu0 0.0
        %2202 = vmatprep.subr.mxu0 0.0
        %2203 = vmatpush1.msra.mxu0 0.0
        %2204 = vmatprep.subr.mxu0 0.0
        %2205 = vmatpush1.msra.mxu0 0.0
        %2206 = vmatprep.subr.mxu0 0.0
        %2207 = vmatpush1.msra.mxu0 0.0
        %2208 = vmatprep.subr.mxu0 0.0
        %2209 = vmatpush1.msra.mxu0 0.0
        %2210 = vmatprep.subr.mxu0 0.0
        %2211 = vmatpush1.msra.mxu0 0.0
        %2212 = vmatprep.subr.mxu0 0.0
        %2213 = vmatpush1.msra.mxu0 0.0
        %2214 = vmatprep.subr.mxu0 0.0
        %2215 = vmatpush1.msra.mxu0 0.0
        %2216 = vmatprep.subr.mxu0 0.0
        %2217 = vmatpush1.msra.mxu0 0.0
        %2218 = vmatprep.subr.mxu0 %v2144
        %2219 = vmatpush1.msra.mxu0 %v2143
        %2220 = vmatprep.subr.mxu0 %v2142
        %2221 = vmatpush1.msra.mxu0 %v2141
        %2222 = vmatprep.subr.mxu0 %v2140
        %2223 = vmatpush1.msra.mxu0 %v2139
        %2224 = vmatprep.subr.mxu0 %v2138
        %2225 = vmatpush1.msra.mxu0 %v2137
        %2226 = vmatprep.subr.mxu0 0.0
        %2227 = vmatpush2.msra.mxu0 0.0
        %2228 = vmatprep.subr.mxu0 0.0
        %2229 = vmatpush2.msra.mxu0 0.0
        %2230 = vmatprep.subr.mxu0 0.0
        %2231 = vmatpush2.msra.mxu0 0.0
        %2232 = vmatprep.subr.mxu0 0.0
        %2233 = vmatpush2.msra.mxu0 0.0
        %2234 = vmatprep.subr.mxu0 0.0
        %2235 = vmatpush2.msra.mxu0 0.0
        %2236 = vmatprep.subr.mxu0 0.0
        %2237 = vmatpush2.msra.mxu0 0.0
        %2238 = vmatprep.subr.mxu0 0.0
        %2239 = vmatpush2.msra.mxu0 0.0
        %2240 = vmatprep.subr.mxu0 0.0
        %2241 = vmatpush2.msra.mxu0 0.0
        %2242 = vmatprep.subr.mxu0 0.0
        %2243 = vmatpush2.msra.mxu0 0.0
        %2244 = vmatprep.subr.mxu0 0.0
        %2245 = vmatpush2.msra.mxu0 0.0
        %2246 = vmatprep.subr.mxu0 0.0
        %2247 = vmatpush2.msra.mxu0 0.0
        %2248 = vmatprep.subr.mxu0 0.0
        %2249 = vmatpush2.msra.mxu0 0.0
        %2250 = vmatprep.subr.mxu0 0.0
        %2251 = vmatpush2.msra.mxu0 0.0
        %2252 = vmatprep.subr.mxu0 0.0
        %2253 = vmatpush2.msra.mxu0 0.0
        %2254 = vmatprep.subr.mxu0 0.0
        %2255 = vmatpush2.msra.mxu0 0.0
        %2256 = vmatprep.subr.mxu0 0.0
        %2257 = vmatpush2.msra.mxu0 0.0
        %2258 = vmatprep.mubr.f32.mxu0 0.0
        %2259 = vmatmul.mubr.f32.gmra.mxu0 %v2147
        %v2260 = vpop.f32.mrf.mxu0
        %v2261 = vadd.f32 0.0, %v2260
        %v2262 = vpop.f32.mrf.mxu0
        %v2263 = vadd.f32 0.0, %v2262
        %2264 = vmatprep.mubr.f32.mxu0 0.0
        %2265 = vmatmul.mubr.f32.gmra.mxu0 %v2150
        %v2266 = vpop.f32.mrf.mxu0
        %v2267 = vadd.f32 0.0, %v2266
        %v2268 = vpop.f32.mrf.mxu0
        %v2269 = vadd.f32 0.0, %v2268
        %2270 = vmatprep.mubr.f32.mxu0 0.0
        %2271 = vmatmul.mubr.f32.gmra.mxu0 %v2153
        %v2272 = vpop.f32.mrf.mxu0
        %v2273 = vadd.f32 0.0, %v2272
        %v2274 = vpop.f32.mrf.mxu0
        %v2275 = vadd.f32 0.0, %v2274
        %2276 = vmatprep.mubr.f32.mxu0 0.0
        %2277 = vmatmul.mubr.f32.gmra.mxu0 %v2156
        %v2278 = vpop.f32.mrf.mxu0
        %v2279 = vadd.f32 0.0, %v2278
        %v2280 = vpop.f32.mrf.mxu0
        %v2281 = vadd.f32 0.0, %v2280
        %2282 = vmatprep.mubr.f32.mxu0 0.0
        %2283 = vmatmul.mubr.f32.gmra.mxu0 %v2159
        %v2284 = vpop.f32.mrf.mxu0
        %v2285 = vadd.f32 0.0, %v2284
        %v2286 = vpop.f32.mrf.mxu0
        %v2287 = vadd.f32 0.0, %v2286
        %2288 = vmatprep.mubr.f32.mxu0 0.0
        %2289 = vmatmul.mubr.f32.gmra.mxu0 %v2162
        %v2290 = vpop.f32.mrf.mxu0
        %v2291 = vadd.f32 0.0, %v2290
        %v2292 = vpop.f32.mrf.mxu0
        %v2293 = vadd.f32 0.0, %v2292
        %2294 = vmatprep.mubr.f32.mxu0 0.0
        %2295 = vmatmul.mubr.f32.gmra.mxu0 %v2165
        %v2296 = vpop.f32.mrf.mxu0
        %v2297 = vadd.f32 0.0, %v2296
        %v2298 = vpop.f32.mrf.mxu0
        %v2299 = vadd.f32 0.0, %v2298
        %2300 = vmatprep.mubr.f32.mxu0 0.0
        %2301 = vmatmul.mubr.f32.gmra.mxu0 %v2168
        %v2302 = vpop.f32.mrf.mxu0
        %v2303 = vadd.f32 0.0, %v2302
        %v2304 = vpop.f32.mrf.mxu0
        %v2305 = vadd.f32 0.0, %v2304
        %2306 = vmatprep.mubr.f32.mxu0 0.0
        %2307 = vmatmul.mubr.f32.gmra.mxu0 %v2171
        %v2308 = vpop.f32.mrf.mxu0
        %v2309 = vadd.f32 0.0, %v2308
        %v2310 = vpop.f32.mrf.mxu0
        %v2311 = vadd.f32 0.0, %v2310
        %2312 = vmatprep.mubr.f32.mxu0 0.0
        %2313 = vmatmul.mubr.f32.gmra.mxu0 %v2174
        %v2314 = vpop.f32.mrf.mxu0
        %v2315 = vadd.f32 0.0, %v2314
        %v2316 = vpop.f32.mrf.mxu0
        %v2317 = vadd.f32 0.0, %v2316
        %2318 = vmatprep.mubr.f32.mxu0 0.0
        %2319 = vmatmul.mubr.f32.gmra.mxu0 %v2177
        %v2320 = vpop.f32.mrf.mxu0
        %v2321 = vadd.f32 0.0, %v2320
        %v2322 = vpop.f32.mrf.mxu0
        %v2323 = vadd.f32 0.0, %v2322
        %2324 = vmatprep.mubr.f32.mxu0 0.0
        %2325 = vmatmul.mubr.f32.gmra.mxu0 %v2180
        %v2326 = vpop.f32.mrf.mxu0
        %v2327 = vadd.f32 0.0, %v2326
        %v2328 = vpop.f32.mrf.mxu0
        %v2329 = vadd.f32 0.0, %v2328
        %2330 = vmatprep.mubr.f32.mxu0 0.0
        %2331 = vmatmul.mubr.f32.gmra.mxu0 %v2183
        %v2332 = vpop.f32.mrf.mxu0
        %v2333 = vadd.f32 0.0, %v2332
        %v2334 = vpop.f32.mrf.mxu0
        %v2335 = vadd.f32 0.0, %v2334
        %2336 = vmatprep.mubr.f32.mxu0 0.0
        %2337 = vmatmul.mubr.f32.gmra.mxu0 %v2186
        %v2338 = vpop.f32.mrf.mxu0
        %v2339 = vadd.f32 0.0, %v2338
        %v2340 = vpop.f32.mrf.mxu0
        %v2341 = vadd.f32 0.0, %v2340
        %2342 = vmatprep.mubr.f32.mxu0 0.0
        %2343 = vmatmul.mubr.f32.gmra.mxu0 %v2189
        %v2344 = vpop.f32.mrf.mxu0
        %v2345 = vadd.f32 0.0, %v2344
        %v2346 = vpop.f32.mrf.mxu0
        %v2347 = vadd.f32 0.0, %v2346
        %2348 = vmatprep.mubr.f32.mxu0 0.0
        %2349 = vmatmul.mubr.f32.gmra.mxu0 %v2192
        %v2350 = vpop.f32.mrf.mxu0
        %v2351 = vadd.f32 0.0, %v2350
        %v2352 = vpop.f32.mrf.mxu0
        %v2353 = vadd.f32 0.0, %v2352
        %2354 = vdwg.mxu0
        %v2355 = vmul.f32 %v2261, %v1303
        %v2356 = vmul.f32 %v2263, %v1304
        %v2357 = vmul.f32 %v2267, %v1305
        %v2358 = vmul.f32 %v2269, %v1306
        %v2359 = vmul.f32 %v2273, %v1307
        %v2360 = vmul.f32 %v2275, %v1308
        %v2361 = vmul.f32 %v2279, %v1309
        %v2362 = vmul.f32 %v2281, %v1310
        %v2363 = vmul.f32 %v2285, %v1311
        %v2364 = vmul.f32 %v2287, %v1312
        %v2365 = vmul.f32 %v2291, %v1313
        %v2366 = vmul.f32 %v2293, %v1314
        %v2367 = vmul.f32 %v2297, %v1315
        %v2368 = vmul.f32 %v2299, %v1316
        %v2369 = vmul.f32 %v2303, %v1317
        %v2370 = vmul.f32 %v2305, %v1318
        %v2371 = vmul.f32 %v2309, %v1319
        %v2372 = vmul.f32 %v2311, %v1320
        %v2373 = vmul.f32 %v2315, %v1321
        %v2374 = vmul.f32 %v2317, %v1322
        %v2375 = vmul.f32 %v2321, %v1323
        %v2376 = vmul.f32 %v2323, %v1324
        %v2377 = vmul.f32 %v2327, %v1325
        %v2378 = vmul.f32 %v2329, %v1326
        %v2379 = vmul.f32 %v2333, %v1327
        %v2380 = vmul.f32 %v2335, %v1328
        %v2381 = vmul.f32 %v2339, %v1329
        %v2382 = vmul.f32 %v2341, %v1330
        %v2383 = vmul.f32 %v2345, %v1331
        %v2384 = vmul.f32 %v2347, %v1332
        %v2385 = vmul.f32 %v2351, %v1333
        %v2386 = vmul.f32 %v2353, %v1334
        %v2387 = vld [vmem:[%s1275] sm:$0xff]
        %v2388 = vld [vmem:[%s1275 + $0x8] sm:$0xff]
        %v2389 = vld [vmem:[%s1275 + $0x10] sm:$0xff]
        %v2390 = vld [vmem:[%s1275 + $0x18] sm:$0xff]
        %v2391 = vld [vmem:[%s1275 + $0x20] sm:$0xff]
        %v2392 = vld [vmem:[%s1275 + $0x28] sm:$0xff]
        %v2393 = vld [vmem:[%s1275 + $0x30] sm:$0xff]
        %v2394 = vld [vmem:[%s1275 + $0x38] sm:$0xff]
        %v2395 = vld [vmem:[%s1275 + $0x40] sm:$0xff]
        %v2396 = vld [vmem:[%s1275 + $0x48] sm:$0xff]
        %v2397 = vld [vmem:[%s1275 + $0x50] sm:$0xff]
        %v2398 = vld [vmem:[%s1275 + $0x58] sm:$0xff]
        %v2399 = vld [vmem:[%s1275 + $0x60] sm:$0xff]
        %v2400 = vld [vmem:[%s1275 + $0x68] sm:$0xff]
        %v2401 = vld [vmem:[%s1275 + $0x70] sm:$0xff]
        %v2402 = vld [vmem:[%s1275 + $0x78] sm:$0xff]
        %v2404 = vsel %vm1782, %v2356, 0
        %v2407 = vsel %vm1782, %v2358, 0
        %v2410 = vsel %vm1782, %v2360, 0
        %v2413 = vsel %vm1782, %v2362, 0
        %v2416 = vsel %vm1782, %v2364, 0
        %v2419 = vsel %vm1782, %v2366, 0
        %v2422 = vsel %vm1782, %v2368, 0
        %v2425 = vsel %vm1782, %v2370, 0
        %v2428 = vsel %vm1782, %v2372, 0
        %v2431 = vsel %vm1782, %v2374, 0
        %v2434 = vsel %vm1782, %v2376, 0
        %v2437 = vsel %vm1782, %v2378, 0
        %v2440 = vsel %vm1782, %v2380, 0
        %v2443 = vsel %vm1782, %v2382, 0
        %v2446 = vsel %vm1782, %v2384, 0
        %v2449 = vsel %vm1782, %v2386, 0
        %2451 = vmatprep.subr.mxu0 0.0
        %2452 = vmatpush1.msra.mxu0 %v1350
        %2453 = vmatprep.subr.mxu0 0.0
        %2454 = vmatpush1.msra.mxu0 %v1349
        %2455 = vmatprep.subr.mxu0 0.0
        %2456 = vmatpush1.msra.mxu0 %v1348
        %2457 = vmatprep.subr.mxu0 0.0
        %2458 = vmatpush1.msra.mxu0 %v1347
        %2459 = vmatprep.subr.mxu0 0.0
        %2460 = vmatpush1.msra.mxu0 %v1346
        %2461 = vmatprep.subr.mxu0 0.0
        %2462 = vmatpush1.msra.mxu0 %v1345
        %2463 = vmatprep.subr.mxu0 0.0
        %2464 = vmatpush1.msra.mxu0 %v1344
        %2465 = vmatprep.subr.mxu0 0.0
        %2466 = vmatpush1.msra.mxu0 %v1343
        %2467 = vmatprep.subr.mxu0 0.0
        %2468 = vmatpush1.msra.mxu0 %v1342
        %2469 = vmatprep.subr.mxu0 0.0
        %2470 = vmatpush1.msra.mxu0 %v1341
        %2471 = vmatprep.subr.mxu0 0.0
        %2472 = vmatpush1.msra.mxu0 %v1340
        %2473 = vmatprep.subr.mxu0 0.0
        %2474 = vmatpush1.msra.mxu0 %v1339
        %2475 = vmatprep.subr.mxu0 0.0
        %2476 = vmatpush1.msra.mxu0 %v1338
        %2477 = vmatprep.subr.mxu0 0.0
        %2478 = vmatpush1.msra.mxu0 %v1337
        %2479 = vmatprep.subr.mxu0 0.0
        %2480 = vmatpush1.msra.mxu0 %v1336
        %2481 = vmatprep.subr.mxu0 0.0
        %2482 = vmatpush1.msra.mxu0 %v1335
        %2483 = vmatprep.subr.mxu0 0.0
        %2484 = vmatpush2.msra.mxu0 0.0
        %2485 = vmatprep.subr.mxu0 0.0
        %2486 = vmatpush2.msra.mxu0 0.0
        %2487 = vmatprep.subr.mxu0 0.0
        %2488 = vmatpush2.msra.mxu0 0.0
        %2489 = vmatprep.subr.mxu0 0.0
        %2490 = vmatpush2.msra.mxu0 0.0
        %2491 = vmatprep.subr.mxu0 0.0
        %2492 = vmatpush2.msra.mxu0 0.0
        %2493 = vmatprep.subr.mxu0 0.0
        %2494 = vmatpush2.msra.mxu0 0.0
        %2495 = vmatprep.subr.mxu0 0.0
        %2496 = vmatpush2.msra.mxu0 0.0
        %2497 = vmatprep.subr.mxu0 0.0
        %2498 = vmatpush2.msra.mxu0 0.0
        %2499 = vmatprep.subr.mxu0 0.0
        %2500 = vmatpush2.msra.mxu0 %v1358
        %2501 = vmatprep.subr.mxu0 0.0
        %2502 = vmatpush2.msra.mxu0 %v1357
        %2503 = vmatprep.subr.mxu0 0.0
        %2504 = vmatpush2.msra.mxu0 %v1356
        %2505 = vmatprep.subr.mxu0 0.0
        %2506 = vmatpush2.msra.mxu0 %v1355
        %2507 = vmatprep.subr.mxu0 0.0
        %2508 = vmatpush2.msra.mxu0 %v1354
        %2509 = vmatprep.subr.mxu0 0.0
        %2510 = vmatpush2.msra.mxu0 %v1353
        %2511 = vmatprep.subr.mxu0 0.0
        %2512 = vmatpush2.msra.mxu0 %v1352
        %2513 = vmatprep.subr.mxu0 0.0
        %2514 = vmatpush2.msra.mxu0 %v1351
        %2515 = vmatprep.mubr.f32.mxu0 %v2404
        %2516 = vmatmul.mubr.f32.gmra.mxu0 %v2355
        %v2517 = vpop.f32.mrf.mxu0
        %v2518 = vadd.f32 %v2387, %v2517
        %v2519 = vpop.f32.mrf.mxu0
        %2520 = vmatprep.mubr.f32.mxu0 %v2407
        %2521 = vmatmul.mubr.f32.gmra.mxu0 %v2357
        %v2522 = vpop.f32.mrf.mxu0
        %v2523 = vadd.f32 %v2388, %v2522
        %v2524 = vpop.f32.mrf.mxu0
        %2525 = vmatprep.mubr.f32.mxu0 %v2410
        %2526 = vmatmul.mubr.f32.gmra.mxu0 %v2359
        %v2527 = vpop.f32.mrf.mxu0
        %v2528 = vadd.f32 %v2389, %v2527
        %v2529 = vpop.f32.mrf.mxu0
        %2530 = vmatprep.mubr.f32.mxu0 %v2413
        %2531 = vmatmul.mubr.f32.gmra.mxu0 %v2361
        %v2532 = vpop.f32.mrf.mxu0
        %v2533 = vadd.f32 %v2390, %v2532
        %v2534 = vpop.f32.mrf.mxu0
        %2535 = vmatprep.mubr.f32.mxu0 %v2416
        %2536 = vmatmul.mubr.f32.gmra.mxu0 %v2363
        %v2537 = vpop.f32.mrf.mxu0
        %v2538 = vadd.f32 %v2391, %v2537
        %v2539 = vpop.f32.mrf.mxu0
        %2540 = vmatprep.mubr.f32.mxu0 %v2419
        %2541 = vmatmul.mubr.f32.gmra.mxu0 %v2365
        %v2542 = vpop.f32.mrf.mxu0
        %v2543 = vadd.f32 %v2392, %v2542
        %v2544 = vpop.f32.mrf.mxu0
        %2545 = vmatprep.mubr.f32.mxu0 %v2422
        %2546 = vmatmul.mubr.f32.gmra.mxu0 %v2367
        %v2547 = vpop.f32.mrf.mxu0
        %v2548 = vadd.f32 %v2393, %v2547
        %v2549 = vpop.f32.mrf.mxu0
        %2550 = vmatprep.mubr.f32.mxu0 %v2425
        %2551 = vmatmul.mubr.f32.gmra.mxu0 %v2369
        %v2552 = vpop.f32.mrf.mxu0
        %v2553 = vadd.f32 %v2394, %v2552
        %v2554 = vpop.f32.mrf.mxu0
        %2555 = vmatprep.mubr.f32.mxu0 %v2428
        %2556 = vmatmul.mubr.f32.gmra.mxu0 %v2371
        %v2557 = vpop.f32.mrf.mxu0
        %v2558 = vadd.f32 %v2395, %v2557
        %v2559 = vpop.f32.mrf.mxu0
        %2560 = vmatprep.mubr.f32.mxu0 %v2431
        %2561 = vmatmul.mubr.f32.gmra.mxu0 %v2373
        %v2562 = vpop.f32.mrf.mxu0
        %v2563 = vadd.f32 %v2396, %v2562
        %v2564 = vpop.f32.mrf.mxu0
        %2565 = vmatprep.mubr.f32.mxu0 %v2434
        %2566 = vmatmul.mubr.f32.gmra.mxu0 %v2375
        %v2567 = vpop.f32.mrf.mxu0
        %v2568 = vadd.f32 %v2397, %v2567
        %v2569 = vpop.f32.mrf.mxu0
        %2570 = vmatprep.mubr.f32.mxu0 %v2437
        %2571 = vmatmul.mubr.f32.gmra.mxu0 %v2377
        %v2572 = vpop.f32.mrf.mxu0
        %v2573 = vadd.f32 %v2398, %v2572
        %v2574 = vpop.f32.mrf.mxu0
        %2575 = vmatprep.mubr.f32.mxu0 %v2440
        %2576 = vmatmul.mubr.f32.gmra.mxu0 %v2379
        %v2577 = vpop.f32.mrf.mxu0
        %v2578 = vadd.f32 %v2399, %v2577
        %v2579 = vpop.f32.mrf.mxu0
        %2580 = vmatprep.mubr.f32.mxu0 %v2443
        %2581 = vmatmul.mubr.f32.gmra.mxu0 %v2381
        %v2582 = vpop.f32.mrf.mxu0
        %v2583 = vadd.f32 %v2400, %v2582
        %v2584 = vpop.f32.mrf.mxu0
        %2585 = vmatprep.mubr.f32.mxu0 %v2446
        %2586 = vmatmul.mubr.f32.gmra.mxu0 %v2383
        %v2587 = vpop.f32.mrf.mxu0
        %v2588 = vadd.f32 %v2401, %v2587
        %v2589 = vpop.f32.mrf.mxu0
        %2590 = vmatprep.mubr.f32.mxu0 %v2449
        %2591 = vmatmul.mubr.f32.gmra.mxu0 %v2385
        %v2592 = vpop.f32.mrf.mxu0
        %v2593 = vadd.f32 %v2402, %v2592
        %v2594 = vpop.f32.mrf.mxu0
        %2595 = vdwg.mxu0
        %v2596 = vmax.f32 %v2518, 0.0
        %v2597 = vmax.f32 %v2523, 0.0
        %v2598 = vmax.f32 %v2528, 0.0
        %v2599 = vmax.f32 %v2533, 0.0
        %v2600 = vmax.f32 %v2538, 0.0
        %v2601 = vmax.f32 %v2543, 0.0
        %v2602 = vmax.f32 %v2548, 0.0
        %v2603 = vmax.f32 %v2553, 0.0
        %v2604 = vmax.f32 %v2558, 0.0
        %v2605 = vmax.f32 %v2563, 0.0
        %v2606 = vmax.f32 %v2568, 0.0
        %v2607 = vmax.f32 %v2573, 0.0
        %v2608 = vmax.f32 %v2578, 0.0
        %v2609 = vmax.f32 %v2583, 0.0
        %v2610 = vmax.f32 %v2588, 0.0
        %v2611 = vmax.f32 %v2593, 0.0
        %v2612 = vld [vmem:[%s8] sm:$0xff]
        %v2613 = vld [vmem:[%s8 + $0x8] sm:$0xff]
        %v2614 = vld [vmem:[%s8 + $0x10] sm:$0xff]
        %v2615 = vld [vmem:[%s8 + $0x18] sm:$0xff]
        %v2616 = vld [vmem:[%s9] sm:$0x1]
        %v2618 = vlaneseq
        %v2619 = vshrl.u32 %v2618, 7
        %v2620 = vsub.s32 0, %v2619
        %v2621 = vrot.slane %v2616, %v2620
        %v2624 = vsel %vm2145, %v2596, 0
        %v2627 = vsel %vm2145, %v2597, 0
        %v2630 = vsel %vm2145, %v2598, 0
        %v2633 = vsel %vm2145, %v2599, 0
        %v2636 = vsel %vm2145, %v2600, 0
        %v2639 = vsel %vm2145, %v2601, 0
        %v2642 = vsel %vm2145, %v2602, 0
        %v2645 = vsel %vm2145, %v2603, 0
        %v2648 = vsel %vm2145, %v2604, 0
        %v2651 = vsel %vm2145, %v2605, 0
        %v2654 = vsel %vm2145, %v2606, 0
        %v2657 = vsel %vm2145, %v2607, 0
        %v2660 = vsel %vm2145, %v2608, 0
        %v2663 = vsel %vm2145, %v2609, 0
        %v2666 = vsel %vm2145, %v2610, 0
        %v2669 = vsel %vm2145, %v2611, 0
        %2671 = vmatprep.subr.mxu0 0.0
        %2672 = vmatpush1.msra.mxu0 0.0
        %2673 = vmatprep.subr.mxu0 0.0
        %2674 = vmatpush1.msra.mxu0 0.0
        %2675 = vmatprep.subr.mxu0 0.0
        %2676 = vmatpush1.msra.mxu0 0.0
        %2677 = vmatprep.subr.mxu0 0.0
        %2678 = vmatpush1.msra.mxu0 0.0
        %2679 = vmatprep.subr.mxu0 0.0
        %2680 = vmatpush1.msra.mxu0 0.0
        %2681 = vmatprep.subr.mxu0 0.0
        %2682 = vmatpush1.msra.mxu0 0.0
        %2683 = vmatprep.subr.mxu0 0.0
        %2684 = vmatpush1.msra.mxu0 0.0
        %2685 = vmatprep.subr.mxu0 0.0
        %2686 = vmatpush1.msra.mxu0 0.0
        %2687 = vmatprep.subr.mxu0 0.0
        %2688 = vmatpush1.msra.mxu0 0.0
        %2689 = vmatprep.subr.mxu0 0.0
        %2690 = vmatpush1.msra.mxu0 0.0
        %2691 = vmatprep.subr.mxu0 0.0
        %2692 = vmatpush1.msra.mxu0 0.0
        %2693 = vmatprep.subr.mxu0 0.0
        %2694 = vmatpush1.msra.mxu0 0.0
        %2695 = vmatprep.subr.mxu0 0.0
        %2696 = vmatpush1.msra.mxu0 %v2615
        %2697 = vmatprep.subr.mxu0 0.0
        %2698 = vmatpush1.msra.mxu0 %v2614
        %2699 = vmatprep.subr.mxu0 0.0
        %2700 = vmatpush1.msra.mxu0 %v2613
        %2701 = vmatprep.subr.mxu0 0.0
        %2702 = vmatpush1.msra.mxu0 %v2612
        %2703 = vmatprep.subr.mxu0 0.0
        %2704 = vmatpush2.msra.mxu0 0.0
        %2705 = vmatprep.subr.mxu0 0.0
        %2706 = vmatpush2.msra.mxu0 0.0
        %2707 = vmatprep.subr.mxu0 0.0
        %2708 = vmatpush2.msra.mxu0 0.0
        %2709 = vmatprep.subr.mxu0 0.0
        %2710 = vmatpush2.msra.mxu0 0.0
        %2711 = vmatprep.subr.mxu0 0.0
        %2712 = vmatpush2.msra.mxu0 0.0
        %2713 = vmatprep.subr.mxu0 0.0
        %2714 = vmatpush2.msra.mxu0 0.0
        %2715 = vmatprep.subr.mxu0 0.0
        %2716 = vmatpush2.msra.mxu0 0.0
        %2717 = vmatprep.subr.mxu0 0.0
        %2718 = vmatpush2.msra.mxu0 0.0
        %2719 = vmatprep.subr.mxu0 0.0
        %2720 = vmatpush2.msra.mxu0 0.0
        %2721 = vmatprep.subr.mxu0 0.0
        %2722 = vmatpush2.msra.mxu0 0.0
        %2723 = vmatprep.subr.mxu0 0.0
        %2724 = vmatpush2.msra.mxu0 0.0
        %2725 = vmatprep.subr.mxu0 0.0
        %2726 = vmatpush2.msra.mxu0 0.0
        %2727 = vmatprep.subr.mxu0 0.0
        %2728 = vmatpush2.msra.mxu0 0.0
        %2729 = vmatprep.subr.mxu0 0.0
        %2730 = vmatpush2.msra.mxu0 0.0
        %2731 = vmatprep.subr.mxu0 0.0
        %2732 = vmatpush2.msra.mxu0 0.0
        %2733 = vmatprep.subr.mxu0 0.0
        %2734 = vmatpush2.msra.mxu0 0.0
        %2735 = vmatprep.mubr.f32.mxu0 0.0
        %2736 = vmatmul.mubr.f32.gmra.mxu0 %v2624
        %v2737 = vpop.f32.mrf.mxu0
        %v2738 = vadd.f32 %v2621, %v2737
        %v2739 = vpop.f32.mrf.mxu0
        %2740 = vmatprep.mubr.f32.mxu0 0.0
        %2741 = vmatmul.mubr.f32.gmra.mxu0 %v2627
        %v2742 = vpop.f32.mrf.mxu0
        %v2743 = vadd.f32 %v2621, %v2742
        %v2744 = vpop.f32.mrf.mxu0
        %2745 = vmatprep.mubr.f32.mxu0 0.0
        %2746 = vmatmul.mubr.f32.gmra.mxu0 %v2630
        %v2747 = vpop.f32.mrf.mxu0
        %v2748 = vadd.f32 %v2621, %v2747
        %v2749 = vpop.f32.mrf.mxu0
        %2750 = vmatprep.mubr.f32.mxu0 0.0
        %2751 = vmatmul.mubr.f32.gmra.mxu0 %v2633
        %v2752 = vpop.f32.mrf.mxu0
        %v2753 = vadd.f32 %v2621, %v2752
        %v2754 = vpop.f32.mrf.mxu0
        %2755 = vmatprep.mubr.f32.mxu0 0.0
        %2756 = vmatmul.mubr.f32.gmra.mxu0 %v2636
        %v2757 = vpop.f32.mrf.mxu0
        %v2758 = vadd.f32 %v2621, %v2757
        %v2759 = vpop.f32.mrf.mxu0
        %2760 = vmatprep.mubr.f32.mxu0 0.0
        %2761 = vmatmul.mubr.f32.gmra.mxu0 %v2639
        %v2762 = vpop.f32.mrf.mxu0
        %v2763 = vadd.f32 %v2621, %v2762
        %v2764 = vpop.f32.mrf.mxu0
        %2765 = vmatprep.mubr.f32.mxu0 0.0
        %2766 = vmatmul.mubr.f32.gmra.mxu0 %v2642
        %v2767 = vpop.f32.mrf.mxu0
        %v2768 = vadd.f32 %v2621, %v2767
        %v2769 = vpop.f32.mrf.mxu0
        %2770 = vmatprep.mubr.f32.mxu0 0.0
        %2771 = vmatmul.mubr.f32.gmra.mxu0 %v2645
        %v2772 = vpop.f32.mrf.mxu0
        %v2773 = vadd.f32 %v2621, %v2772
        %v2774 = vpop.f32.mrf.mxu0
        %2775 = vmatprep.mubr.f32.mxu0 0.0
        %2776 = vmatmul.mubr.f32.gmra.mxu0 %v2648
        %v2777 = vpop.f32.mrf.mxu0
        %v2778 = vadd.f32 %v2621, %v2777
        %v2779 = vpop.f32.mrf.mxu0
        %2780 = vmatprep.mubr.f32.mxu0 0.0
        %2781 = vmatmul.mubr.f32.gmra.mxu0 %v2651
        %v2782 = vpop.f32.mrf.mxu0
        %v2783 = vadd.f32 %v2621, %v2782
        %v2784 = vpop.f32.mrf.mxu0
        %2785 = vmatprep.mubr.f32.mxu0 0.0
        %2786 = vmatmul.mubr.f32.gmra.mxu0 %v2654
        %v2787 = vpop.f32.mrf.mxu0
        %v2788 = vadd.f32 %v2621, %v2787
        %v2789 = vpop.f32.mrf.mxu0
        %2790 = vmatprep.mubr.f32.mxu0 0.0
        %2791 = vmatmul.mubr.f32.gmra.mxu0 %v2657
        %v2792 = vpop.f32.mrf.mxu0
        %v2793 = vadd.f32 %v2621, %v2792
        %v2794 = vpop.f32.mrf.mxu0
        %2795 = vmatprep.mubr.f32.mxu0 0.0
        %2796 = vmatmul.mubr.f32.gmra.mxu0 %v2660
        %v2797 = vpop.f32.mrf.mxu0
        %v2798 = vadd.f32 %v2621, %v2797
        %v2799 = vpop.f32.mrf.mxu0
        %2800 = vmatprep.mubr.f32.mxu0 0.0
        %2801 = vmatmul.mubr.f32.gmra.mxu0 %v2663
        %v2802 = vpop.f32.mrf.mxu0
        %v2803 = vadd.f32 %v2621, %v2802
        %v2804 = vpop.f32.mrf.mxu0
        %2805 = vmatprep.mubr.f32.mxu0 0.0
        %2806 = vmatmul.mubr.f32.gmra.mxu0 %v2666
        %v2807 = vpop.f32.mrf.mxu0
        %v2808 = vadd.f32 %v2621, %v2807
        %v2809 = vpop.f32.mrf.mxu0
        %2810 = vmatprep.mubr.f32.mxu0 0.0
        %2811 = vmatmul.mubr.f32.gmra.mxu0 %v2669
        %v2812 = vpop.f32.mrf.mxu0
        %v2813 = vadd.f32 %v2621, %v2812
        %v2814 = vpop.f32.mrf.mxu0
        %2815 = vdwg.mxu0
        %v2816 = vld [vmem:[%s1284] sm:$0xff]
        %2817 = vmatprep.subr.mxu0 0.0
        %2818 = vmatpush1.msra.mxu0 %v2813
        %2819 = vmatprep.subr.mxu0 0.0
        %2820 = vmatpush1.msra.mxu0 %v2808
        %2821 = vmatprep.subr.mxu0 0.0
        %2822 = vmatpush1.msra.mxu0 %v2803
        %2823 = vmatprep.subr.mxu0 0.0
        %2824 = vmatpush1.msra.mxu0 %v2798
        %2825 = vmatprep.subr.mxu0 0.0
        %2826 = vmatpush1.msra.mxu0 %v2793
        %2827 = vmatprep.subr.mxu0 0.0
        %2828 = vmatpush1.msra.mxu0 %v2788
        %2829 = vmatprep.subr.mxu0 0.0
        %2830 = vmatpush1.msra.mxu0 %v2783
        %2831 = vmatprep.subr.mxu0 0.0
        %2832 = vmatpush1.msra.mxu0 %v2778
        %2833 = vmatprep.subr.mxu0 0.0
        %2834 = vmatpush1.msra.mxu0 %v2773
        %2835 = vmatprep.subr.mxu0 0.0
        %2836 = vmatpush1.msra.mxu0 %v2768
        %2837 = vmatprep.subr.mxu0 0.0
        %2838 = vmatpush1.msra.mxu0 %v2763
        %2839 = vmatprep.subr.mxu0 0.0
        %2840 = vmatpush1.msra.mxu0 %v2758
        %2841 = vmatprep.subr.mxu0 0.0
        %2842 = vmatpush1.msra.mxu0 %v2753
        %2843 = vmatprep.subr.mxu0 0.0
        %2844 = vmatpush1.msra.mxu0 %v2748
        %2845 = vmatprep.subr.mxu0 0.0
        %2846 = vmatpush1.msra.mxu0 %v2743
        %2847 = vmatprep.subr.mxu0 0.0
        %2848 = vmatpush1.msra.mxu0 %v2738
        %2849 = vmatprep.subr.mxu0 0.0
        %2850 = vmatpush2.msra.mxu0 0.0
        %2851 = vmatprep.subr.mxu0 0.0
        %2852 = vmatpush2.msra.mxu0 0.0
        %2853 = vmatprep.subr.mxu0 0.0
        %2854 = vmatpush2.msra.mxu0 0.0
        %2855 = vmatprep.subr.mxu0 0.0
        %2856 = vmatpush2.msra.mxu0 0.0
        %2857 = vmatprep.subr.mxu0 0.0
        %2858 = vmatpush2.msra.mxu0 0.0
        %2859 = vmatprep.subr.mxu0 0.0
        %2860 = vmatpush2.msra.mxu0 0.0
        %2861 = vmatprep.subr.mxu0 0.0
        %2862 = vmatpush2.msra.mxu0 0.0
        %2863 = vmatprep.subr.mxu0 0.0
        %2864 = vmatpush2.msra.mxu0 0.0
        %2865 = vmatprep.subr.mxu0 0.0
        %2866 = vmatpush2.msra.mxu0 0.0
        %2867 = vmatprep.subr.mxu0 0.0
        %2868 = vmatpush2.msra.mxu0 0.0
        %2869 = vmatprep.subr.mxu0 0.0
        %2870 = vmatpush2.msra.mxu0 0.0
        %2871 = vmatprep.subr.mxu0 0.0
        %2872 = vmatpush2.msra.mxu0 0.0
        %2873 = vmatprep.subr.mxu0 0.0
        %2874 = vmatpush2.msra.mxu0 0.0
        %2875 = vmatprep.subr.mxu0 0.0
        %2876 = vmatpush2.msra.mxu0 0.0
        %2877 = vmatprep.subr.mxu0 0.0
        %2878 = vmatpush2.msra.mxu0 0.0
        %2879 = vmatprep.subr.mxu0 0.0
        %2880 = vmatpush2.msra.mxu0 0.0
        %2881 = vmatprep.mubr.f32.mxu0 0.0
        %2882 = vmatmul.mubr.f32.gmra.mxu0 %v2816
        %v2883 = vpop.f32.mrf.mxu0
        %v2884 = vadd.f32 0.0, %v2883
        %v2885 = vpop.f32.mrf.mxu0
        %2886 = vdwg.mxu0
        %v2887 = vld [vmem:[%s1173] sm:$0xff]
        %v2888 = vld [vmem:[%s1173 + $0x8] sm:$0xff]
        %v2889 = vld [vmem:[%s1173 + $0x10] sm:$0xff]
        %v2890 = vld [vmem:[%s1173 + $0x18] sm:$0xff]
        %v2891 = vld [vmem:[%s1173 + $0x20] sm:$0xff]
        %v2892 = vld [vmem:[%s1173 + $0x28] sm:$0xff]
        %v2893 = vld [vmem:[%s1173 + $0x30] sm:$0xff]
        %v2894 = vld [vmem:[%s1173 + $0x38] sm:$0xff]
        %v2895 = vld [vmem:[%s1173 + $0x40] sm:$0xff]
        %v2896 = vld [vmem:[%s1173 + $0x48] sm:$0xff]
        %v2897 = vld [vmem:[%s1173 + $0x50] sm:$0xff]
        %v2898 = vld [vmem:[%s1173 + $0x58] sm:$0xff]
        %v2899 = vld [vmem:[%s1173 + $0x60] sm:$0xff]
        %v2900 = vld [vmem:[%s1173 + $0x68] sm:$0xff]
        %v2901 = vld [vmem:[%s1173 + $0x70] sm:$0xff]
        %v2902 = vld [vmem:[%s1173 + $0x78] sm:$0xff]
        %v2903 = vld [vmem:[%s1173 + $0x80] sm:$0xff]
        %v2904 = vld [vmem:[%s1173 + $0x88] sm:$0xff]
        %v2905 = vld [vmem:[%s1173 + $0x90] sm:$0xff]
        %v2906 = vld [vmem:[%s1173 + $0x98] sm:$0xff]
        %v2907 = vld [vmem:[%s1173 + $0xa0] sm:$0xff]
        %v2908 = vld [vmem:[%s1173 + $0xa8] sm:$0xff]
        %v2909 = vld [vmem:[%s1173 + $0xb0] sm:$0xff]
        %v2910 = vld [vmem:[%s1173 + $0xb8] sm:$0xff]
        %v2911 = vld [vmem:[%s1173 + $0xc0] sm:$0xff]
        %v2912 = vld [vmem:[%s1173 + $0xc8] sm:$0xff]
        %v2913 = vld [vmem:[%s1173 + $0xd0] sm:$0xff]
        %v2914 = vld [vmem:[%s1173 + $0xd8] sm:$0xff]
        %v2915 = vld [vmem:[%s1173 + $0xe0] sm:$0xff]
        %v2916 = vld [vmem:[%s1173 + $0xe8] sm:$0xff]
        %v2917 = vld [vmem:[%s1173 + $0xf0] sm:$0xff]
        %v2918 = vld [vmem:[%s1173 + $0xf8] sm:$0xff]
        %v2919 = vld [vmem:[%s1173 + $0x100] sm:$0xff]
        %v2920 = vld [vmem:[%s1173 + $0x108] sm:$0xff]
        %v2921 = vld [vmem:[%s1173 + $0x110] sm:$0xff]
        %v2922 = vld [vmem:[%s1173 + $0x118] sm:$0xff]
        %v2923 = vld [vmem:[%s1173 + $0x120] sm:$0xff]
        %v2924 = vld [vmem:[%s1173 + $0x128] sm:$0xff]
        %v2925 = vld [vmem:[%s1173 + $0x130] sm:$0xff]
        %v2926 = vld [vmem:[%s1173 + $0x138] sm:$0xff]
        %v2927 = vld [vmem:[%s1173 + $0x140] sm:$0xff]
        %v2928 = vld [vmem:[%s1173 + $0x148] sm:$0xff]
        %v2929 = vld [vmem:[%s1173 + $0x150] sm:$0xff]
        %v2930 = vld [vmem:[%s1173 + $0x158] sm:$0xff]
        %v2931 = vld [vmem:[%s1173 + $0x160] sm:$0xff]
        %v2932 = vld [vmem:[%s1173 + $0x168] sm:$0xff]
        %v2933 = vld [vmem:[%s1173 + $0x170] sm:$0xff]
        %v2934 = vld [vmem:[%s1173 + $0x178] sm:$0xff]
        %v2935 = vld [vmem:[%s1173 + $0x180] sm:$0xff]
        %v2936 = vld [vmem:[%s1173 + $0x188] sm:$0xff]
        %v2937 = vld [vmem:[%s1173 + $0x190] sm:$0xff]
        %v2938 = vld [vmem:[%s1173 + $0x198] sm:$0xff]
        %v2939 = vld [vmem:[%s1173 + $0x1a0] sm:$0xff]
        %v2940 = vld [vmem:[%s1173 + $0x1a8] sm:$0xff]
        %v2941 = vld [vmem:[%s1173 + $0x1b0] sm:$0xff]
        %v2942 = vld [vmem:[%s1173 + $0x1b8] sm:$0xff]
        %v2943 = vld [vmem:[%s1173 + $0x1c0] sm:$0xff]
        %v2944 = vld [vmem:[%s1173 + $0x1c8] sm:$0xff]
        %v2945 = vld [vmem:[%s1173 + $0x1d0] sm:$0xff]
        %v2946 = vld [vmem:[%s1173 + $0x1d8] sm:$0xff]
        %v2947 = vld [vmem:[%s1173 + $0x1e0] sm:$0xff]
        %v2948 = vld [vmem:[%s1173 + $0x1e8] sm:$0xff]
        %v2949 = vld [vmem:[%s1173 + $0x1f0] sm:$0xff]
        %v2950 = vld [vmem:[%s1173 + $0x1f8] sm:$0xff]
        %v2951 = vld [vmem:[%s1173 + $0x200] sm:$0xff]
        %v2952 = vld [vmem:[%s1173 + $0x208] sm:$0xff]
        %v2953 = vld [vmem:[%s1173 + $0x210] sm:$0xff]
        %v2954 = vld [vmem:[%s1173 + $0x218] sm:$0xff]
        %v2955 = vld [vmem:[%s1173 + $0x220] sm:$0xff]
        %v2956 = vld [vmem:[%s1173 + $0x228] sm:$0xff]
        %v2957 = vld [vmem:[%s1173 + $0x230] sm:$0xff]
        %v2958 = vld [vmem:[%s1173 + $0x238] sm:$0xff]
        %v2959 = vld [vmem:[%s1173 + $0x240] sm:$0xff]
        %v2960 = vld [vmem:[%s1173 + $0x248] sm:$0xff]
        %v2961 = vld [vmem:[%s1173 + $0x250] sm:$0xff]
        %v2962 = vld [vmem:[%s1173 + $0x258] sm:$0xff]
        %v2963 = vld [vmem:[%s1173 + $0x260] sm:$0xff]
        %v2964 = vld [vmem:[%s1173 + $0x268] sm:$0xff]
        %v2965 = vld [vmem:[%s1173 + $0x270] sm:$0xff]
        %v2966 = vld [vmem:[%s1173 + $0x278] sm:$0xff]
        %v2967 = vld [vmem:[%s1173 + $0x280] sm:$0xff]
        %v2968 = vld [vmem:[%s1173 + $0x288] sm:$0xff]
        %v2969 = vld [vmem:[%s1173 + $0x290] sm:$0xff]
        %v2970 = vld [vmem:[%s1173 + $0x298] sm:$0xff]
        %v2971 = vld [vmem:[%s1173 + $0x2a0] sm:$0xff]
        %v2972 = vld [vmem:[%s1173 + $0x2a8] sm:$0xff]
        %v2973 = vld [vmem:[%s1173 + $0x2b0] sm:$0xff]
        %v2974 = vld [vmem:[%s1173 + $0x2b8] sm:$0xff]
        %v2975 = vld [vmem:[%s1173 + $0x2c0] sm:$0xff]
        %v2976 = vld [vmem:[%s1173 + $0x2c8] sm:$0xff]
        %v2977 = vld [vmem:[%s1173 + $0x2d0] sm:$0xff]
        %v2978 = vld [vmem:[%s1173 + $0x2d8] sm:$0xff]
        %v2979 = vld [vmem:[%s1173 + $0x2e0] sm:$0xff]
        %v2980 = vld [vmem:[%s1173 + $0x2e8] sm:$0xff]
        %v2981 = vld [vmem:[%s1173 + $0x2f0] sm:$0xff]
        %v2982 = vld [vmem:[%s1173 + $0x2f8] sm:$0xff]
        %v2983 = vld [vmem:[%s1173 + $0x300] sm:$0xff]
        %v2984 = vld [vmem:[%s1173 + $0x308] sm:$0xff]
        %v2985 = vld [vmem:[%s1173 + $0x310] sm:$0xff]
        %v2986 = vld [vmem:[%s1173 + $0x318] sm:$0xff]
        %v2987 = vld [vmem:[%s1173 + $0x320] sm:$0xff]
        %v2988 = vld [vmem:[%s1173 + $0x328] sm:$0xff]
        %v2989 = vld [vmem:[%s1173 + $0x330] sm:$0xff]
        %v2990 = vld [vmem:[%s1173 + $0x338] sm:$0xff]
        %v2991 = vld [vmem:[%s1173 + $0x340] sm:$0xff]
        %v2992 = vld [vmem:[%s1173 + $0x348] sm:$0xff]
        %v2993 = vld [vmem:[%s1173 + $0x350] sm:$0xff]
        %v2994 = vld [vmem:[%s1173 + $0x358] sm:$0xff]
        %v2995 = vld [vmem:[%s1173 + $0x360] sm:$0xff]
        %v2996 = vld [vmem:[%s1173 + $0x368] sm:$0xff]
        %v2997 = vld [vmem:[%s1173 + $0x370] sm:$0xff]
        %v2998 = vld [vmem:[%s1173 + $0x378] sm:$0xff]
        %v2999 = vld [vmem:[%s1173 + $0x380] sm:$0xff]
        %v3000 = vld [vmem:[%s1173 + $0x388] sm:$0xff]
        %v3001 = vld [vmem:[%s1173 + $0x390] sm:$0xff]
        %v3002 = vld [vmem:[%s1173 + $0x398] sm:$0xff]
        %v3003 = vld [vmem:[%s1173 + $0x3a0] sm:$0xff]
        %v3004 = vld [vmem:[%s1173 + $0x3a8] sm:$0xff]
        %v3005 = vld [vmem:[%s1173 + $0x3b0] sm:$0xff]
        %v3006 = vld [vmem:[%s1173 + $0x3b8] sm:$0xff]
        %v3007 = vld [vmem:[%s1173 + $0x3c0] sm:$0xff]
        %v3008 = vld [vmem:[%s1173 + $0x3c8] sm:$0xff]
        %v3009 = vld [vmem:[%s1173 + $0x3d0] sm:$0xff]
        %v3010 = vld [vmem:[%s1173 + $0x3d8] sm:$0xff]
        %v3011 = vld [vmem:[%s1173 + $0x3e0] sm:$0xff]
        %v3012 = vld [vmem:[%s1173 + $0x3e8] sm:$0xff]
        %v3013 = vld [vmem:[%s1173 + $0x3f0] sm:$0xff]
        %v3014 = vld [vmem:[%s1173 + $0x3f8] sm:$0xff]
        %3016 = vset.pattern.permute.xlu0 0
        %3017 = vperm.xlu0 %3016, %v2887
        %v3018 = vpop.permute.xlu0 %3017
        %3021 = vset.pattern.permute.xlu0 0
        %3022 = vperm.xlu0 %3021, %v2888
        %v3023 = vpop.permute.xlu0 %3022
        %3026 = vset.pattern.permute.xlu0 0
        %3027 = vperm.xlu0 %3026, %v2889
        %v3028 = vpop.permute.xlu0 %3027
        %3031 = vset.pattern.permute.xlu0 0
        %3032 = vperm.xlu0 %3031, %v2890
        %v3033 = vpop.permute.xlu0 %3032
        %3036 = vset.pattern.permute.xlu0 0
        %3037 = vperm.xlu0 %3036, %v2891
        %v3038 = vpop.permute.xlu0 %3037
        %3041 = vset.pattern.permute.xlu0 0
        %3042 = vperm.xlu0 %3041, %v2892
        %v3043 = vpop.permute.xlu0 %3042
        %3046 = vset.pattern.permute.xlu0 0
        %3047 = vperm.xlu0 %3046, %v2893
        %v3048 = vpop.permute.xlu0 %3047
        %3051 = vset.pattern.permute.xlu0 0
        %3052 = vperm.xlu0 %3051, %v2894
        %v3053 = vpop.permute.xlu0 %3052
        %3056 = vset.pattern.permute.xlu0 0
        %3057 = vperm.xlu0 %3056, %v2895
        %v3058 = vpop.permute.xlu0 %3057
        %3061 = vset.pattern.permute.xlu0 0
        %3062 = vperm.xlu0 %3061, %v2896
        %v3063 = vpop.permute.xlu0 %3062
        %3066 = vset.pattern.permute.xlu0 0
        %3067 = vperm.xlu0 %3066, %v2897
        %v3068 = vpop.permute.xlu0 %3067
        %3071 = vset.pattern.permute.xlu0 0
        %3072 = vperm.xlu0 %3071, %v2898
        %v3073 = vpop.permute.xlu0 %3072
        %3076 = vset.pattern.permute.xlu0 0
        %3077 = vperm.xlu0 %3076, %v2899
        %v3078 = vpop.permute.xlu0 %3077
        %3081 = vset.pattern.permute.xlu0 0
        %3082 = vperm.xlu0 %3081, %v2900
        %v3083 = vpop.permute.xlu0 %3082
        %3086 = vset.pattern.permute.xlu0 0
        %3087 = vperm.xlu0 %3086, %v2901
        %v3088 = vpop.permute.xlu0 %3087
        %3091 = vset.pattern.permute.xlu0 0
        %3092 = vperm.xlu0 %3091, %v2902
        %v3093 = vpop.permute.xlu0 %3092
        %3096 = vset.pattern.permute.xlu0 0
        %3097 = vperm.xlu0 %3096, %v2903
        %v3098 = vpop.permute.xlu0 %3097
        %3101 = vset.pattern.permute.xlu0 0
        %3102 = vperm.xlu0 %3101, %v2904
        %v3103 = vpop.permute.xlu0 %3102
        %3106 = vset.pattern.permute.xlu0 0
        %3107 = vperm.xlu0 %3106, %v2905
        %v3108 = vpop.permute.xlu0 %3107
        %3111 = vset.pattern.permute.xlu0 0
        %3112 = vperm.xlu0 %3111, %v2906
        %v3113 = vpop.permute.xlu0 %3112
        %3116 = vset.pattern.permute.xlu0 0
        %3117 = vperm.xlu0 %3116, %v2907
        %v3118 = vpop.permute.xlu0 %3117
        %3121 = vset.pattern.permute.xlu0 0
        %3122 = vperm.xlu0 %3121, %v2908
        %v3123 = vpop.permute.xlu0 %3122
        %3126 = vset.pattern.permute.xlu0 0
        %3127 = vperm.xlu0 %3126, %v2909
        %v3128 = vpop.permute.xlu0 %3127
        %3131 = vset.pattern.permute.xlu0 0
        %3132 = vperm.xlu0 %3131, %v2910
        %v3133 = vpop.permute.xlu0 %3132
        %3136 = vset.pattern.permute.xlu0 0
        %3137 = vperm.xlu0 %3136, %v2911
        %v3138 = vpop.permute.xlu0 %3137
        %3141 = vset.pattern.permute.xlu0 0
        %3142 = vperm.xlu0 %3141, %v2912
        %v3143 = vpop.permute.xlu0 %3142
        %3146 = vset.pattern.permute.xlu0 0
        %3147 = vperm.xlu0 %3146, %v2913
        %v3148 = vpop.permute.xlu0 %3147
        %3151 = vset.pattern.permute.xlu0 0
        %3152 = vperm.xlu0 %3151, %v2914
        %v3153 = vpop.permute.xlu0 %3152
        %3156 = vset.pattern.permute.xlu0 0
        %3157 = vperm.xlu0 %3156, %v2915
        %v3158 = vpop.permute.xlu0 %3157
        %3161 = vset.pattern.permute.xlu0 0
        %3162 = vperm.xlu0 %3161, %v2916
        %v3163 = vpop.permute.xlu0 %3162
        %3166 = vset.pattern.permute.xlu0 0
        %3167 = vperm.xlu0 %3166, %v2917
        %v3168 = vpop.permute.xlu0 %3167
        %3171 = vset.pattern.permute.xlu0 0
        %3172 = vperm.xlu0 %3171, %v2918
        %v3173 = vpop.permute.xlu0 %3172
        %3176 = vset.pattern.permute.xlu0 0
        %3177 = vperm.xlu0 %3176, %v2919
        %v3178 = vpop.permute.xlu0 %3177
        %3181 = vset.pattern.permute.xlu0 0
        %3182 = vperm.xlu0 %3181, %v2920
        %v3183 = vpop.permute.xlu0 %3182
        %3186 = vset.pattern.permute.xlu0 0
        %3187 = vperm.xlu0 %3186, %v2921
        %v3188 = vpop.permute.xlu0 %3187
        %3191 = vset.pattern.permute.xlu0 0
        %3192 = vperm.xlu0 %3191, %v2922
        %v3193 = vpop.permute.xlu0 %3192
        %3196 = vset.pattern.permute.xlu0 0
        %3197 = vperm.xlu0 %3196, %v2923
        %v3198 = vpop.permute.xlu0 %3197
        %3201 = vset.pattern.permute.xlu0 0
        %3202 = vperm.xlu0 %3201, %v2924
        %v3203 = vpop.permute.xlu0 %3202
        %3206 = vset.pattern.permute.xlu0 0
        %3207 = vperm.xlu0 %3206, %v2925
        %v3208 = vpop.permute.xlu0 %3207
        %3211 = vset.pattern.permute.xlu0 0
        %3212 = vperm.xlu0 %3211, %v2926
        %v3213 = vpop.permute.xlu0 %3212
        %3216 = vset.pattern.permute.xlu0 0
        %3217 = vperm.xlu0 %3216, %v2927
        %v3218 = vpop.permute.xlu0 %3217
        %3221 = vset.pattern.permute.xlu0 0
        %3222 = vperm.xlu0 %3221, %v2928
        %v3223 = vpop.permute.xlu0 %3222
        %3226 = vset.pattern.permute.xlu0 0
        %3227 = vperm.xlu0 %3226, %v2929
        %v3228 = vpop.permute.xlu0 %3227
        %3231 = vset.pattern.permute.xlu0 0
        %3232 = vperm.xlu0 %3231, %v2930
        %v3233 = vpop.permute.xlu0 %3232
        %3236 = vset.pattern.permute.xlu0 0
        %3237 = vperm.xlu0 %3236, %v2931
        %v3238 = vpop.permute.xlu0 %3237
        %3241 = vset.pattern.permute.xlu0 0
        %3242 = vperm.xlu0 %3241, %v2932
        %v3243 = vpop.permute.xlu0 %3242
        %3246 = vset.pattern.permute.xlu0 0
        %3247 = vperm.xlu0 %3246, %v2933
        %v3248 = vpop.permute.xlu0 %3247
        %3251 = vset.pattern.permute.xlu0 0
        %3252 = vperm.xlu0 %3251, %v2934
        %v3253 = vpop.permute.xlu0 %3252
        %3256 = vset.pattern.permute.xlu0 0
        %3257 = vperm.xlu0 %3256, %v2935
        %v3258 = vpop.permute.xlu0 %3257
        %3261 = vset.pattern.permute.xlu0 0
        %3262 = vperm.xlu0 %3261, %v2936
        %v3263 = vpop.permute.xlu0 %3262
        %3266 = vset.pattern.permute.xlu0 0
        %3267 = vperm.xlu0 %3266, %v2937
        %v3268 = vpop.permute.xlu0 %3267
        %3271 = vset.pattern.permute.xlu0 0
        %3272 = vperm.xlu0 %3271, %v2938
        %v3273 = vpop.permute.xlu0 %3272
        %3276 = vset.pattern.permute.xlu0 0
        %3277 = vperm.xlu0 %3276, %v2939
        %v3278 = vpop.permute.xlu0 %3277
        %3281 = vset.pattern.permute.xlu0 0
        %3282 = vperm.xlu0 %3281, %v2940
        %v3283 = vpop.permute.xlu0 %3282
        %3286 = vset.pattern.permute.xlu0 0
        %3287 = vperm.xlu0 %3286, %v2941
        %v3288 = vpop.permute.xlu0 %3287
        %3291 = vset.pattern.permute.xlu0 0
        %3292 = vperm.xlu0 %3291, %v2942
        %v3293 = vpop.permute.xlu0 %3292
        %3296 = vset.pattern.permute.xlu0 0
        %3297 = vperm.xlu0 %3296, %v2943
        %v3298 = vpop.permute.xlu0 %3297
        %3301 = vset.pattern.permute.xlu0 0
        %3302 = vperm.xlu0 %3301, %v2944
        %v3303 = vpop.permute.xlu0 %3302
        %3306 = vset.pattern.permute.xlu0 0
        %3307 = vperm.xlu0 %3306, %v2945
        %v3308 = vpop.permute.xlu0 %3307
        %3311 = vset.pattern.permute.xlu0 0
        %3312 = vperm.xlu0 %3311, %v2946
        %v3313 = vpop.permute.xlu0 %3312
        %3316 = vset.pattern.permute.xlu0 0
        %3317 = vperm.xlu0 %3316, %v2947
        %v3318 = vpop.permute.xlu0 %3317
        %3321 = vset.pattern.permute.xlu0 0
        %3322 = vperm.xlu0 %3321, %v2948
        %v3323 = vpop.permute.xlu0 %3322
        %3326 = vset.pattern.permute.xlu0 0
        %3327 = vperm.xlu0 %3326, %v2949
        %v3328 = vpop.permute.xlu0 %3327
        %3331 = vset.pattern.permute.xlu0 0
        %3332 = vperm.xlu0 %3331, %v2950
        %v3333 = vpop.permute.xlu0 %3332
        %3336 = vset.pattern.permute.xlu0 0
        %3337 = vperm.xlu0 %3336, %v2951
        %v3338 = vpop.permute.xlu0 %3337
        %3341 = vset.pattern.permute.xlu0 0
        %3342 = vperm.xlu0 %3341, %v2952
        %v3343 = vpop.permute.xlu0 %3342
        %3346 = vset.pattern.permute.xlu0 0
        %3347 = vperm.xlu0 %3346, %v2953
        %v3348 = vpop.permute.xlu0 %3347
        %3351 = vset.pattern.permute.xlu0 0
        %3352 = vperm.xlu0 %3351, %v2954
        %v3353 = vpop.permute.xlu0 %3352
        %3356 = vset.pattern.permute.xlu0 0
        %3357 = vperm.xlu0 %3356, %v2955
        %v3358 = vpop.permute.xlu0 %3357
        %3361 = vset.pattern.permute.xlu0 0
        %3362 = vperm.xlu0 %3361, %v2956
        %v3363 = vpop.permute.xlu0 %3362
        %3366 = vset.pattern.permute.xlu0 0
        %3367 = vperm.xlu0 %3366, %v2957
        %v3368 = vpop.permute.xlu0 %3367
        %3371 = vset.pattern.permute.xlu0 0
        %3372 = vperm.xlu0 %3371, %v2958
        %v3373 = vpop.permute.xlu0 %3372
        %3376 = vset.pattern.permute.xlu0 0
        %3377 = vperm.xlu0 %3376, %v2959
        %v3378 = vpop.permute.xlu0 %3377
        %3381 = vset.pattern.permute.xlu0 0
        %3382 = vperm.xlu0 %3381, %v2960
        %v3383 = vpop.permute.xlu0 %3382
        %3386 = vset.pattern.permute.xlu0 0
        %3387 = vperm.xlu0 %3386, %v2961
        %v3388 = vpop.permute.xlu0 %3387
        %3391 = vset.pattern.permute.xlu0 0
        %3392 = vperm.xlu0 %3391, %v2962
        %v3393 = vpop.permute.xlu0 %3392
        %3396 = vset.pattern.permute.xlu0 0
        %3397 = vperm.xlu0 %3396, %v2963
        %v3398 = vpop.permute.xlu0 %3397
        %3401 = vset.pattern.permute.xlu0 0
        %3402 = vperm.xlu0 %3401, %v2964
        %v3403 = vpop.permute.xlu0 %3402
        %3406 = vset.pattern.permute.xlu0 0
        %3407 = vperm.xlu0 %3406, %v2965
        %v3408 = vpop.permute.xlu0 %3407
        %3411 = vset.pattern.permute.xlu0 0
        %3412 = vperm.xlu0 %3411, %v2966
        %v3413 = vpop.permute.xlu0 %3412
        %3416 = vset.pattern.permute.xlu0 0
        %3417 = vperm.xlu0 %3416, %v2967
        %v3418 = vpop.permute.xlu0 %3417
        %3421 = vset.pattern.permute.xlu0 0
        %3422 = vperm.xlu0 %3421, %v2968
        %v3423 = vpop.permute.xlu0 %3422
        %3426 = vset.pattern.permute.xlu0 0
        %3427 = vperm.xlu0 %3426, %v2969
        %v3428 = vpop.permute.xlu0 %3427
        %3431 = vset.pattern.permute.xlu0 0
        %3432 = vperm.xlu0 %3431, %v2970
        %v3433 = vpop.permute.xlu0 %3432
        %3436 = vset.pattern.permute.xlu0 0
        %3437 = vperm.xlu0 %3436, %v2971
        %v3438 = vpop.permute.xlu0 %3437
        %3441 = vset.pattern.permute.xlu0 0
        %3442 = vperm.xlu0 %3441, %v2972
        %v3443 = vpop.permute.xlu0 %3442
        %3446 = vset.pattern.permute.xlu0 0
        %3447 = vperm.xlu0 %3446, %v2973
        %v3448 = vpop.permute.xlu0 %3447
        %3451 = vset.pattern.permute.xlu0 0
        %3452 = vperm.xlu0 %3451, %v2974
        %v3453 = vpop.permute.xlu0 %3452
        %3456 = vset.pattern.permute.xlu0 0
        %3457 = vperm.xlu0 %3456, %v2975
        %v3458 = vpop.permute.xlu0 %3457
        %3461 = vset.pattern.permute.xlu0 0
        %3462 = vperm.xlu0 %3461, %v2976
        %v3463 = vpop.permute.xlu0 %3462
        %3466 = vset.pattern.permute.xlu0 0
        %3467 = vperm.xlu0 %3466, %v2977
        %v3468 = vpop.permute.xlu0 %3467
        %3471 = vset.pattern.permute.xlu0 0
        %3472 = vperm.xlu0 %3471, %v2978
        %v3473 = vpop.permute.xlu0 %3472
        %3476 = vset.pattern.permute.xlu0 0
        %3477 = vperm.xlu0 %3476, %v2979
        %v3478 = vpop.permute.xlu0 %3477
        %3481 = vset.pattern.permute.xlu0 0
        %3482 = vperm.xlu0 %3481, %v2980
        %v3483 = vpop.permute.xlu0 %3482
        %3486 = vset.pattern.permute.xlu0 0
        %3487 = vperm.xlu0 %3486, %v2981
        %v3488 = vpop.permute.xlu0 %3487
        %3491 = vset.pattern.permute.xlu0 0
        %3492 = vperm.xlu0 %3491, %v2982
        %v3493 = vpop.permute.xlu0 %3492
        %3496 = vset.pattern.permute.xlu0 0
        %3497 = vperm.xlu0 %3496, %v2983
        %v3498 = vpop.permute.xlu0 %3497
        %3501 = vset.pattern.permute.xlu0 0
        %3502 = vperm.xlu0 %3501, %v2984
        %v3503 = vpop.permute.xlu0 %3502
        %3506 = vset.pattern.permute.xlu0 0
        %3507 = vperm.xlu0 %3506, %v2985
        %v3508 = vpop.permute.xlu0 %3507
        %3511 = vset.pattern.permute.xlu0 0
        %3512 = vperm.xlu0 %3511, %v2986
        %v3513 = vpop.permute.xlu0 %3512
        %3516 = vset.pattern.permute.xlu0 0
        %3517 = vperm.xlu0 %3516, %v2987
        %v3518 = vpop.permute.xlu0 %3517
        %3521 = vset.pattern.permute.xlu0 0
        %3522 = vperm.xlu0 %3521, %v2988
        %v3523 = vpop.permute.xlu0 %3522
        %3526 = vset.pattern.permute.xlu0 0
        %3527 = vperm.xlu0 %3526, %v2989
        %v3528 = vpop.permute.xlu0 %3527
        %3531 = vset.pattern.permute.xlu0 0
        %3532 = vperm.xlu0 %3531, %v2990
        %v3533 = vpop.permute.xlu0 %3532
        %3536 = vset.pattern.permute.xlu0 0
        %3537 = vperm.xlu0 %3536, %v2991
        %v3538 = vpop.permute.xlu0 %3537
        %3541 = vset.pattern.permute.xlu0 0
        %3542 = vperm.xlu0 %3541, %v2992
        %v3543 = vpop.permute.xlu0 %3542
        %3546 = vset.pattern.permute.xlu0 0
        %3547 = vperm.xlu0 %3546, %v2993
        %v3548 = vpop.permute.xlu0 %3547
        %3551 = vset.pattern.permute.xlu0 0
        %3552 = vperm.xlu0 %3551, %v2994
        %v3553 = vpop.permute.xlu0 %3552
        %3556 = vset.pattern.permute.xlu0 0
        %3557 = vperm.xlu0 %3556, %v2995
        %v3558 = vpop.permute.xlu0 %3557
        %3561 = vset.pattern.permute.xlu0 0
        %3562 = vperm.xlu0 %3561, %v2996
        %v3563 = vpop.permute.xlu0 %3562
        %3566 = vset.pattern.permute.xlu0 0
        %3567 = vperm.xlu0 %3566, %v2997
        %v3568 = vpop.permute.xlu0 %3567
        %3571 = vset.pattern.permute.xlu0 0
        %3572 = vperm.xlu0 %3571, %v2998
        %v3573 = vpop.permute.xlu0 %3572
        %3576 = vset.pattern.permute.xlu0 0
        %3577 = vperm.xlu0 %3576, %v2999
        %v3578 = vpop.permute.xlu0 %3577
        %3581 = vset.pattern.permute.xlu0 0
        %3582 = vperm.xlu0 %3581, %v3000
        %v3583 = vpop.permute.xlu0 %3582
        %3586 = vset.pattern.permute.xlu0 0
        %3587 = vperm.xlu0 %3586, %v3001
        %v3588 = vpop.permute.xlu0 %3587
        %3591 = vset.pattern.permute.xlu0 0
        %3592 = vperm.xlu0 %3591, %v3002
        %v3593 = vpop.permute.xlu0 %3592
        %3596 = vset.pattern.permute.xlu0 0
        %3597 = vperm.xlu0 %3596, %v3003
        %v3598 = vpop.permute.xlu0 %3597
        %3601 = vset.pattern.permute.xlu0 0
        %3602 = vperm.xlu0 %3601, %v3004
        %v3603 = vpop.permute.xlu0 %3602
        %3606 = vset.pattern.permute.xlu0 0
        %3607 = vperm.xlu0 %3606, %v3005
        %v3608 = vpop.permute.xlu0 %3607
        %3611 = vset.pattern.permute.xlu0 0
        %3612 = vperm.xlu0 %3611, %v3006
        %v3613 = vpop.permute.xlu0 %3612
        %3616 = vset.pattern.permute.xlu0 0
        %3617 = vperm.xlu0 %3616, %v3007
        %v3618 = vpop.permute.xlu0 %3617
        %3621 = vset.pattern.permute.xlu0 0
        %3622 = vperm.xlu0 %3621, %v3008
        %v3623 = vpop.permute.xlu0 %3622
        %3626 = vset.pattern.permute.xlu0 0
        %3627 = vperm.xlu0 %3626, %v3009
        %v3628 = vpop.permute.xlu0 %3627
        %3631 = vset.pattern.permute.xlu0 0
        %3632 = vperm.xlu0 %3631, %v3010
        %v3633 = vpop.permute.xlu0 %3632
        %3636 = vset.pattern.permute.xlu0 0
        %3637 = vperm.xlu0 %3636, %v3011
        %v3638 = vpop.permute.xlu0 %3637
        %3641 = vset.pattern.permute.xlu0 0
        %3642 = vperm.xlu0 %3641, %v3012
        %v3643 = vpop.permute.xlu0 %3642
        %3646 = vset.pattern.permute.xlu0 0
        %3647 = vperm.xlu0 %3646, %v3013
        %v3648 = vpop.permute.xlu0 %3647
        %3651 = vset.pattern.permute.xlu0 0
        %3652 = vperm.xlu0 %3651, %v3014
        %v3653 = vpop.permute.xlu0 %3652
        %v3655 = vadd.f32 %v2738, %v3018
        %v3656 = vadd.f32 %v2743, %v3023
        %v3657 = vadd.f32 %v2748, %v3028
        %v3658 = vadd.f32 %v2753, %v3033
        %v3659 = vadd.f32 %v2758, %v3038
        %v3660 = vadd.f32 %v2763, %v3043
        %v3661 = vadd.f32 %v2768, %v3048
        %v3662 = vadd.f32 %v2773, %v3053
        %v3663 = vadd.f32 %v2778, %v3058
        %v3664 = vadd.f32 %v2783, %v3063
        %v3665 = vadd.f32 %v2788, %v3068
        %v3666 = vadd.f32 %v2793, %v3073
        %v3667 = vadd.f32 %v2798, %v3078
        %v3668 = vadd.f32 %v2803, %v3083
        %v3669 = vadd.f32 %v2808, %v3088
        %v3670 = vadd.f32 %v2813, %v3093
        %v3671 = vadd.f32 %v2738, %v3098
        %v3672 = vadd.f32 %v2743, %v3103
        %v3673 = vadd.f32 %v2748, %v3108
        %v3674 = vadd.f32 %v2753, %v3113
        %v3675 = vadd.f32 %v2758, %v3118
        %v3676 = vadd.f32 %v2763, %v3123
        %v3677 = vadd.f32 %v2768, %v3128
        %v3678 = vadd.f32 %v2773, %v3133
        %v3679 = vadd.f32 %v2778, %v3138
        %v3680 = vadd.f32 %v2783, %v3143
        %v3681 = vadd.f32 %v2788, %v3148
        %v3682 = vadd.f32 %v2793, %v3153
        %v3683 = vadd.f32 %v2798, %v3158
        %v3684 = vadd.f32 %v2803, %v3163
        %v3685 = vadd.f32 %v2808, %v3168
        %v3686 = vadd.f32 %v2813, %v3173
        %v3687 = vadd.f32 %v2738, %v3178
        %v3688 = vadd.f32 %v2743, %v3183
        %v3689 = vadd.f32 %v2748, %v3188
        %v3690 = vadd.f32 %v2753, %v3193
        %v3691 = vadd.f32 %v2758, %v3198
        %v3692 = vadd.f32 %v2763, %v3203
        %v3693 = vadd.f32 %v2768, %v3208
        %v3694 = vadd.f32 %v2773, %v3213
        %v3695 = vadd.f32 %v2778, %v3218
        %v3696 = vadd.f32 %v2783, %v3223
        %v3697 = vadd.f32 %v2788, %v3228
        %v3698 = vadd.f32 %v2793, %v3233
        %v3699 = vadd.f32 %v2798, %v3238
        %v3700 = vadd.f32 %v2803, %v3243
        %v3701 = vadd.f32 %v2808, %v3248
        %v3702 = vadd.f32 %v2813, %v3253
        %v3703 = vadd.f32 %v2738, %v3258
        %v3704 = vadd.f32 %v2743, %v3263
        %v3705 = vadd.f32 %v2748, %v3268
        %v3706 = vadd.f32 %v2753, %v3273
        %v3707 = vadd.f32 %v2758, %v3278
        %v3708 = vadd.f32 %v2763, %v3283
        %v3709 = vadd.f32 %v2768, %v3288
        %v3710 = vadd.f32 %v2773, %v3293
        %v3711 = vadd.f32 %v2778, %v3298
        %v3712 = vadd.f32 %v2783, %v3303
        %v3713 = vadd.f32 %v2788, %v3308
        %v3714 = vadd.f32 %v2793, %v3313
        %v3715 = vadd.f32 %v2798, %v3318
        %v3716 = vadd.f32 %v2803, %v3323
        %v3717 = vadd.f32 %v2808, %v3328
        %v3718 = vadd.f32 %v2813, %v3333
        %v3719 = vadd.f32 %v2738, %v3338
        %v3720 = vadd.f32 %v2743, %v3343
        %v3721 = vadd.f32 %v2748, %v3348
        %v3722 = vadd.f32 %v2753, %v3353
        %v3723 = vadd.f32 %v2758, %v3358
        %v3724 = vadd.f32 %v2763, %v3363
        %v3725 = vadd.f32 %v2768, %v3368
        %v3726 = vadd.f32 %v2773, %v3373
        %v3727 = vadd.f32 %v2778, %v3378
        %v3728 = vadd.f32 %v2783, %v3383
        %v3729 = vadd.f32 %v2788, %v3388
        %v3730 = vadd.f32 %v2793, %v3393
        %v3731 = vadd.f32 %v2798, %v3398
        %v3732 = vadd.f32 %v2803, %v3403
        %v3733 = vadd.f32 %v2808, %v3408
        %v3734 = vadd.f32 %v2813, %v3413
        %v3735 = vadd.f32 %v2738, %v3418
        %v3736 = vadd.f32 %v2743, %v3423
        %v3737 = vadd.f32 %v2748, %v3428
        %v3738 = vadd.f32 %v2753, %v3433
        %v3739 = vadd.f32 %v2758, %v3438
        %v3740 = vadd.f32 %v2763, %v3443
        %v3741 = vadd.f32 %v2768, %v3448
        %v3742 = vadd.f32 %v2773, %v3453
        %v3743 = vadd.f32 %v2778, %v3458
        %v3744 = vadd.f32 %v2783, %v3463
        %v3745 = vadd.f32 %v2788, %v3468
        %v3746 = vadd.f32 %v2793, %v3473
        %v3747 = vadd.f32 %v2798, %v3478
        %v3748 = vadd.f32 %v2803, %v3483
        %v3749 = vadd.f32 %v2808, %v3488
        %v3750 = vadd.f32 %v2813, %v3493
        %v3751 = vadd.f32 %v2738, %v3498
        %v3752 = vadd.f32 %v2743, %v3503
        %v3753 = vadd.f32 %v2748, %v3508
        %v3754 = vadd.f32 %v2753, %v3513
        %v3755 = vadd.f32 %v2758, %v3518
        %v3756 = vadd.f32 %v2763, %v3523
        %v3757 = vadd.f32 %v2768, %v3528
        %v3758 = vadd.f32 %v2773, %v3533
        %v3759 = vadd.f32 %v2778, %v3538
        %v3760 = vadd.f32 %v2783, %v3543
        %v3761 = vadd.f32 %v2788, %v3548
        %v3762 = vadd.f32 %v2793, %v3553
        %v3763 = vadd.f32 %v2798, %v3558
        %v3764 = vadd.f32 %v2803, %v3563
        %v3765 = vadd.f32 %v2808, %v3568
        %v3766 = vadd.f32 %v2813, %v3573
        %v3767 = vadd.f32 %v2738, %v3578
        %v3768 = vadd.f32 %v2743, %v3583
        %v3769 = vadd.f32 %v2748, %v3588
        %v3770 = vadd.f32 %v2753, %v3593
        %v3771 = vadd.f32 %v2758, %v3598
        %v3772 = vadd.f32 %v2763, %v3603
        %v3773 = vadd.f32 %v2768, %v3608
        %v3774 = vadd.f32 %v2773, %v3613
        %v3775 = vadd.f32 %v2778, %v3618
        %v3776 = vadd.f32 %v2783, %v3623
        %v3777 = vadd.f32 %v2788, %v3628
        %v3778 = vadd.f32 %v2793, %v3633
        %v3779 = vadd.f32 %v2798, %v3638
        %v3780 = vadd.f32 %v2803, %v3643
        %v3781 = vadd.f32 %v2808, %v3648
        %v3782 = vadd.f32 %v2813, %v3653
        %v3783 = vsel %vm1782, %v3655, -inf
        %v3784 = vsel %vm1782, %v3656, -inf
        %v3785 = vmax.f32 %v3783, %v3784
        %v3786 = vsel %vm1782, %v3657, -inf
        %v3787 = vmax.f32 %v3785, %v3786
        %v3788 = vsel %vm1782, %v3658, -inf
        %v3789 = vmax.f32 %v3787, %v3788
        %v3790 = vsel %vm1782, %v3659, -inf
        %v3791 = vmax.f32 %v3789, %v3790
        %v3792 = vsel %vm1782, %v3660, -inf
        %v3793 = vmax.f32 %v3791, %v3792
        %v3794 = vsel %vm1782, %v3661, -inf
        %v3795 = vmax.f32 %v3793, %v3794
        %v3796 = vsel %vm1782, %v3662, -inf
        %v3797 = vmax.f32 %v3795, %v3796
        %v3798 = vsel %vm1782, %v3663, -inf
        %v3799 = vmax.f32 %v3797, %v3798
        %v3800 = vsel %vm1782, %v3664, -inf
        %v3801 = vmax.f32 %v3799, %v3800
        %v3802 = vsel %vm1782, %v3665, -inf
        %v3803 = vmax.f32 %v3801, %v3802
        %v3804 = vsel %vm1782, %v3666, -inf
        %v3805 = vmax.f32 %v3803, %v3804
        %v3806 = vsel %vm1782, %v3667, -inf
        %v3807 = vmax.f32 %v3805, %v3806
        %v3808 = vsel %vm1782, %v3668, -inf
        %v3809 = vmax.f32 %v3807, %v3808
        %v3810 = vsel %vm1782, %v3669, -inf
        %v3811 = vmax.f32 %v3809, %v3810
        %v3812 = vsel %vm1782, %v3670, -inf
        %v3813 = vmax.f32 %v3811, %v3812
        %v3814 = vrot.slane %v3813, 4
        %v3815 = vmax.f32 %v3813, %v3814
        %v3816 = vrot.slane %v3815, 2
        %v3817 = vmax.f32 %v3815, %v3816
        %v3818 = vrot.slane %v3817, 1
        %v3819 = vmax.f32 %v3817, %v3818
        %v3820 = vsel %vm1782, %v3671, -inf
        %v3821 = vsel %vm1782, %v3672, -inf
        %v3822 = vmax.f32 %v3820, %v3821
        %v3823 = vsel %vm1782, %v3673, -inf
        %v3824 = vmax.f32 %v3822, %v3823
        %v3825 = vsel %vm1782, %v3674, -inf
        %v3826 = vmax.f32 %v3824, %v3825
        %v3827 = vsel %vm1782, %v3675, -inf
        %v3828 = vmax.f32 %v3826, %v3827
        %v3829 = vsel %vm1782, %v3676, -inf
        %v3830 = vmax.f32 %v3828, %v3829
        %v3831 = vsel %vm1782, %v3677, -inf
        %v3832 = vmax.f32 %v3830, %v3831
        %v3833 = vsel %vm1782, %v3678, -inf
        %v3834 = vmax.f32 %v3832, %v3833
        %v3835 = vsel %vm1782, %v3679, -inf
        %v3836 = vmax.f32 %v3834, %v3835
        %v3837 = vsel %vm1782, %v3680, -inf
        %v3838 = vmax.f32 %v3836, %v3837
        %v3839 = vsel %vm1782, %v3681, -inf
        %v3840 = vmax.f32 %v3838, %v3839
        %v3841 = vsel %vm1782, %v3682, -inf
        %v3842 = vmax.f32 %v3840, %v3841
        %v3843 = vsel %vm1782, %v3683, -inf
        %v3844 = vmax.f32 %v3842, %v3843
        %v3845 = vsel %vm1782, %v3684, -inf
        %v3846 = vmax.f32 %v3844, %v3845
        %v3847 = vsel %vm1782, %v3685, -inf
        %v3848 = vmax.f32 %v3846, %v3847
        %v3849 = vsel %vm1782, %v3686, -inf
        %v3850 = vmax.f32 %v3848, %v3849
        %v3851 = vrot.slane %v3850, 4
        %v3852 = vmax.f32 %v3850, %v3851
        %v3853 = vrot.slane %v3852, 2
        %v3854 = vmax.f32 %v3852, %v3853
        %v3855 = vrot.slane %v3854, 1
        %v3856 = vmax.f32 %v3854, %v3855
        %v3857 = vsel %vm1782, %v3687, -inf
        %v3858 = vsel %vm1782, %v3688, -inf
        %v3859 = vmax.f32 %v3857, %v3858
        %v3860 = vsel %vm1782, %v3689, -inf
        %v3861 = vmax.f32 %v3859, %v3860
        %v3862 = vsel %vm1782, %v3690, -inf
        %v3863 = vmax.f32 %v3861, %v3862
        %v3864 = vsel %vm1782, %v3691, -inf
        %v3865 = vmax.f32 %v3863, %v3864
        %v3866 = vsel %vm1782, %v3692, -inf
        %v3867 = vmax.f32 %v3865, %v3866
        %v3868 = vsel %vm1782, %v3693, -inf
        %v3869 = vmax.f32 %v3867, %v3868
        %v3870 = vsel %vm1782, %v3694, -inf
        %v3871 = vmax.f32 %v3869, %v3870
        %v3872 = vsel %vm1782, %v3695, -inf
        %v3873 = vmax.f32 %v3871, %v3872
        %v3874 = vsel %vm1782, %v3696, -inf
        %v3875 = vmax.f32 %v3873, %v3874
        %v3876 = vsel %vm1782, %v3697, -inf
        %v3877 = vmax.f32 %v3875, %v3876
        %v3878 = vsel %vm1782, %v3698, -inf
        %v3879 = vmax.f32 %v3877, %v3878
        %v3880 = vsel %vm1782, %v3699, -inf
        %v3881 = vmax.f32 %v3879, %v3880
        %v3882 = vsel %vm1782, %v3700, -inf
        %v3883 = vmax.f32 %v3881, %v3882
        %v3884 = vsel %vm1782, %v3701, -inf
        %v3885 = vmax.f32 %v3883, %v3884
        %v3886 = vsel %vm1782, %v3702, -inf
        %v3887 = vmax.f32 %v3885, %v3886
        %v3888 = vrot.slane %v3887, 4
        %v3889 = vmax.f32 %v3887, %v3888
        %v3890 = vrot.slane %v3889, 2
        %v3891 = vmax.f32 %v3889, %v3890
        %v3892 = vrot.slane %v3891, 1
        %v3893 = vmax.f32 %v3891, %v3892
        %v3894 = vsel %vm1782, %v3703, -inf
        %v3895 = vsel %vm1782, %v3704, -inf
        %v3896 = vmax.f32 %v3894, %v3895
        %v3897 = vsel %vm1782, %v3705, -inf
        %v3898 = vmax.f32 %v3896, %v3897
        %v3899 = vsel %vm1782, %v3706, -inf
        %v3900 = vmax.f32 %v3898, %v3899
        %v3901 = vsel %vm1782, %v3707, -inf
        %v3902 = vmax.f32 %v3900, %v3901
        %v3903 = vsel %vm1782, %v3708, -inf
        %v3904 = vmax.f32 %v3902, %v3903
        %v3905 = vsel %vm1782, %v3709, -inf
        %v3906 = vmax.f32 %v3904, %v3905
        %v3907 = vsel %vm1782, %v3710, -inf
        %v3908 = vmax.f32 %v3906, %v3907
        %v3909 = vsel %vm1782, %v3711, -inf
        %v3910 = vmax.f32 %v3908, %v3909
        %v3911 = vsel %vm1782, %v3712, -inf
        %v3912 = vmax.f32 %v3910, %v3911
        %v3913 = vsel %vm1782, %v3713, -inf
        %v3914 = vmax.f32 %v3912, %v3913
        %v3915 = vsel %vm1782, %v3714, -inf
        %v3916 = vmax.f32 %v3914, %v3915
        %v3917 = vsel %vm1782, %v3715, -inf
        %v3918 = vmax.f32 %v3916, %v3917
        %v3919 = vsel %vm1782, %v3716, -inf
        %v3920 = vmax.f32 %v3918, %v3919
        %v3921 = vsel %vm1782, %v3717, -inf
        %v3922 = vmax.f32 %v3920, %v3921
        %v3923 = vsel %vm1782, %v3718, -inf
        %v3924 = vmax.f32 %v3922, %v3923
        %v3925 = vrot.slane %v3924, 4
        %v3926 = vmax.f32 %v3924, %v3925
        %v3927 = vrot.slane %v3926, 2
        %v3928 = vmax.f32 %v3926, %v3927
        %v3929 = vrot.slane %v3928, 1
        %v3930 = vmax.f32 %v3928, %v3929
        %v3931 = vsel %vm1782, %v3719, -inf
        %v3932 = vsel %vm1782, %v3720, -inf
        %v3933 = vmax.f32 %v3931, %v3932
        %v3934 = vsel %vm1782, %v3721, -inf
        %v3935 = vmax.f32 %v3933, %v3934
        %v3936 = vsel %vm1782, %v3722, -inf
        %v3937 = vmax.f32 %v3935, %v3936
        %v3938 = vsel %vm1782, %v3723, -inf
        %v3939 = vmax.f32 %v3937, %v3938
        %v3940 = vsel %vm1782, %v3724, -inf
        %v3941 = vmax.f32 %v3939, %v3940
        %v3942 = vsel %vm1782, %v3725, -inf
        %v3943 = vmax.f32 %v3941, %v3942
        %v3944 = vsel %vm1782, %v3726, -inf
        %v3945 = vmax.f32 %v3943, %v3944
        %v3946 = vsel %vm1782, %v3727, -inf
        %v3947 = vmax.f32 %v3945, %v3946
        %v3948 = vsel %vm1782, %v3728, -inf
        %v3949 = vmax.f32 %v3947, %v3948
        %v3950 = vsel %vm1782, %v3729, -inf
        %v3951 = vmax.f32 %v3949, %v3950
        %v3952 = vsel %vm1782, %v3730, -inf
        %v3953 = vmax.f32 %v3951, %v3952
        %v3954 = vsel %vm1782, %v3731, -inf
        %v3955 = vmax.f32 %v3953, %v3954
        %v3956 = vsel %vm1782, %v3732, -inf
        %v3957 = vmax.f32 %v3955, %v3956
        %v3958 = vsel %vm1782, %v3733, -inf
        %v3959 = vmax.f32 %v3957, %v3958
        %v3960 = vsel %vm1782, %v3734, -inf
        %v3961 = vmax.f32 %v3959, %v3960
        %v3962 = vrot.slane %v3961, 4
        %v3963 = vmax.f32 %v3961, %v3962
        %v3964 = vrot.slane %v3963, 2
        %v3965 = vmax.f32 %v3963, %v3964
        %v3966 = vrot.slane %v3965, 1
        %v3967 = vmax.f32 %v3965, %v3966
        %v3968 = vsel %vm1782, %v3735, -inf
        %v3969 = vsel %vm1782, %v3736, -inf
        %v3970 = vmax.f32 %v3968, %v3969
        %v3971 = vsel %vm1782, %v3737, -inf
        %v3972 = vmax.f32 %v3970, %v3971
        %v3973 = vsel %vm1782, %v3738, -inf
        %v3974 = vmax.f32 %v3972, %v3973
        %v3975 = vsel %vm1782, %v3739, -inf
        %v3976 = vmax.f32 %v3974, %v3975
        %v3977 = vsel %vm1782, %v3740, -inf
        %v3978 = vmax.f32 %v3976, %v3977
        %v3979 = vsel %vm1782, %v3741, -inf
        %v3980 = vmax.f32 %v3978, %v3979
        %v3981 = vsel %vm1782, %v3742, -inf
        %v3982 = vmax.f32 %v3980, %v3981
        %v3983 = vsel %vm1782, %v3743, -inf
        %v3984 = vmax.f32 %v3982, %v3983
        %v3985 = vsel %vm1782, %v3744, -inf
        %v3986 = vmax.f32 %v3984, %v3985
        %v3987 = vsel %vm1782, %v3745, -inf
        %v3988 = vmax.f32 %v3986, %v3987
        %v3989 = vsel %vm1782, %v3746, -inf
        %v3990 = vmax.f32 %v3988, %v3989
        %v3991 = vsel %vm1782, %v3747, -inf
        %v3992 = vmax.f32 %v3990, %v3991
        %v3993 = vsel %vm1782, %v3748, -inf
        %v3994 = vmax.f32 %v3992, %v3993
        %v3995 = vsel %vm1782, %v3749, -inf
        %v3996 = vmax.f32 %v3994, %v3995
        %v3997 = vsel %vm1782, %v3750, -inf
        %v3998 = vmax.f32 %v3996, %v3997
        %v3999 = vrot.slane %v3998, 4
        %v4000 = vmax.f32 %v3998, %v3999
        %v4001 = vrot.slane %v4000, 2
        %v4002 = vmax.f32 %v4000, %v4001
        %v4003 = vrot.slane %v4002, 1
        %v4004 = vmax.f32 %v4002, %v4003
        %v4005 = vsel %vm1782, %v3751, -inf
        %v4006 = vsel %vm1782, %v3752, -inf
        %v4007 = vmax.f32 %v4005, %v4006
        %v4008 = vsel %vm1782, %v3753, -inf
        %v4009 = vmax.f32 %v4007, %v4008
        %v4010 = vsel %vm1782, %v3754, -inf
        %v4011 = vmax.f32 %v4009, %v4010
        %v4012 = vsel %vm1782, %v3755, -inf
        %v4013 = vmax.f32 %v4011, %v4012
        %v4014 = vsel %vm1782, %v3756, -inf
        %v4015 = vmax.f32 %v4013, %v4014
        %v4016 = vsel %vm1782, %v3757, -inf
        %v4017 = vmax.f32 %v4015, %v4016
        %v4018 = vsel %vm1782, %v3758, -inf
        %v4019 = vmax.f32 %v4017, %v4018
        %v4020 = vsel %vm1782, %v3759, -inf
        %v4021 = vmax.f32 %v4019, %v4020
        %v4022 = vsel %vm1782, %v3760, -inf
        %v4023 = vmax.f32 %v4021, %v4022
        %v4024 = vsel %vm1782, %v3761, -inf
        %v4025 = vmax.f32 %v4023, %v4024
        %v4026 = vsel %vm1782, %v3762, -inf
        %v4027 = vmax.f32 %v4025, %v4026
        %v4028 = vsel %vm1782, %v3763, -inf
        %v4029 = vmax.f32 %v4027, %v4028
        %v4030 = vsel %vm1782, %v3764, -inf
        %v4031 = vmax.f32 %v4029, %v4030
        %v4032 = vsel %vm1782, %v3765, -inf
        %v4033 = vmax.f32 %v4031, %v4032
        %v4034 = vsel %vm1782, %v3766, -inf
        %v4035 = vmax.f32 %v4033, %v4034
        %v4036 = vrot.slane %v4035, 4
        %v4037 = vmax.f32 %v4035, %v4036
        %v4038 = vrot.slane %v4037, 2
        %v4039 = vmax.f32 %v4037, %v4038
        %v4040 = vrot.slane %v4039, 1
        %v4041 = vmax.f32 %v4039, %v4040
        %v4042 = vsel %vm1782, %v3767, -inf
        %v4043 = vsel %vm1782, %v3768, -inf
        %v4044 = vmax.f32 %v4042, %v4043
        %v4045 = vsel %vm1782, %v3769, -inf
        %v4046 = vmax.f32 %v4044, %v4045
        %v4047 = vsel %vm1782, %v3770, -inf
        %v4048 = vmax.f32 %v4046, %v4047
        %v4049 = vsel %vm1782, %v3771, -inf
        %v4050 = vmax.f32 %v4048, %v4049
        %v4051 = vsel %vm1782, %v3772, -inf
        %v4052 = vmax.f32 %v4050, %v4051
        %v4053 = vsel %vm1782, %v3773, -inf
        %v4054 = vmax.f32 %v4052, %v4053
        %v4055 = vsel %vm1782, %v3774, -inf
        %v4056 = vmax.f32 %v4054, %v4055
        %v4057 = vsel %vm1782, %v3775, -inf
        %v4058 = vmax.f32 %v4056, %v4057
        %v4059 = vsel %vm1782, %v3776, -inf
        %v4060 = vmax.f32 %v4058, %v4059
        %v4061 = vsel %vm1782, %v3777, -inf
        %v4062 = vmax.f32 %v4060, %v4061
        %v4063 = vsel %vm1782, %v3778, -inf
        %v4064 = vmax.f32 %v4062, %v4063
        %v4065 = vsel %vm1782, %v3779, -inf
        %v4066 = vmax.f32 %v4064, %v4065
        %v4067 = vsel %vm1782, %v3780, -inf
        %v4068 = vmax.f32 %v4066, %v4067
        %v4069 = vsel %vm1782, %v3781, -inf
        %v4070 = vmax.f32 %v4068, %v4069
        %v4071 = vsel %vm1782, %v3782, -inf
        %v4072 = vmax.f32 %v4070, %v4071
        %v4073 = vrot.slane %v4072, 4
        %v4074 = vmax.f32 %v4072, %v4073
        %v4075 = vrot.slane %v4074, 2
        %v4076 = vmax.f32 %v4074, %v4075
        %v4077 = vrot.slane %v4076, 1
        %v4078 = vmax.f32 %v4076, %v4077
        %v4079 = vtanh.pop %v2884
        %v4080 = vld [vmem:[%s12] sm:$0xff]
        %v4081 = vld [vmem:[%s12 + $0x8] sm:$0xff]
        %v4082 = vld [vmem:[%s12 + $0x10] sm:$0xff]
        %v4083 = vld [vmem:[%s12 + $0x18] sm:$0xff]
        %v4084 = vld [vmem:[%s12 + $0x20] sm:$0xff]
        %v4085 = vld [vmem:[%s12 + $0x28] sm:$0xff]
        %v4086 = vld [vmem:[%s12 + $0x30] sm:$0xff]
        %v4087 = vld [vmem:[%s12 + $0x38] sm:$0xff]
        %v4088 = vtanh.pop %v3819
        %v4089 = vtanh.pop %v3856
        %v4090 = vtanh.pop %v3893
        %v4091 = vtanh.pop %v3930
        %v4092 = vtanh.pop %v3967
        %v4093 = vtanh.pop %v4004
        %v4094 = vtanh.pop %v4041
        %v4095 = vtanh.pop %v4078
        %v4096 = vld [vmem:[%s13] sm:$0xff]
        %v4097 = vld [vmem:[%s13 + $0x8] sm:$0xff]
        %v4098 = vld [vmem:[%s13 + $0x10] sm:$0xff]
        %v4099 = vld [vmem:[%s13 + $0x18] sm:$0xff]
        %v4100 = vld [vmem:[%s13 + $0x20] sm:$0xff]
        %v4101 = vld [vmem:[%s13 + $0x28] sm:$0xff]
        %v4102 = vld [vmem:[%s13 + $0x30] sm:$0xff]
        %v4103 = vld [vmem:[%s13 + $0x38] sm:$0xff]
        %vm4112 = vcmask 1041409
        %v4113 = vsel %vm4112, %v4089, %v4088
        %vm4114 = vcmask 1042434
        %v4115 = vsel %vm4114, %v4090, %v4113
        %vm4116 = vcmask 1043459
        %v4117 = vsel %vm4116, %v4091, %v4115
        %vm4118 = vcmask 1044484
        %v4119 = vsel %vm4118, %v4092, %v4117
        %vm4120 = vcmask 1045509
        %v4121 = vsel %vm4120, %v4093, %v4119
        %vm4122 = vcmask 1046534
        %v4123 = vsel %vm4122, %v4094, %v4121
        %vm4124 = vcmask 1047559
        %v4125 = vsel %vm4124, %v4095, %v4123
        %v4126 = vsel %vm1782, %v4125, 0
        %4128 = vmatprep.subr.mxu0 0.0
        %4129 = vmatpush1.msra.mxu0 0.0
        %4130 = vmatprep.subr.mxu0 0.0
        %4131 = vmatpush1.msra.mxu0 0.0
        %4132 = vmatprep.subr.mxu0 0.0
        %4133 = vmatpush1.msra.mxu0 0.0
        %4134 = vmatprep.subr.mxu0 0.0
        %4135 = vmatpush1.msra.mxu0 0.0
        %4136 = vmatprep.subr.mxu0 0.0
        %4137 = vmatpush1.msra.mxu0 0.0
        %4138 = vmatprep.subr.mxu0 0.0
        %4139 = vmatpush1.msra.mxu0 0.0
        %4140 = vmatprep.subr.mxu0 0.0
        %4141 = vmatpush1.msra.mxu0 0.0
        %4142 = vmatprep.subr.mxu0 0.0
        %4143 = vmatpush1.msra.mxu0 0.0
        %4144 = vmatprep.subr.mxu0 0.0
        %4145 = vmatpush1.msra.mxu0 %v4103
        %4146 = vmatprep.subr.mxu0 0.0
        %4147 = vmatpush1.msra.mxu0 %v4102
        %4148 = vmatprep.subr.mxu0 0.0
        %4149 = vmatpush1.msra.mxu0 %v4101
        %4150 = vmatprep.subr.mxu0 0.0
        %4151 = vmatpush1.msra.mxu0 %v4100
        %4152 = vmatprep.subr.mxu0 0.0
        %4153 = vmatpush1.msra.mxu0 %v4099
        %4154 = vmatprep.subr.mxu0 0.0
        %4155 = vmatpush1.msra.mxu0 %v4098
        %4156 = vmatprep.subr.mxu0 0.0
        %4157 = vmatpush1.msra.mxu0 %v4097
        %4158 = vmatprep.subr.mxu0 0.0
        %4159 = vmatpush1.msra.mxu0 %v4096
        %4160 = vmatprep.subr.mxu0 0.0
        %4161 = vmatpush2.msra.mxu0 0.0
        %4162 = vmatprep.subr.mxu0 0.0
        %4163 = vmatpush2.msra.mxu0 0.0
        %4164 = vmatprep.subr.mxu0 0.0
        %4165 = vmatpush2.msra.mxu0 0.0
        %4166 = vmatprep.subr.mxu0 0.0
        %4167 = vmatpush2.msra.mxu0 0.0
        %4168 = vmatprep.subr.mxu0 0.0
        %4169 = vmatpush2.msra.mxu0 0.0
        %4170 = vmatprep.subr.mxu0 0.0
        %4171 = vmatpush2.msra.mxu0 0.0
        %4172 = vmatprep.subr.mxu0 0.0
        %4173 = vmatpush2.msra.mxu0 0.0
        %4174 = vmatprep.subr.mxu0 0.0
        %4175 = vmatpush2.msra.mxu0 0.0
        %4176 = vmatprep.subr.mxu0 0.0
        %4177 = vmatpush2.msra.mxu0 0.0
        %4178 = vmatprep.subr.mxu0 0.0
        %4179 = vmatpush2.msra.mxu0 0.0
        %4180 = vmatprep.subr.mxu0 0.0
        %4181 = vmatpush2.msra.mxu0 0.0
        %4182 = vmatprep.subr.mxu0 0.0
        %4183 = vmatpush2.msra.mxu0 0.0
        %4184 = vmatprep.subr.mxu0 0.0
        %4185 = vmatpush2.msra.mxu0 0.0
        %4186 = vmatprep.subr.mxu0 0.0
        %4187 = vmatpush2.msra.mxu0 0.0
        %4188 = vmatprep.subr.mxu0 0.0
        %4189 = vmatpush2.msra.mxu0 0.0
        %4190 = vmatprep.subr.mxu0 0.0
        %4191 = vmatpush2.msra.mxu0 0.0
        %4192 = vmatprep.mubr.f32.mxu0 0.0
        %4193 = vmatmul.mubr.f32.gmra.mxu0 %v4126
        %v4194 = vpop.f32.mrf.mxu0
        %v4195 = vadd.f32 0.0, %v4194
        %v4196 = vpop.f32.mrf.mxu0
        %4197 = vdwg.mxu0
        %v4199 = vsel %vm1782, %v4079, 0
        %4201 = vmatprep.subr.mxu0 0.0
        %4202 = vmatpush1.msra.mxu0 0.0
        %4203 = vmatprep.subr.mxu0 0.0
        %4204 = vmatpush1.msra.mxu0 0.0
        %4205 = vmatprep.subr.mxu0 0.0
        %4206 = vmatpush1.msra.mxu0 0.0
        %4207 = vmatprep.subr.mxu0 0.0
        %4208 = vmatpush1.msra.mxu0 0.0
        %4209 = vmatprep.subr.mxu0 0.0
        %4210 = vmatpush1.msra.mxu0 0.0
        %4211 = vmatprep.subr.mxu0 0.0
        %4212 = vmatpush1.msra.mxu0 0.0
        %4213 = vmatprep.subr.mxu0 0.0
        %4214 = vmatpush1.msra.mxu0 0.0
        %4215 = vmatprep.subr.mxu0 0.0
        %4216 = vmatpush1.msra.mxu0 0.0
        %4217 = vmatprep.subr.mxu0 0.0
        %4218 = vmatpush1.msra.mxu0 %v4087
        %4219 = vmatprep.subr.mxu0 0.0
        %4220 = vmatpush1.msra.mxu0 %v4086
        %4221 = vmatprep.subr.mxu0 0.0
        %4222 = vmatpush1.msra.mxu0 %v4085
        %4223 = vmatprep.subr.mxu0 0.0
        %4224 = vmatpush1.msra.mxu0 %v4084
        %4225 = vmatprep.subr.mxu0 0.0
        %4226 = vmatpush1.msra.mxu0 %v4083
        %4227 = vmatprep.subr.mxu0 0.0
        %4228 = vmatpush1.msra.mxu0 %v4082
        %4229 = vmatprep.subr.mxu0 0.0
        %4230 = vmatpush1.msra.mxu0 %v4081
        %4231 = vmatprep.subr.mxu0 0.0
        %4232 = vmatpush1.msra.mxu0 %v4080
        %4233 = vmatprep.subr.mxu0 0.0
        %4234 = vmatpush2.msra.mxu0 0.0
        %4235 = vmatprep.subr.mxu0 0.0
        %4236 = vmatpush2.msra.mxu0 0.0
        %4237 = vmatprep.subr.mxu0 0.0
        %4238 = vmatpush2.msra.mxu0 0.0
        %4239 = vmatprep.subr.mxu0 0.0
        %4240 = vmatpush2.msra.mxu0 0.0
        %4241 = vmatprep.subr.mxu0 0.0
        %4242 = vmatpush2.msra.mxu0 0.0
        %4243 = vmatprep.subr.mxu0 0.0
        %4244 = vmatpush2.msra.mxu0 0.0
        %4245 = vmatprep.subr.mxu0 0.0
        %4246 = vmatpush2.msra.mxu0 0.0
        %4247 = vmatprep.subr.mxu0 0.0
        %4248 = vmatpush2.msra.mxu0 0.0
        %4249 = vmatprep.subr.mxu0 0.0
        %4250 = vmatpush2.msra.mxu0 0.0
        %4251 = vmatprep.subr.mxu0 0.0
        %4252 = vmatpush2.msra.mxu0 0.0
        %4253 = vmatprep.subr.mxu0 0.0
        %4254 = vmatpush2.msra.mxu0 0.0
        %4255 = vmatprep.subr.mxu0 0.0
        %4256 = vmatpush2.msra.mxu0 0.0
        %4257 = vmatprep.subr.mxu0 0.0
        %4258 = vmatpush2.msra.mxu0 0.0
        %4259 = vmatprep.subr.mxu0 0.0
        %4260 = vmatpush2.msra.mxu0 0.0
        %4261 = vmatprep.subr.mxu0 0.0
        %4262 = vmatpush2.msra.mxu0 0.0
        %4263 = vmatprep.subr.mxu0 0.0
        %4264 = vmatpush2.msra.mxu0 0.0
        %4265 = vmatprep.mubr.f32.mxu0 0.0
        %4266 = vmatmul.mubr.f32.gmra.mxu0 %v4199
        %v4267 = vpop.f32.mrf.mxu0
        %v4268 = vadd.f32 %v4195, %v4267
        %v4269 = vpop.f32.mrf.mxu0
        %4270 = vdwg.mxu0
        %v4271 = vld [vmem:[%s14] sm:$0x1]
        %v4273 = vlaneseq
        %v4274 = vshrl.u32 %v4273, 7
        %v4275 = vsub.s32 0, %v4274
        %v4276 = vrot.slane %v4271, %v4275
        %v4278 = vadd.f32 %v4268, %v4276
        %4279 = vst [vmem:[%s1250] sm:$0xff] %v4278
        %s4280 = sand.u32 %s393, 1
        %s4281 = scalar_lea.sflag [#allocation5], %s4280
        %s4282 = sand.u32 %s393, 1
        %s4283 = smul.addr %s4282, 8
        %s4284 = scalar_lea.vmem [#allocation4], %s4283
        // Predicated region
        $region157: #{tpu_custom_call.1} parent=147 // pred_check
          %p4285 = pneg %p403
        $region158: #{tpu_custom_call.1} parent=147 // pred_check_branch
          %4287 = sbr.rel (%p4285) target = $region160
        $region159: #{tpu_custom_call.1} parent=147 // pred_region
          %s4289 = ssub.s32 128, 128
          %4290 = vsyncadd %s4281, %s4289
          %s4291 = smul.addr %s29, 128
          %s4292 = scalar_lea.hbm %s15, %s4291
          %s4294 = sshll.u32 %s4284, 4
          %s4295 = int_to_ptr.vmem [resolvable:$true] %s4294
          %4297 = dma.vmem_to_hbm [thread:$0]  %s4295, 128, %s4292, %s4281
        $region160: #{tpu_custom_call.1} parent=147 // pred_fallthru
          _
      $region148: #{tpu_custom_call.1} parent=5 // pred_fallthru
        _
      %p4298 = scmp.le.s32.totalorder 2, %s24
      // Predicated region
      $region161: #{tpu_custom_call.1} parent=5 // pred_check
        %p4299 = pneg %p4298
      $region162: #{tpu_custom_call.1} parent=5 // pred_check_branch
        %4301 = sbr.rel (%p4299) target = $region164
      $region163: #{tpu_custom_call.1} parent=5 // pred_region
        %s4302 = ssub.s32 %s24, 2
        // Predicated region
        $region165: #{tpu_custom_call.1} parent=163 // pred_check
          %p4303 = pneg %p409
        $region166: #{tpu_custom_call.1} parent=163 // pred_check_branch
          %4305 = sbr.rel (%p4303) target = $region168
        $region167: #{tpu_custom_call.1} parent=163 // pred_region
          %s4306 = sand.u32 %s394, 1
          %s4307 = scalar_lea.sflag [#allocation5], %s4306
          %s4308 = sand.u32 %s394, 1
          %s4309 = smul.addr %s4308, 8
          %s4310 = scalar_lea.vmem [#allocation4], %s4309
          %4311 = dma.done %s4307, 128
        $region168: #{tpu_custom_call.1} parent=163 // pred_fallthru
          _
      $region164: #{tpu_custom_call.1} parent=5 // pred_fallthru
        _
    $region6: #{tpu_custom_call.1} parent=1 // loop_footer
      %s28 = sadd.s32 1, %s24
    $region7: #{tpu_custom_call.1} parent=1 // loop_footer_branch
      %23 = sbr.rel target = $region3
    $region8: #{tpu_custom_call.1} parent=1 // loop_exit
      _
    %4312 = vsyncpa [#allocation5], 1
    %s4313 = scalar_lea.sflag [#allocation5], 1
    %4314 = vsyncpa %s4313, 1

</llo_original>
